<compile_context>
chip_gen: v5e
topology: v5e:2x2
jax: 0.10.0
libtpu: 0.0.40
codegen_flags: <defaults>
</compile_context>

<pallas_src>
import math
import functools

import jax
import jax.numpy as jnp
from jax.experimental import pallas as pl
from jax.experimental.pallas import tpu as pltpu


def _up_conv_phase_kernel(xp_ref, wp_ref, b_ref, out_ref, *, H, W):
    # xp_ref:  (H+2, W+2, Cin)  zero-padded channels-last input, one batch element.
    # wp_ref:  (16, Cin, Cout)  folded phase/tap weights, flat index = s*8+t*4+k*2+l.
    # b_ref:   (1, Cout)        bias (f32).
    # out_ref: (4, H*W, Cout)   per-phase output tokens, phase index = s*2+t.
    cin = xp_ref.shape[-1]
    cout = out_ref.shape[-1]
    bias = b_ref[...].astype(jnp.float32)            # (1, Cout), broadcasts over tokens

    # 4 output phases x 4 taps, all static -> plain 2-D MXU matmuls, no transposes.
    for s in range(2):
        for t in range(2):
            acc = jnp.zeros((H * W, cout), jnp.float32)
            for k in range(2):
                for l in range(2):
                    # static window of the padded input (sublane-offset load)
                    patch = xp_ref[s + k:s + k + H, t + l:t + l + W, :]   # (H, W, Cin)
                    widx = s * 8 + t * 4 + k * 2 + l
                    acc = acc + jnp.dot(patch.reshape(H * W, cin),
                                        wp_ref[widx],
                                        preferred_element_type=jnp.float32)
            out_ref[s * 2 + t] = (acc + bias).astype(out_ref.dtype)


def _upsample_phase_kernel(x_ref, out_ref):
    # Pure nearest x2 upsample (use_conv=False path): every phase is a copy of x.
    # x_ref: (H, W, C); out_ref: (4, H, W, C).
    x = x_ref[...]
    for p in range(4):
        out_ref[p] = x


def up_layer(x, params=None, *, use_conv=False, scale_factor=2, compute_dtype=None):
    """x: (B, Cin, H, W) NCHW.  params: {"w": (3,3,Cin,Cout), "b": (Cout,)} if use_conv.
       Equivalent to: F.interpolate(x, scale_factor=2, mode='nearest'); optional 3x3 conv."""
    assert int(scale_factor) == 2, "TODO(synk): only scale_factor=2 is implemented"
    B, Cin, H, W = x.shape
    cdt = compute_dtype or x.dtype

    x_nhwc = jnp.transpose(x, (0, 2, 3, 1))                     # (B, H, W, Cin)

    if not use_conv:
        phases = pl.pallas_call(
            _upsample_phase_kernel,
            out_shape=jax.ShapeDtypeStruct((B, 4, H, W, Cin), x.dtype),
            grid_spec=pltpu.PrefetchScalarGridSpec(
                num_scalar_prefetch=0,
                grid=(B,),
                in_specs=[pl.BlockSpec((None, H, W, Cin), lambda b: (b, 0, 0, 0))],
                out_specs=pl.BlockSpec((None, 4, H, W, Cin),
                                       lambda b: (b, 0, 0, 0, 0)),
            ),
            compiler_params=pltpu.CompilerParams(
                dimension_semantics=("parallel",),
                vmem_limit_bytes=32 * 1024 * 1024),
        )(x_nhwc)
        Cout = Cin
    else:
        w = params["w"]                                          # (3, 3, Cin, Cout)
        bias = params["b"]                                       # (Cout,)
        Cout = w.shape[-1]

        # Fold the nearest-x2 upsample into the conv weights:
        # Wp[s,t,k,l] = sum_{i in I(s,k), j in J(t,l)} w[i,j]  (each (Cin, Cout)),
        # with I(0,0)={0}, I(0,1)={1,2}, I(1,0)={0,1}, I(1,1)={2} (same for J).
        S = jnp.array([[[1, 0, 0], [0, 1, 1]],
                       [[1, 1, 0], [0, 0, 1]]], dtype=w.dtype)    # [s, k, i]
        wp = jnp.einsum("ski,tlj,ijco->stklco", S, S, w)          # (2,2,2,2,Cin,Cout)
        wp = wp.reshape(16, Cin, Cout).astype(cdt)                # flat [s,t,k,l]
        bias2 = bias.reshape(1, Cout).astype(jnp.float32)

        # Zero-pad the original-resolution input by 1 on each spatial side.
        xp = jnp.pad(x_nhwc, ((0, 0), (1, 1), (1, 1), (0, 0))).astype(cdt)

        kernel = functools.partial(_up_conv_phase_kernel, H=H, W=W)
        phases_flat = pl.pallas_call(
            kernel,
            out_shape=jax.ShapeDtypeStruct((B, 4, H * W, Cout), x.dtype),
            grid_spec=pltpu.PrefetchScalarGridSpec(
                num_scalar_prefetch=0,
                grid=(B,),
                in_specs=[
                    pl.BlockSpec((None, H + 2, W + 2, Cin), lambda b: (b, 0, 0, 0)),
                    pl.BlockSpec((16, Cin, Cout), lambda b: (0, 0, 0)),   # resident
                    pl.BlockSpec((1, Cout), lambda b: (0, 0)),            # resident
                ],
                out_specs=pl.BlockSpec((None, 4, H * W, Cout),
                                       lambda b: (b, 0, 0, 0)),
            ),
            compiler_params=pltpu.CompilerParams(
                dimension_semantics=("parallel",),
                vmem_limit_bytes=32 * 1024 * 1024),
        )(xp, wp, bias2)
        phases = phases_flat.reshape(B, 4, H, W, Cout)

    # Interleave phases back to full resolution: y[b, 2a+s, 2c+t, :] = phases[b, s*2+t, a, c, :]
    phases = phases.reshape(B, 2, 2, H, W, Cout)
    y = jnp.transpose(phases, (0, 3, 1, 4, 2, 5)).reshape(B, 2 * H, 2 * W, Cout)
    return jnp.transpose(y, (0, 3, 1, 2))                        # NHWC -> NCHW


def _reference(x, w, bias, use_conv):
    """Pure-JAX reference of the PyTorch UpLayer forward (scale_factor=2)."""
    up = jnp.repeat(jnp.repeat(x, 2, axis=2), 2, axis=3)
    if not use_conv:
        return up
    w_oihw = jnp.transpose(w, (3, 2, 0, 1))
    out = jax.lax.conv_general_dilated(
        up, w_oihw, window_strides=(1, 1), padding=((1, 1), (1, 1)),
        dimension_numbers=("NCHW", "OIHW", "NCHW"))
    return out + bias.reshape(1, -1, 1, 1)


if __name__ == "__main__":
    # Small shapes consistent with the module. W multiple of 8; channels reasonably
    # lane-friendly (pad to 128 on v5e for full lane density in real models).
    B, Cin, H, W = 2, 64, 16, 16
    Cout = 64

    key = jax.random.PRNGKey(0)
    k1, k2, k3 = jax.random.split(key, 3)
    x = jax.random.normal(k1, (B, Cin, H, W), jnp.float32)

    fan_in = Cin * 3 * 3
    bound = 1.0 / math.sqrt(fan_in)
    w = jax.random.uniform(k2, (3, 3, Cin, Cout), jnp.float32, -bound, bound)
    bias = jax.random.uniform(k3, (Cout,), jnp.float32, -bound, bound)
    params = {"w": w, "b": bias}

    # use_conv=True path (upsample fused into 3x3 conv).
    out = up_layer(x, params, use_conv=True)
    out = jax.block_until_ready(out)
    ref = _reference(x, w, bias, True)
    assert out.shape == (B, Cout, 2 * H, 2 * W), (out.shape,)
    assert jnp.allclose(out, ref, atol=1e-4, rtol=1e-4), float(jnp.max(jnp.abs(out - ref)))

    # use_conv=False path (pure nearest upsample).
    out2 = jax.block_until_ready(up_layer(x, None, use_conv=False))
    ref2 = _reference(x, None, None, False)
    assert out2.shape == (B, Cin, 2 * H, 2 * W), (out2.shape,)
    assert jnp.allclose(out2, ref2), float(jnp.max(jnp.abs(out2 - ref2)))

    print("KERNEL_OK")
</pallas_src>

<mosaic_0001>
module attributes {stable_mosaic.version = 11 : i64} {
  func.func @_up_conv_phase_kernel(%arg0: i32, %arg1: memref<1x18x18x64xf32, #tpu.memory_space<vmem>>, %arg2: memref<16x64x64xf32, #tpu.memory_space<vmem>>, %arg3: memref<1x64xf32, #tpu.memory_space<vmem>>, %arg4: memref<1x4x256x64xf32, #tpu.memory_space<vmem>>) attributes {dimension_semantics = [#tpu.dimension_semantics<parallel>], iteration_bounds = array<i64: 2>, scalar_prefetch = 0 : i64, scratch_operands = 0 : i64, tpu.core_type = #tpu.core_type<tc>, window_params = [{transform_indices = @transform_0, window_bounds = array<i64: 1, 18, 18, 64>}, {pipeline_mode = #tpu.pipeline_mode<synchronous>, transform_indices = @transform_1, window_bounds = array<i64: 16, 64, 64>}, {pipeline_mode = #tpu.pipeline_mode<synchronous>, transform_indices = @transform_2, window_bounds = array<i64: 1, 64>}, {transform_indices = @transform_3, window_bounds = array<i64: 1, 4, 256, 64>}]} {
    %c0 = arith.constant 0 : index
    %c0_0 = arith.constant 0 : index
    %0 = vector.load %arg3[%c0, %c0_0] : memref<1x64xf32, #tpu.memory_space<vmem>>, vector<1x64xf32>
    %cst = arith.constant 0.000000e+00 : f32
    %1 = vector.broadcast %cst : f32 to vector<256x64xf32>
    %c0_1 = arith.constant 0 : index
    %c0_2 = arith.constant 0 : index
    %c0_3 = arith.constant 0 : index
    %c0_4 = arith.constant 0 : index
    %2 = vector.load %arg1[%c0_1, %c0_2, %c0_3, %c0_4] : memref<1x18x18x64xf32, #tpu.memory_space<vmem>>, vector<1x16x16x64xf32>
    %3 = vector.shape_cast %2 : vector<1x16x16x64xf32> to vector<16x16x64xf32>
    %4 = vector.shape_cast %3 : vector<16x16x64xf32> to vector<256x64xf32>
    %c0_5 = arith.constant 0 : index
    %c0_6 = arith.constant 0 : index
    %c0_7 = arith.constant 0 : index
    %5 = vector.load %arg2[%c0_5, %c0_6, %c0_7] : memref<16x64x64xf32, #tpu.memory_space<vmem>>, vector<1x64x64xf32>
    %6 = vector.shape_cast %5 : vector<1x64x64xf32> to vector<64x64xf32>
    %cst_8 = arith.constant dense<0.000000e+00> : vector<256x64xf32>
    %7 = tpu.matmul %4, %6, %cst_8 {dimension_numbers = #tpu.dot_dimension_numbers<[1], [0], [0], [1], [0, 0, 1, 1], [], []>} : vector<256x64xf32>, vector<64x64xf32>, vector<256x64xf32> -> vector<256x64xf32>
    %8 = arith.addf %1, %7 : vector<256x64xf32>
    %c0_9 = arith.constant 0 : index
    %c0_10 = arith.constant 0 : index
    %c1 = arith.constant 1 : index
    %c0_11 = arith.constant 0 : index
    %9 = vector.load %arg1[%c0_9, %c0_10, %c1, %c0_11] : memref<1x18x18x64xf32, #tpu.memory_space<vmem>>, vector<1x16x16x64xf32>
    %10 = vector.shape_cast %9 : vector<1x16x16x64xf32> to vector<16x16x64xf32>
    %11 = vector.shape_cast %10 : vector<16x16x64xf32> to vector<256x64xf32>
    %c1_12 = arith.constant 1 : index
    %c0_13 = arith.constant 0 : index
    %c0_14 = arith.constant 0 : index
    %12 = vector.load %arg2[%c1_12, %c0_13, %c0_14] : memref<16x64x64xf32, #tpu.memory_space<vmem>>, vector<1x64x64xf32>
    %13 = vector.shape_cast %12 : vector<1x64x64xf32> to vector<64x64xf32>
    %cst_15 = arith.constant dense<0.000000e+00> : vector<256x64xf32>
    %14 = tpu.matmul %11, %13, %cst_15 {dimension_numbers = #tpu.dot_dimension_numbers<[1], [0], [0], [1], [0, 0, 1, 1], [], []>} : vector<256x64xf32>, vector<64x64xf32>, vector<256x64xf32> -> vector<256x64xf32>
    %15 = arith.addf %8, %14 : vector<256x64xf32>
    %c0_16 = arith.constant 0 : index
    %c1_17 = arith.constant 1 : index
    %c0_18 = arith.constant 0 : index
    %c0_19 = arith.constant 0 : index
    %16 = vector.load %arg1[%c0_16, %c1_17, %c0_18, %c0_19] : memref<1x18x18x64xf32, #tpu.memory_space<vmem>>, vector<1x16x16x64xf32>
    %17 = vector.shape_cast %16 : vector<1x16x16x64xf32> to vector<16x16x64xf32>
    %18 = vector.shape_cast %17 : vector<16x16x64xf32> to vector<256x64xf32>
    %c2 = arith.constant 2 : index
    %c0_20 = arith.constant 0 : index
    %c0_21 = arith.constant 0 : index
    %19 = vector.load %arg2[%c2, %c0_20, %c0_21] : memref<16x64x64xf32, #tpu.memory_space<vmem>>, vector<1x64x64xf32>
    %20 = vector.shape_cast %19 : vector<1x64x64xf32> to vector<64x64xf32>
    %cst_22 = arith.constant dense<0.000000e+00> : vector<256x64xf32>
    %21 = tpu.matmul %18, %20, %cst_22 {dimension_numbers = #tpu.dot_dimension_numbers<[1], [0], [0], [1], [0, 0, 1, 1], [], []>} : vector<256x64xf32>, vector<64x64xf32>, vector<256x64xf32> -> vector<256x64xf32>
    %22 = arith.addf %15, %21 : vector<256x64xf32>
    %c0_23 = arith.constant 0 : index
    %c1_24 = arith.constant 1 : index
    %c1_25 = arith.constant 1 : index
    %c0_26 = arith.constant 0 : index
    %23 = vector.load %arg1[%c0_23, %c1_24, %c1_25, %c0_26] : memref<1x18x18x64xf32, #tpu.memory_space<vmem>>, vector<1x16x16x64xf32>
    %24 = vector.shape_cast %23 : vector<1x16x16x64xf32> to vector<16x16x64xf32>
    %25 = vector.shape_cast %24 : vector<16x16x64xf32> to vector<256x64xf32>
    %c3 = arith.constant 3 : index
    %c0_27 = arith.constant 0 : index
    %c0_28 = arith.constant 0 : index
    %26 = vector.load %arg2[%c3, %c0_27, %c0_28] : memref<16x64x64xf32, #tpu.memory_space<vmem>>, vector<1x64x64xf32>
    %27 = vector.shape_cast %26 : vector<1x64x64xf32> to vector<64x64xf32>
    %cst_29 = arith.constant dense<0.000000e+00> : vector<256x64xf32>
    %28 = tpu.matmul %25, %27, %cst_29 {dimension_numbers = #tpu.dot_dimension_numbers<[1], [0], [0], [1], [0, 0, 1, 1], [], []>} : vector<256x64xf32>, vector<64x64xf32>, vector<256x64xf32> -> vector<256x64xf32>
    %29 = arith.addf %22, %28 : vector<256x64xf32>
    %30 = vector.broadcast %0 : vector<1x64xf32> to vector<256x64xf32>
    %31 = arith.addf %29, %30 : vector<256x64xf32>
    %c0_30 = arith.constant 0 : index
    %c0_31 = arith.constant 0 : index
    %c0_32 = arith.constant 0 : index
    %c0_33 = arith.constant 0 : index
    %32 = vector.load %arg4[%c0_30, %c0_31, %c0_32, %c0_33] : memref<1x4x256x64xf32, #tpu.memory_space<vmem>>, vector<1x1x256x64xf32>
    %33 = vector.shape_cast %32 : vector<1x1x256x64xf32> to vector<256x64xf32>
    %34 = vector.shape_cast %31 : vector<256x64xf32> to vector<1x1x256x64xf32>
    tpu.vector_store %arg4[%c0_30, %c0_31, %c0_32, %c0_33], %34 {strides = array<i32>} : memref<1x4x256x64xf32, #tpu.memory_space<vmem>>, vector<1x1x256x64xf32>,
    %cst_34 = arith.constant 0.000000e+00 : f32
    %35 = vector.broadcast %cst_34 : f32 to vector<256x64xf32>
    %c0_35 = arith.constant 0 : index
    %c0_36 = arith.constant 0 : index
    %c1_37 = arith.constant 1 : index
    %c0_38 = arith.constant 0 : index
    %36 = vector.load %arg1[%c0_35, %c0_36, %c1_37, %c0_38] : memref<1x18x18x64xf32, #tpu.memory_space<vmem>>, vector<1x16x16x64xf32>
    %37 = vector.shape_cast %36 : vector<1x16x16x64xf32> to vector<16x16x64xf32>
    %38 = vector.shape_cast %37 : vector<16x16x64xf32> to vector<256x64xf32>
    %c4 = arith.constant 4 : index
    %c0_39 = arith.constant 0 : index
    %c0_40 = arith.constant 0 : index
    %39 = vector.load %arg2[%c4, %c0_39, %c0_40] : memref<16x64x64xf32, #tpu.memory_space<vmem>>, vector<1x64x64xf32>
    %40 = vector.shape_cast %39 : vector<1x64x64xf32> to vector<64x64xf32>
    %cst_41 = arith.constant dense<0.000000e+00> : vector<256x64xf32>
    %41 = tpu.matmul %38, %40, %cst_41 {dimension_numbers = #tpu.dot_dimension_numbers<[1], [0], [0], [1], [0, 0, 1, 1], [], []>} : vector<256x64xf32>, vector<64x64xf32>, vector<256x64xf32> -> vector<256x64xf32>
    %42 = arith.addf %35, %41 : vector<256x64xf32>
    %c0_42 = arith.constant 0 : index
    %c0_43 = arith.constant 0 : index
    %c2_44 = arith.constant 2 : index
    %c0_45 = arith.constant 0 : index
    %43 = vector.load %arg1[%c0_42, %c0_43, %c2_44, %c0_45] : memref<1x18x18x64xf32, #tpu.memory_space<vmem>>, vector<1x16x16x64xf32>
    %44 = vector.shape_cast %43 : vector<1x16x16x64xf32> to vector<16x16x64xf32>
    %45 = vector.shape_cast %44 : vector<16x16x64xf32> to vector<256x64xf32>
    %c5 = arith.constant 5 : index
    %c0_46 = arith.constant 0 : index
    %c0_47 = arith.constant 0 : index
    %46 = vector.load %arg2[%c5, %c0_46, %c0_47] : memref<16x64x64xf32, #tpu.memory_space<vmem>>, vector<1x64x64xf32>
    %47 = vector.shape_cast %46 : vector<1x64x64xf32> to vector<64x64xf32>
    %cst_48 = arith.constant dense<0.000000e+00> : vector<256x64xf32>
    %48 = tpu.matmul %45, %47, %cst_48 {dimension_numbers = #tpu.dot_dimension_numbers<[1], [0], [0], [1], [0, 0, 1, 1], [], []>} : vector<256x64xf32>, vector<64x64xf32>, vector<256x64xf32> -> vector<256x64xf32>
    %49 = arith.addf %42, %48 : vector<256x64xf32>
    %c0_49 = arith.constant 0 : index
    %c1_50 = arith.constant 1 : index
    %c1_51 = arith.constant 1 : index
    %c0_52 = arith.constant 0 : index
    %50 = vector.load %arg1[%c0_49, %c1_50, %c1_51, %c0_52] : memref<1x18x18x64xf32, #tpu.memory_space<vmem>>, vector<1x16x16x64xf32>
    %51 = vector.shape_cast %50 : vector<1x16x16x64xf32> to vector<16x16x64xf32>
    %52 = vector.shape_cast %51 : vector<16x16x64xf32> to vector<256x64xf32>
    %c6 = arith.constant 6 : index
    %c0_53 = arith.constant 0 : index
    %c0_54 = arith.constant 0 : index
    %53 = vector.load %arg2[%c6, %c0_53, %c0_54] : memref<16x64x64xf32, #tpu.memory_space<vmem>>, vector<1x64x64xf32>
    %54 = vector.shape_cast %53 : vector<1x64x64xf32> to vector<64x64xf32>
    %cst_55 = arith.constant dense<0.000000e+00> : vector<256x64xf32>
    %55 = tpu.matmul %52, %54, %cst_55 {dimension_numbers = #tpu.dot_dimension_numbers<[1], [0], [0], [1], [0, 0, 1, 1], [], []>} : vector<256x64xf32>, vector<64x64xf32>, vector<256x64xf32> -> vector<256x64xf32>
    %56 = arith.addf %49, %55 : vector<256x64xf32>
    %c0_56 = arith.constant 0 : index
    %c1_57 = arith.constant 1 : index
    %c2_58 = arith.constant 2 : index
    %c0_59 = arith.constant 0 : index
    %57 = vector.load %arg1[%c0_56, %c1_57, %c2_58, %c0_59] : memref<1x18x18x64xf32, #tpu.memory_space<vmem>>, vector<1x16x16x64xf32>
    %58 = vector.shape_cast %57 : vector<1x16x16x64xf32> to vector<16x16x64xf32>
    %59 = vector.shape_cast %58 : vector<16x16x64xf32> to vector<256x64xf32>
    %c7 = arith.constant 7 : index
    %c0_60 = arith.constant 0 : index
    %c0_61 = arith.constant 0 : index
    %60 = vector.load %arg2[%c7, %c0_60, %c0_61] : memref<16x64x64xf32, #tpu.memory_space<vmem>>, vector<1x64x64xf32>
    %61 = vector.shape_cast %60 : vector<1x64x64xf32> to vector<64x64xf32>
    %cst_62 = arith.constant dense<0.000000e+00> : vector<256x64xf32>
    %62 = tpu.matmul %59, %61, %cst_62 {dimension_numbers = #tpu.dot_dimension_numbers<[1], [0], [0], [1], [0, 0, 1, 1], [], []>} : vector<256x64xf32>, vector<64x64xf32>, vector<256x64xf32> -> vector<256x64xf32>
    %63 = arith.addf %56, %62 : vector<256x64xf32>
    %64 = vector.broadcast %0 : vector<1x64xf32> to vector<256x64xf32>
    %65 = arith.addf %63, %64 : vector<256x64xf32>
    %c0_63 = arith.constant 0 : index
    %c1_64 = arith.constant 1 : index
    %c0_65 = arith.constant 0 : index
    %c0_66 = arith.constant 0 : index
    %66 = vector.load %arg4[%c0_63, %c1_64, %c0_65, %c0_66] : memref<1x4x256x64xf32, #tpu.memory_space<vmem>>, vector<1x1x256x64xf32>
    %67 = vector.shape_cast %66 : vector<1x1x256x64xf32> to vector<256x64xf32>
    %68 = vector.shape_cast %65 : vector<256x64xf32> to vector<1x1x256x64xf32>
    tpu.vector_store %arg4[%c0_63, %c1_64, %c0_65, %c0_66], %68 {strides = array<i32>} : memref<1x4x256x64xf32, #tpu.memory_space<vmem>>, vector<1x1x256x64xf32>,
    %cst_67 = arith.constant 0.000000e+00 : f32
    %69 = vector.broadcast %cst_67 : f32 to vector<256x64xf32>
    %c0_68 = arith.constant 0 : index
    %c1_69 = arith.constant 1 : index
    %c0_70 = arith.constant 0 : index
    %c0_71 = arith.constant 0 : index
    %70 = vector.load %arg1[%c0_68, %c1_69, %c0_70, %c0_71] : memref<1x18x18x64xf32, #tpu.memory_space<vmem>>, vector<1x16x16x64xf32>
    %71 = vector.shape_cast %70 : vector<1x16x16x64xf32> to vector<16x16x64xf32>
    %72 = vector.shape_cast %71 : vector<16x16x64xf32> to vector<256x64xf32>
    %c8 = arith.constant 8 : index
    %c0_72 = arith.constant 0 : index
    %c0_73 = arith.constant 0 : index
    %73 = vector.load %arg2[%c8, %c0_72, %c0_73] : memref<16x64x64xf32, #tpu.memory_space<vmem>>, vector<1x64x64xf32>
    %74 = vector.shape_cast %73 : vector<1x64x64xf32> to vector<64x64xf32>
    %cst_74 = arith.constant dense<0.000000e+00> : vector<256x64xf32>
    %75 = tpu.matmul %72, %74, %cst_74 {dimension_numbers = #tpu.dot_dimension_numbers<[1], [0], [0], [1], [0, 0, 1, 1], [], []>} : vector<256x64xf32>, vector<64x64xf32>, vector<256x64xf32> -> vector<256x64xf32>
    %76 = arith.addf %69, %75 : vector<256x64xf32>
    %c0_75 = arith.constant 0 : index
    %c1_76 = arith.constant 1 : index
    %c1_77 = arith.constant 1 : index
    %c0_78 = arith.constant 0 : index
    %77 = vector.load %arg1[%c0_75, %c1_76, %c1_77, %c0_78] : memref<1x18x18x64xf32, #tpu.memory_space<vmem>>, vector<1x16x16x64xf32>
    %78 = vector.shape_cast %77 : vector<1x16x16x64xf32> to vector<16x16x64xf32>
    %79 = vector.shape_cast %78 : vector<16x16x64xf32> to vector<256x64xf32>
    %c9 = arith.constant 9 : index
    %c0_79 = arith.constant 0 : index
    %c0_80 = arith.constant 0 : index
    %80 = vector.load %arg2[%c9, %c0_79, %c0_80] : memref<16x64x64xf32, #tpu.memory_space<vmem>>, vector<1x64x64xf32>
    %81 = vector.shape_cast %80 : vector<1x64x64xf32> to vector<64x64xf32>
    %cst_81 = arith.constant dense<0.000000e+00> : vector<256x64xf32>
    %82 = tpu.matmul %79, %81, %cst_81 {dimension_numbers = #tpu.dot_dimension_numbers<[1], [0], [0], [1], [0, 0, 1, 1], [], []>} : vector<256x64xf32>, vector<64x64xf32>, vector<256x64xf32> -> vector<256x64xf32>
    %83 = arith.addf %76, %82 : vector<256x64xf32>
    %c0_82 = arith.constant 0 : index
    %c2_83 = arith.constant 2 : index
    %c0_84 = arith.constant 0 : index
    %c0_85 = arith.constant 0 : index
    %84 = vector.load %arg1[%c0_82, %c2_83, %c0_84, %c0_85] : memref<1x18x18x64xf32, #tpu.memory_space<vmem>>, vector<1x16x16x64xf32>
    %85 = vector.shape_cast %84 : vector<1x16x16x64xf32> to vector<16x16x64xf32>
    %86 = vector.shape_cast %85 : vector<16x16x64xf32> to vector<256x64xf32>
    %c10 = arith.constant 10 : index
    %c0_86 = arith.constant 0 : index
    %c0_87 = arith.constant 0 : index
    %87 = vector.load %arg2[%c10, %c0_86, %c0_87] : memref<16x64x64xf32, #tpu.memory_space<vmem>>, vector<1x64x64xf32>
    %88 = vector.shape_cast %87 : vector<1x64x64xf32> to vector<64x64xf32>
    %cst_88 = arith.constant dense<0.000000e+00> : vector<256x64xf32>
    %89 = tpu.matmul %86, %88, %cst_88 {dimension_numbers = #tpu.dot_dimension_numbers<[1], [0], [0], [1], [0, 0, 1, 1], [], []>} : vector<256x64xf32>, vector<64x64xf32>, vector<256x64xf32> -> vector<256x64xf32>
    %90 = arith.addf %83, %89 : vector<256x64xf32>
    %c0_89 = arith.constant 0 : index
    %c2_90 = arith.constant 2 : index
    %c1_91 = arith.constant 1 : index
    %c0_92 = arith.constant 0 : index
    %91 = vector.load %arg1[%c0_89, %c2_90, %c1_91, %c0_92] : memref<1x18x18x64xf32, #tpu.memory_space<vmem>>, vector<1x16x16x64xf32>
    %92 = vector.shape_cast %91 : vector<1x16x16x64xf32> to vector<16x16x64xf32>
    %93 = vector.shape_cast %92 : vector<16x16x64xf32> to vector<256x64xf32>
    %c11 = arith.constant 11 : index
    %c0_93 = arith.constant 0 : index
    %c0_94 = arith.constant 0 : index
    %94 = vector.load %arg2[%c11, %c0_93, %c0_94] : memref<16x64x64xf32, #tpu.memory_space<vmem>>, vector<1x64x64xf32>
    %95 = vector.shape_cast %94 : vector<1x64x64xf32> to vector<64x64xf32>
    %cst_95 = arith.constant dense<0.000000e+00> : vector<256x64xf32>
    %96 = tpu.matmul %93, %95, %cst_95 {dimension_numbers = #tpu.dot_dimension_numbers<[1], [0], [0], [1], [0, 0, 1, 1], [], []>} : vector<256x64xf32>, vector<64x64xf32>, vector<256x64xf32> -> vector<256x64xf32>
    %97 = arith.addf %90, %96 : vector<256x64xf32>
    %98 = vector.broadcast %0 : vector<1x64xf32> to vector<256x64xf32>
    %99 = arith.addf %97, %98 : vector<256x64xf32>
    %c0_96 = arith.constant 0 : index
    %c2_97 = arith.constant 2 : index
    %c0_98 = arith.constant 0 : index
    %c0_99 = arith.constant 0 : index
    %100 = vector.load %arg4[%c0_96, %c2_97, %c0_98, %c0_99] : memref<1x4x256x64xf32, #tpu.memory_space<vmem>>, vector<1x1x256x64xf32>
    %101 = vector.shape_cast %100 : vector<1x1x256x64xf32> to vector<256x64xf32>
    %102 = vector.shape_cast %99 : vector<256x64xf32> to vector<1x1x256x64xf32>
    tpu.vector_store %arg4[%c0_96, %c2_97, %c0_98, %c0_99], %102 {strides = array<i32>} : memref<1x4x256x64xf32, #tpu.memory_space<vmem>>, vector<1x1x256x64xf32>,
    %cst_100 = arith.constant 0.000000e+00 : f32
    %103 = vector.broadcast %cst_100 : f32 to vector<256x64xf32>
    %c0_101 = arith.constant 0 : index
    %c1_102 = arith.constant 1 : index
    %c1_103 = arith.constant 1 : index
    %c0_104 = arith.constant 0 : index
    %104 = vector.load %arg1[%c0_101, %c1_102, %c1_103, %c0_104] : memref<1x18x18x64xf32, #tpu.memory_space<vmem>>, vector<1x16x16x64xf32>
    %105 = vector.shape_cast %104 : vector<1x16x16x64xf32> to vector<16x16x64xf32>
    %106 = vector.shape_cast %105 : vector<16x16x64xf32> to vector<256x64xf32>
    %c12 = arith.constant 12 : index
    %c0_105 = arith.constant 0 : index
    %c0_106 = arith.constant 0 : index
    %107 = vector.load %arg2[%c12, %c0_105, %c0_106] : memref<16x64x64xf32, #tpu.memory_space<vmem>>, vector<1x64x64xf32>
    %108 = vector.shape_cast %107 : vector<1x64x64xf32> to vector<64x64xf32>
    %cst_107 = arith.constant dense<0.000000e+00> : vector<256x64xf32>
    %109 = tpu.matmul %106, %108, %cst_107 {dimension_numbers = #tpu.dot_dimension_numbers<[1], [0], [0], [1], [0, 0, 1, 1], [], []>} : vector<256x64xf32>, vector<64x64xf32>, vector<256x64xf32> -> vector<256x64xf32>
    %110 = arith.addf %103, %109 : vector<256x64xf32>
    %c0_108 = arith.constant 0 : index
    %c1_109 = arith.constant 1 : index
    %c2_110 = arith.constant 2 : index
    %c0_111 = arith.constant 0 : index
    %111 = vector.load %arg1[%c0_108, %c1_109, %c2_110, %c0_111] : memref<1x18x18x64xf32, #tpu.memory_space<vmem>>, vector<1x16x16x64xf32>
    %112 = vector.shape_cast %111 : vector<1x16x16x64xf32> to vector<16x16x64xf32>
    %113 = vector.shape_cast %112 : vector<16x16x64xf32> to vector<256x64xf32>
    %c13 = arith.constant 13 : index
    %c0_112 = arith.constant 0 : index
    %c0_113 = arith.constant 0 : index
    %114 = vector.load %arg2[%c13, %c0_112, %c0_113] : memref<16x64x64xf32, #tpu.memory_space<vmem>>, vector<1x64x64xf32>
    %115 = vector.shape_cast %114 : vector<1x64x64xf32> to vector<64x64xf32>
    %cst_114 = arith.constant dense<0.000000e+00> : vector<256x64xf32>
    %116 = tpu.matmul %113, %115, %cst_114 {dimension_numbers = #tpu.dot_dimension_numbers<[1], [0], [0], [1], [0, 0, 1, 1], [], []>} : vector<256x64xf32>, vector<64x64xf32>, vector<256x64xf32> -> vector<256x64xf32>
    %117 = arith.addf %110, %116 : vector<256x64xf32>
    %c0_115 = arith.constant 0 : index
    %c2_116 = arith.constant 2 : index
    %c1_117 = arith.constant 1 : index
    %c0_118 = arith.constant 0 : index
    %118 = vector.load %arg1[%c0_115, %c2_116, %c1_117, %c0_118] : memref<1x18x18x64xf32, #tpu.memory_space<vmem>>, vector<1x16x16x64xf32>
    %119 = vector.shape_cast %118 : vector<1x16x16x64xf32> to vector<16x16x64xf32>
    %120 = vector.shape_cast %119 : vector<16x16x64xf32> to vector<256x64xf32>
    %c14 = arith.constant 14 : index
    %c0_119 = arith.constant 0 : index
    %c0_120 = arith.constant 0 : index
    %121 = vector.load %arg2[%c14, %c0_119, %c0_120] : memref<16x64x64xf32, #tpu.memory_space<vmem>>, vector<1x64x64xf32>
    %122 = vector.shape_cast %121 : vector<1x64x64xf32> to vector<64x64xf32>
    %cst_121 = arith.constant dense<0.000000e+00> : vector<256x64xf32>
    %123 = tpu.matmul %120, %122, %cst_121 {dimension_numbers = #tpu.dot_dimension_numbers<[1], [0], [0], [1], [0, 0, 1, 1], [], []>} : vector<256x64xf32>, vector<64x64xf32>, vector<256x64xf32> -> vector<256x64xf32>
    %124 = arith.addf %117, %123 : vector<256x64xf32>
    %c0_122 = arith.constant 0 : index
    %c2_123 = arith.constant 2 : index
    %c2_124 = arith.constant 2 : index
    %c0_125 = arith.constant 0 : index
    %125 = vector.load %arg1[%c0_122, %c2_123, %c2_124, %c0_125] : memref<1x18x18x64xf32, #tpu.memory_space<vmem>>, vector<1x16x16x64xf32>
    %126 = vector.shape_cast %125 : vector<1x16x16x64xf32> to vector<16x16x64xf32>
    %127 = vector.shape_cast %126 : vector<16x16x64xf32> to vector<256x64xf32>
    %c15 = arith.constant 15 : index
    %c0_126 = arith.constant 0 : index
    %c0_127 = arith.constant 0 : index
    %128 = vector.load %arg2[%c15, %c0_126, %c0_127] : memref<16x64x64xf32, #tpu.memory_space<vmem>>, vector<1x64x64xf32>
    %129 = vector.shape_cast %128 : vector<1x64x64xf32> to vector<64x64xf32>
    %cst_128 = arith.constant dense<0.000000e+00> : vector<256x64xf32>
    %130 = tpu.matmul %127, %129, %cst_128 {dimension_numbers = #tpu.dot_dimension_numbers<[1], [0], [0], [1], [0, 0, 1, 1], [], []>} : vector<256x64xf32>, vector<64x64xf32>, vector<256x64xf32> -> vector<256x64xf32>
    %131 = arith.addf %124, %130 : vector<256x64xf32>
    %132 = vector.broadcast %0 : vector<1x64xf32> to vector<256x64xf32>
    %133 = arith.addf %131, %132 : vector<256x64xf32>
    %c0_129 = arith.constant 0 : index
    %c3_130 = arith.constant 3 : index
    %c0_131 = arith.constant 0 : index
    %c0_132 = arith.constant 0 : index
    %134 = vector.load %arg4[%c0_129, %c3_130, %c0_131, %c0_132] : memref<1x4x256x64xf32, #tpu.memory_space<vmem>>, vector<1x1x256x64xf32>
    %135 = vector.shape_cast %134 : vector<1x1x256x64xf32> to vector<256x64xf32>
    %136 = vector.shape_cast %133 : vector<256x64xf32> to vector<1x1x256x64xf32>
    tpu.vector_store %arg4[%c0_129, %c3_130, %c0_131, %c0_132], %136 {strides = array<i32>} : memref<1x4x256x64xf32, #tpu.memory_space<vmem>>, vector<1x1x256x64xf32>,
    return
  }
  func.func @transform_0(%arg0: i32) -> (i32, i32, i32, i32) {
    %c0_i32 = arith.constant 0 : i32
    %c0_i32_0 = arith.constant 0 : i32
    %c0_i32_1 = arith.constant 0 : i32
    %c0_i32_2 = arith.constant 0 : i32
    return %arg0, %c0_i32, %c0_i32_0, %c0_i32_1 : i32, i32, i32, i32
  }
  func.func @transform_1(%arg0: i32) -> (i32, i32, i32) {
    %c0_i32 = arith.constant 0 : i32
    %c0_i32_0 = arith.constant 0 : i32
    %c0_i32_1 = arith.constant 0 : i32
    %c0_i32_2 = arith.constant 0 : i32
    return %c0_i32, %c0_i32_0, %c0_i32_1 : i32, i32, i32
  }
  func.func @transform_2(%arg0: i32) -> (i32, i32) {
    %c0_i32 = arith.constant 0 : i32
    %c0_i32_0 = arith.constant 0 : i32
    %c0_i32_1 = arith.constant 0 : i32
    return %c0_i32, %c0_i32_0 : i32, i32
  }
  func.func @transform_3(%arg0: i32) -> (i32, i32, i32, i32) {
    %c0_i32 = arith.constant 0 : i32
    %c0_i32_0 = arith.constant 0 : i32
    %c0_i32_1 = arith.constant 0 : i32
    %c0_i32_2 = arith.constant 0 : i32
    return %arg0, %c0_i32, %c0_i32_0, %c0_i32_1 : i32, i32, i32, i32
  }
}

</mosaic_0001>

<llo_original>
// kernel: tpu_custom_call.1
$region0: #{tpu_custom_call.1}
  #allocation0 [shape = 'u32[]', space=smem, size = 0x4, offset = 0x4, fixed_abs, tag = 'smem constant byte address 0x4 - core index']
  #allocation1 [shape = 'u32[72,128]{1,0:T(1,128)}', space=vmem, size = 0x9000, scoped, tag = 'internal scratch']
  %s0 = inlined_call_operand.vmem [shape: f32[2,18,18,64], index: 0, kind: input, shape index: {}]
  %s1 = inlined_call_operand.vmem [shape: f32[16,64,64], index: 1, kind: input, shape index: {}]
  %s2 = inlined_call_operand.vmem [shape: f32[1,64], index: 2, kind: input, shape index: {}]
  %s3 = inlined_call_operand.vmem [shape: f32[2,4,256,64], index: 3, kind: output, shape index: {}]
  %s4 = sld [smem:[#allocation0]]
  $region45: #{tpu_custom_call.1} parent=0
    _
  %s6 = ssub.s32 1, %s4
  %s7 = scalar_select 0, %s6, %s4
  loop: start=0, step=1, limit=4
  $region2: #{tpu_custom_call.1} parent=0 // loop_pre_header
    _
  $region3: #{tpu_custom_call.1} parent=0 // loop_header
    %s9 = sphi 0, %s13
    %p10 = scmp.ge.s32.totalorder %s9, 4
    %s19 = sphi 0, %s21
    %s22 = sphi 0, %s19
    %s23 = sphi 0, %s22
    %s39 = sphi 0, %s23
    %s43 = sphi 0, %s43
    %s45 = sphi 0, %s43
    %s46 = sphi 0, %s45
    %s60 = sphi 0, %s46
    %s64 = sphi 0, %s64
    %s66 = sphi 0, %s64
    %s67 = sphi 0, %s66
    %s81 = sphi 0, %s67
    %s87 = sphi 0, %s89
    %s90 = sphi 0, %s87
    %s91 = sphi 0, %s90
    %s107 = sphi 0, %s91
  $region4: #{tpu_custom_call.1} parent=0 // loop_header_branch
    %12 = sbr.rel (%p10) target = $region8
  $region5: #{tpu_custom_call.1} parent=0 // loop_body
    %s14 = ssub.s32 %s9, 1
    %s15 = ssub.s32 %s9, 2
    %s16 = sadd.s32 %s9, 1
    %s17 = ssub.s32 %s9, %s16
    %p18 = scmp.eq.s32.totalorder %s17, 0
    %s20 = sadd.s32 %s19, 1
    %s21 = scalar_select %p18, %s19, %s20
    %p24 = pneg %p18
    %p25 = scmp.eq.s32.totalorder %s9, 1
    %p26 = por %p24, %p25
    %p27 = scmp.ne.s32.totalorder %s19, %s22
    %p28 = scmp.eq.s32.totalorder %s9, 0
    %p29 = por %p27, %p28
    %p30 = scmp.ne.s32.totalorder %s19, %s22
    %p31 = scmp.eq.s32.totalorder %s14, 1
    %p32 = por %p30, %p31
    %p33 = scmp.ne.s32.totalorder %s22, %s23
    %p34 = scmp.eq.s32.totalorder %s14, 0
    %p35 = por %p33, %p34
    %p36 = scmp.ne.s32.totalorder %s22, %s23
    %p37 = scmp.eq.s32.totalorder %s15, 1
    %p38 = por %p36, %p37
    %p40 = scmp.ne.s32.totalorder %s23, %s39
    %p41 = scmp.eq.s32.totalorder %s15, 0
    %p42 = por %p40, %p41
    %s44 = sadd.s32 %s43, 1
    %p47 = scmp.eq.s32.totalorder %s9, 1
    %p48 = scmp.ne.s32.totalorder %s43, %s45
    %p49 = scmp.eq.s32.totalorder %s9, 0
    %p50 = por %p48, %p49
    %p51 = scmp.ne.s32.totalorder %s43, %s45
    %p52 = scmp.eq.s32.totalorder %s14, 1
    %p53 = por %p51, %p52
    %p54 = scmp.ne.s32.totalorder %s45, %s46
    %p55 = scmp.eq.s32.totalorder %s14, 0
    %p56 = por %p54, %p55
    %p57 = scmp.ne.s32.totalorder %s45, %s46
    %p58 = scmp.eq.s32.totalorder %s15, 1
    %p59 = por %p57, %p58
    %p61 = scmp.ne.s32.totalorder %s46, %s60
    %p62 = scmp.eq.s32.totalorder %s15, 0
    %p63 = por %p61, %p62
    %s65 = sadd.s32 %s64, 1
    %p68 = scmp.eq.s32.totalorder %s9, 1
    %p69 = scmp.ne.s32.totalorder %s64, %s66
    %p70 = scmp.eq.s32.totalorder %s9, 0
    %p71 = por %p69, %p70
    %p72 = scmp.ne.s32.totalorder %s64, %s66
    %p73 = scmp.eq.s32.totalorder %s14, 1
    %p74 = por %p72, %p73
    %p75 = scmp.ne.s32.totalorder %s66, %s67
    %p76 = scmp.eq.s32.totalorder %s14, 0
    %p77 = por %p75, %p76
    %p78 = scmp.ne.s32.totalorder %s66, %s67
    %p79 = scmp.eq.s32.totalorder %s15, 1
    %p80 = por %p78, %p79
    %p82 = scmp.ne.s32.totalorder %s67, %s81
    %p83 = scmp.eq.s32.totalorder %s15, 0
    %p84 = por %p82, %p83
    %s85 = ssub.s32 %s9, %s16
    %p86 = scmp.eq.s32.totalorder %s85, 0
    %s88 = sadd.s32 %s87, 1
    %s89 = scalar_select %p86, %s87, %s88
    %p92 = pneg %p86
    %p93 = scmp.eq.s32.totalorder %s9, 1
    %p94 = por %p92, %p93
    %p95 = scmp.ne.s32.totalorder %s87, %s90
    %p96 = scmp.eq.s32.totalorder %s9, 0
    %p97 = por %p95, %p96
    %p98 = scmp.ne.s32.totalorder %s87, %s90
    %p99 = scmp.eq.s32.totalorder %s14, 1
    %p100 = por %p98, %p99
    %p101 = scmp.ne.s32.totalorder %s90, %s91
    %p102 = scmp.eq.s32.totalorder %s14, 0
    %p103 = por %p101, %p102
    %p104 = scmp.ne.s32.totalorder %s90, %s91
    %p105 = scmp.eq.s32.totalorder %s15, 1
    %p106 = por %p104, %p105
    %p108 = scmp.ne.s32.totalorder %s91, %s107
    %p109 = scmp.eq.s32.totalorder %s15, 0
    %p110 = por %p108, %p109
    %p111 = scmp.le.s32.totalorder 1, %s9
    %p112 = scmp.lt.s32.totalorder %s9, 3
    %p113 = pnand %p111, %p112
    %p114 = pneg %p113
    // Predicated region
    $region9: #{tpu_custom_call.1} parent=5 // pred_check
      _
    $region10: #{tpu_custom_call.1} parent=5 // pred_check_branch
      %116 = sbr.rel (%p113) target = $region12
    $region11: #{tpu_custom_call.1} parent=5 // pred_region
      %s117 = ssub.s32 %s9, 1
      // Predicated region
      $region13: #{tpu_custom_call.1} parent=11 // pred_check
        %p118 = pneg %p56
      $region14: #{tpu_custom_call.1} parent=11 // pred_check_branch
        %120 = sbr.rel (%p118) target = $region16
      $region15: #{tpu_custom_call.1} parent=11 // pred_region
        _
      $region16: #{tpu_custom_call.1} parent=11 // pred_fallthru
        _
      // Predicated region
      $region17: #{tpu_custom_call.1} parent=11 // pred_check
        %p121 = pneg %p77
      $region18: #{tpu_custom_call.1} parent=11 // pred_check_branch
        %123 = sbr.rel (%p121) target = $region20
      $region19: #{tpu_custom_call.1} parent=11 // pred_region
        _
      $region20: #{tpu_custom_call.1} parent=11 // pred_fallthru
        _
    $region12: #{tpu_custom_call.1} parent=5 // pred_fallthru
      _
    %p124 = scmp.lt.s32.totalorder %s9, 2
    // Predicated region
    $region21: #{tpu_custom_call.1} parent=5 // pred_check
      %p125 = pneg %p124
    $region22: #{tpu_custom_call.1} parent=5 // pred_check_branch
      %127 = sbr.rel (%p125) target = $region24
    $region23: #{tpu_custom_call.1} parent=5 // pred_region
      // Predicated region
      $region25: #{tpu_custom_call.1} parent=23 // pred_check
        %p128 = pneg %p29
      $region26: #{tpu_custom_call.1} parent=23 // pred_check_branch
        %130 = sbr.rel (%p128) target = $region28
      $region27: #{tpu_custom_call.1} parent=23 // pred_region
        %p131 = scmp.lt.s32.totalorder %s9, 1
        %s132 = scalar_select %p131, %s9, 1
        %s133 = smul.addr %s132, 54
        %s134 = smul.addr %s133, 8
        %s135 = scalar_lea.vmem %s0, %s134
      $region28: #{tpu_custom_call.1} parent=23 // pred_fallthru
        _
    $region24: #{tpu_custom_call.1} parent=5 // pred_fallthru
      _
    %p136 = scmp.le.s32.totalorder 1, %s9
    %p137 = scmp.lt.s32.totalorder %s9, 3
    %p138 = pnand %p136, %p137
    %p139 = pneg %p138
    // Predicated region
    $region29: #{tpu_custom_call.1} parent=5 // pred_check
      _
    $region30: #{tpu_custom_call.1} parent=5 // pred_check_branch
      %141 = sbr.rel (%p138) target = $region32
    $region31: #{tpu_custom_call.1} parent=5 // pred_region
      %s142 = ssub.s32 %s9, 1
      %p143 = scmp.lt.s32.totalorder %s14, 1
      %s144 = scalar_select %p143, %s14, 1
      %s145 = smul.addr %s144, 54
      %s146 = smul.addr %s145, 8
      %s147 = scalar_lea.vmem %s0, %s146
      %p148 = pneg %p35
      %p149 = pneg %p32
      %p150 = pneg %p56
      %p151 = pneg %p53
      %p152 = pneg %p77
      %p153 = pneg %p74
      %p154 = pneg %p103
      %p155 = pneg %p100
      %p156 = scmp.lt.s32.totalorder %s14, 1
      %s157 = scalar_select %p156, %s14, 1
      %s158 = smul.addr %s157, 128
      %s159 = smul.addr %s158, 8
      %s160 = scalar_lea.vmem %s3, %s159
      %p161 = scmp.lt.s32.totalorder %s14, 1
      %s162 = scalar_select %p161, %s14, 1
      %s163 = smul.addr %s162, 54
      %s164 = smul.addr %s163, 8
      %s165 = scalar_lea.vmem %s0, %s164
      %p166 = scmp.lt.s32.totalorder %s14, 1
      %s167 = scalar_select %p166, %s14, 1
      %s168 = smul.addr %s167, 128
      %s169 = smul.addr %s168, 8
      %s170 = scalar_lea.vmem %s3, %s169
      %v171 = vld [vmem:[%s2] sm:$0x1]
      %v172 = vld [vmem:[%s165] sm:$0xff]
      %v173 = vld [vmem:[%s165 + $0x8] sm:$0xff]
      %v174 = vld [vmem:[%s165 + $0x18] sm:$0xff]
      %v175 = vld [vmem:[%s165 + $0x20] sm:$0xff]
      %v176 = vld [vmem:[%s165 + $0x30] sm:$0xff]
      %v177 = vld [vmem:[%s165 + $0x38] sm:$0xff]
      %v178 = vld [vmem:[%s165 + $0x48] sm:$0xff]
      %v179 = vld [vmem:[%s165 + $0x50] sm:$0xff]
      %v180 = vld [vmem:[%s165 + $0x60] sm:$0xff]
      %v181 = vld [vmem:[%s165 + $0x68] sm:$0xff]
      %v182 = vld [vmem:[%s165 + $0x78] sm:$0xff]
      %v183 = vld [vmem:[%s165 + $0x80] sm:$0xff]
      %v184 = vld [vmem:[%s165 + $0x90] sm:$0xff]
      %v185 = vld [vmem:[%s165 + $0x98] sm:$0xff]
      %v186 = vld [vmem:[%s165 + $0xa8] sm:$0xff]
      %v187 = vld [vmem:[%s165 + $0xb0] sm:$0xff]
      %v188 = vld [vmem:[%s165 + $0xc0] sm:$0xff]
      %v189 = vld [vmem:[%s165 + $0xc8] sm:$0xff]
      %v190 = vld [vmem:[%s165 + $0xd8] sm:$0xff]
      %v191 = vld [vmem:[%s165 + $0xe0] sm:$0xff]
      %v192 = vld [vmem:[%s165 + $0xf0] sm:$0xff]
      %v193 = vld [vmem:[%s165 + $0xf8] sm:$0xff]
      %v194 = vld [vmem:[%s165 + $0x108] sm:$0xff]
      %v195 = vld [vmem:[%s165 + $0x110] sm:$0xff]
      %v196 = vld [vmem:[%s165 + $0x120] sm:$0xff]
      %v197 = vld [vmem:[%s165 + $0x128] sm:$0xff]
      %v198 = vld [vmem:[%s165 + $0x138] sm:$0xff]
      %v199 = vld [vmem:[%s165 + $0x140] sm:$0xff]
      %v200 = vld [vmem:[%s165 + $0x150] sm:$0xff]
      %v201 = vld [vmem:[%s165 + $0x158] sm:$0xff]
      %v202 = vld [vmem:[%s165 + $0x168] sm:$0xff]
      %v203 = vld [vmem:[%s165 + $0x170] sm:$0xff]
      %v204 = vld [vmem:[%s1] sm:$0xff]
      %v205 = vld [vmem:[%s1 + $0x8] sm:$0xff]
      %v206 = vld [vmem:[%s1 + $0x10] sm:$0xff]
      %v207 = vld [vmem:[%s1 + $0x18] sm:$0xff]
      %v208 = vld [vmem:[%s1 + $0x20] sm:$0xff]
      %v209 = vld [vmem:[%s1 + $0x28] sm:$0xff]
      %v210 = vld [vmem:[%s1 + $0x30] sm:$0xff]
      %v211 = vld [vmem:[%s1 + $0x38] sm:$0xff]
      %v212 = vld [vmem:[%s165 + $0x1] sm:$0xff]
      %v213 = vld [vmem:[%s165 + $0x9] sm:$0xff]
      %v214 = vld [vmem:[%s165 + $0x19] sm:$0xff]
      %v215 = vld [vmem:[%s165 + $0x21] sm:$0xff]
      %v216 = vld [vmem:[%s165 + $0x31] sm:$0xff]
      %v217 = vld [vmem:[%s165 + $0x39] sm:$0xff]
      %v218 = vld [vmem:[%s165 + $0x49] sm:$0xff]
      %v219 = vld [vmem:[%s165 + $0x51] sm:$0xff]
      %v220 = vld [vmem:[%s165 + $0x61] sm:$0xff]
      %v221 = vld [vmem:[%s165 + $0x69] sm:$0xff]
      %v222 = vld [vmem:[%s165 + $0x79] sm:$0xff]
      %v223 = vld [vmem:[%s165 + $0x81] sm:$0xff]
      %v224 = vld [vmem:[%s165 + $0x91] sm:$0xff]
      %v225 = vld [vmem:[%s165 + $0x99] sm:$0xff]
      %v226 = vld [vmem:[%s165 + $0xa9] sm:$0xff]
      %v227 = vld [vmem:[%s165 + $0xb1] sm:$0xff]
      %v228 = vld [vmem:[%s165 + $0xc1] sm:$0xff]
      %v229 = vld [vmem:[%s165 + $0xc9] sm:$0xff]
      %v230 = vld [vmem:[%s165 + $0xd9] sm:$0xff]
      %v231 = vld [vmem:[%s165 + $0xe1] sm:$0xff]
      %v232 = vld [vmem:[%s165 + $0xf1] sm:$0xff]
      %v233 = vld [vmem:[%s165 + $0xf9] sm:$0xff]
      %v234 = vld [vmem:[%s165 + $0x109] sm:$0xff]
      %v235 = vld [vmem:[%s165 + $0x111] sm:$0xff]
      %v236 = vld [vmem:[%s165 + $0x121] sm:$0xff]
      %v237 = vld [vmem:[%s165 + $0x129] sm:$0xff]
      %v238 = vld [vmem:[%s165 + $0x139] sm:$0xff]
      %v239 = vld [vmem:[%s165 + $0x141] sm:$0xff]
      %v240 = vld [vmem:[%s165 + $0x151] sm:$0xff]
      %v241 = vld [vmem:[%s165 + $0x159] sm:$0xff]
      %v242 = vld [vmem:[%s165 + $0x169] sm:$0xff]
      %v243 = vld [vmem:[%s165 + $0x171] sm:$0xff]
      %s244 = scalar_lea.vmem %s1, 64
      %v245 = vld [vmem:[%s244] sm:$0xff]
      %v246 = vld [vmem:[%s244 + $0x8] sm:$0xff]
      %v247 = vld [vmem:[%s244 + $0x10] sm:$0xff]
      %v248 = vld [vmem:[%s244 + $0x18] sm:$0xff]
      %v249 = vld [vmem:[%s244 + $0x20] sm:$0xff]
      %v250 = vld [vmem:[%s244 + $0x28] sm:$0xff]
      %v251 = vld [vmem:[%s244 + $0x30] sm:$0xff]
      %v252 = vld [vmem:[%s244 + $0x38] sm:$0xff]
      %vm253 = vcmask 523264
      %v255 = vsel %vm253, %v212, 0
      %v258 = vsel %vm253, %v213, 0
      %v261 = vsel %vm253, %v214, 0
      %v264 = vsel %vm253, %v215, 0
      %v267 = vsel %vm253, %v216, 0
      %v270 = vsel %vm253, %v217, 0
      %v273 = vsel %vm253, %v218, 0
      %v276 = vsel %vm253, %v219, 0
      %v279 = vsel %vm253, %v220, 0
      %v282 = vsel %vm253, %v221, 0
      %v285 = vsel %vm253, %v222, 0
      %v288 = vsel %vm253, %v223, 0
      %v291 = vsel %vm253, %v224, 0
      %v294 = vsel %vm253, %v225, 0
      %v297 = vsel %vm253, %v226, 0
      %v300 = vsel %vm253, %v227, 0
      %v303 = vsel %vm253, %v228, 0
      %v306 = vsel %vm253, %v229, 0
      %v309 = vsel %vm253, %v230, 0
      %v312 = vsel %vm253, %v231, 0
      %v315 = vsel %vm253, %v232, 0
      %v318 = vsel %vm253, %v233, 0
      %v321 = vsel %vm253, %v234, 0
      %v324 = vsel %vm253, %v235, 0
      %v327 = vsel %vm253, %v236, 0
      %v330 = vsel %vm253, %v237, 0
      %v333 = vsel %vm253, %v238, 0
      %v336 = vsel %vm253, %v239, 0
      %v339 = vsel %vm253, %v240, 0
      %v342 = vsel %vm253, %v241, 0
      %v345 = vsel %vm253, %v242, 0
      %v348 = vsel %vm253, %v243, 0
      %350 = vmatpush.msra.mxu0 0.0
      %351 = vmatpush.msra.mxu0 0.0
      %352 = vmatpush.msra.mxu0 0.0
      %353 = vmatpush.msra.mxu0 0.0
      %354 = vmatpush.msra.mxu0 0.0
      %355 = vmatpush.msra.mxu0 0.0
      %356 = vmatpush.msra.mxu0 0.0
      %357 = vmatpush.msra.mxu0 0.0
      %358 = vmatpush.msra.mxu0 %v252
      %359 = vmatpush.msra.mxu0 %v251
      %360 = vmatpush.msra.mxu0 %v250
      %361 = vmatpush.msra.mxu0 %v249
      %362 = vmatpush.msra.mxu0 %v248
      %363 = vmatpush.msra.mxu0 %v247
      %364 = vmatpush.msra.mxu0 %v246
      %365 = vmatpush.msra.mxu0 %v245
      %366 = vmatmul.f32.gmra.mxu0 %v255
      %v367 = vpop.f32.mrf.mxu0
      %v368 = vadd.f32 0.0, %v367
      %369 = vmatmul.f32.gmra.mxu0 %v258
      %v370 = vpop.f32.mrf.mxu0
      %v371 = vadd.f32 0.0, %v370
      %372 = vmatmul.f32.gmra.mxu0 %v261
      %v373 = vpop.f32.mrf.mxu0
      %v374 = vadd.f32 0.0, %v373
      %375 = vmatmul.f32.gmra.mxu0 %v264
      %v376 = vpop.f32.mrf.mxu0
      %v377 = vadd.f32 0.0, %v376
      %378 = vmatmul.f32.gmra.mxu0 %v267
      %v379 = vpop.f32.mrf.mxu0
      %v380 = vadd.f32 0.0, %v379
      %381 = vmatmul.f32.gmra.mxu0 %v270
      %v382 = vpop.f32.mrf.mxu0
      %v383 = vadd.f32 0.0, %v382
      %384 = vmatmul.f32.gmra.mxu0 %v273
      %v385 = vpop.f32.mrf.mxu0
      %v386 = vadd.f32 0.0, %v385
      %387 = vmatmul.f32.gmra.mxu0 %v276
      %v388 = vpop.f32.mrf.mxu0
      %v389 = vadd.f32 0.0, %v388
      %390 = vmatmul.f32.gmra.mxu0 %v279
      %v391 = vpop.f32.mrf.mxu0
      %v392 = vadd.f32 0.0, %v391
      %393 = vmatmul.f32.gmra.mxu0 %v282
      %v394 = vpop.f32.mrf.mxu0
      %v395 = vadd.f32 0.0, %v394
      %396 = vmatmul.f32.gmra.mxu0 %v285
      %v397 = vpop.f32.mrf.mxu0
      %v398 = vadd.f32 0.0, %v397
      %399 = vmatmul.f32.gmra.mxu0 %v288
      %v400 = vpop.f32.mrf.mxu0
      %v401 = vadd.f32 0.0, %v400
      %402 = vmatmul.f32.gmra.mxu0 %v291
      %v403 = vpop.f32.mrf.mxu0
      %v404 = vadd.f32 0.0, %v403
      %405 = vmatmul.f32.gmra.mxu0 %v294
      %v406 = vpop.f32.mrf.mxu0
      %v407 = vadd.f32 0.0, %v406
      %408 = vmatmul.f32.gmra.mxu0 %v297
      %v409 = vpop.f32.mrf.mxu0
      %v410 = vadd.f32 0.0, %v409
      %411 = vmatmul.f32.gmra.mxu0 %v300
      %v412 = vpop.f32.mrf.mxu0
      %v413 = vadd.f32 0.0, %v412
      %414 = vmatmul.f32.gmra.mxu0 %v303
      %v415 = vpop.f32.mrf.mxu0
      %v416 = vadd.f32 0.0, %v415
      %417 = vmatmul.f32.gmra.mxu0 %v306
      %v418 = vpop.f32.mrf.mxu0
      %v419 = vadd.f32 0.0, %v418
      %420 = vmatmul.f32.gmra.mxu0 %v309
      %v421 = vpop.f32.mrf.mxu0
      %v422 = vadd.f32 0.0, %v421
      %423 = vmatmul.f32.gmra.mxu0 %v312
      %v424 = vpop.f32.mrf.mxu0
      %v425 = vadd.f32 0.0, %v424
      %426 = vmatmul.f32.gmra.mxu0 %v315
      %v427 = vpop.f32.mrf.mxu0
      %v428 = vadd.f32 0.0, %v427
      %429 = vmatmul.f32.gmra.mxu0 %v318
      %v430 = vpop.f32.mrf.mxu0
      %v431 = vadd.f32 0.0, %v430
      %432 = vmatmul.f32.gmra.mxu0 %v321
      %v433 = vpop.f32.mrf.mxu0
      %v434 = vadd.f32 0.0, %v433
      %435 = vmatmul.f32.gmra.mxu0 %v324
      %v436 = vpop.f32.mrf.mxu0
      %v437 = vadd.f32 0.0, %v436
      %438 = vmatmul.f32.gmra.mxu0 %v327
      %v439 = vpop.f32.mrf.mxu0
      %v440 = vadd.f32 0.0, %v439
      %441 = vmatmul.f32.gmra.mxu0 %v330
      %v442 = vpop.f32.mrf.mxu0
      %v443 = vadd.f32 0.0, %v442
      %444 = vmatmul.f32.gmra.mxu0 %v333
      %v445 = vpop.f32.mrf.mxu0
      %v446 = vadd.f32 0.0, %v445
      %447 = vmatmul.f32.gmra.mxu0 %v336
      %v448 = vpop.f32.mrf.mxu0
      %v449 = vadd.f32 0.0, %v448
      %450 = vmatmul.f32.gmra.mxu0 %v339
      %v451 = vpop.f32.mrf.mxu0
      %v452 = vadd.f32 0.0, %v451
      %453 = vmatmul.f32.gmra.mxu0 %v342
      %v454 = vpop.f32.mrf.mxu0
      %v455 = vadd.f32 0.0, %v454
      %456 = vmatmul.f32.gmra.mxu0 %v345
      %v457 = vpop.f32.mrf.mxu0
      %v458 = vadd.f32 0.0, %v457
      %459 = vmatmul.f32.gmra.mxu0 %v348
      %v460 = vpop.f32.mrf.mxu0
      %v461 = vadd.f32 0.0, %v460
      %462 = vdwg.mxu0
      %v464 = vsel %vm253, %v172, 0
      %v467 = vsel %vm253, %v173, 0
      %v470 = vsel %vm253, %v174, 0
      %v473 = vsel %vm253, %v175, 0
      %v476 = vsel %vm253, %v176, 0
      %v479 = vsel %vm253, %v177, 0
      %v482 = vsel %vm253, %v178, 0
      %v485 = vsel %vm253, %v179, 0
      %v488 = vsel %vm253, %v180, 0
      %v491 = vsel %vm253, %v181, 0
      %v494 = vsel %vm253, %v182, 0
      %v497 = vsel %vm253, %v183, 0
      %v500 = vsel %vm253, %v184, 0
      %v503 = vsel %vm253, %v185, 0
      %v506 = vsel %vm253, %v186, 0
      %v509 = vsel %vm253, %v187, 0
      %v512 = vsel %vm253, %v188, 0
      %v515 = vsel %vm253, %v189, 0
      %v518 = vsel %vm253, %v190, 0
      %v521 = vsel %vm253, %v191, 0
      %v524 = vsel %vm253, %v192, 0
      %v527 = vsel %vm253, %v193, 0
      %v530 = vsel %vm253, %v194, 0
      %v533 = vsel %vm253, %v195, 0
      %v536 = vsel %vm253, %v196, 0
      %v539 = vsel %vm253, %v197, 0
      %v542 = vsel %vm253, %v198, 0
      %v545 = vsel %vm253, %v199, 0
      %v548 = vsel %vm253, %v200, 0
      %v551 = vsel %vm253, %v201, 0
      %v554 = vsel %vm253, %v202, 0
      %v557 = vsel %vm253, %v203, 0
      %559 = vmatpush.msra.mxu0 0.0
      %560 = vmatpush.msra.mxu0 0.0
      %561 = vmatpush.msra.mxu0 0.0
      %562 = vmatpush.msra.mxu0 0.0
      %563 = vmatpush.msra.mxu0 0.0
      %564 = vmatpush.msra.mxu0 0.0
      %565 = vmatpush.msra.mxu0 0.0
      %566 = vmatpush.msra.mxu0 0.0
      %567 = vmatpush.msra.mxu0 %v211
      %568 = vmatpush.msra.mxu0 %v210
      %569 = vmatpush.msra.mxu0 %v209
      %570 = vmatpush.msra.mxu0 %v208
      %571 = vmatpush.msra.mxu0 %v207
      %572 = vmatpush.msra.mxu0 %v206
      %573 = vmatpush.msra.mxu0 %v205
      %574 = vmatpush.msra.mxu0 %v204
      %575 = vmatmul.f32.gmra.mxu0 %v464
      %v576 = vpop.f32.mrf.mxu0
      %v577 = vadd.f32 %v368, %v576
      %578 = vmatmul.f32.gmra.mxu0 %v467
      %v579 = vpop.f32.mrf.mxu0
      %v580 = vadd.f32 %v371, %v579
      %581 = vmatmul.f32.gmra.mxu0 %v470
      %v582 = vpop.f32.mrf.mxu0
      %v583 = vadd.f32 %v374, %v582
      %584 = vmatmul.f32.gmra.mxu0 %v473
      %v585 = vpop.f32.mrf.mxu0
      %v586 = vadd.f32 %v377, %v585
      %587 = vmatmul.f32.gmra.mxu0 %v476
      %v588 = vpop.f32.mrf.mxu0
      %v589 = vadd.f32 %v380, %v588
      %590 = vmatmul.f32.gmra.mxu0 %v479
      %v591 = vpop.f32.mrf.mxu0
      %v592 = vadd.f32 %v383, %v591
      %593 = vmatmul.f32.gmra.mxu0 %v482
      %v594 = vpop.f32.mrf.mxu0
      %v595 = vadd.f32 %v386, %v594
      %596 = vmatmul.f32.gmra.mxu0 %v485
      %v597 = vpop.f32.mrf.mxu0
      %v598 = vadd.f32 %v389, %v597
      %599 = vmatmul.f32.gmra.mxu0 %v488
      %v600 = vpop.f32.mrf.mxu0
      %v601 = vadd.f32 %v392, %v600
      %602 = vmatmul.f32.gmra.mxu0 %v491
      %v603 = vpop.f32.mrf.mxu0
      %v604 = vadd.f32 %v395, %v603
      %605 = vmatmul.f32.gmra.mxu0 %v494
      %v606 = vpop.f32.mrf.mxu0
      %v607 = vadd.f32 %v398, %v606
      %608 = vmatmul.f32.gmra.mxu0 %v497
      %v609 = vpop.f32.mrf.mxu0
      %v610 = vadd.f32 %v401, %v609
      %611 = vmatmul.f32.gmra.mxu0 %v500
      %v612 = vpop.f32.mrf.mxu0
      %v613 = vadd.f32 %v404, %v612
      %614 = vmatmul.f32.gmra.mxu0 %v503
      %v615 = vpop.f32.mrf.mxu0
      %v616 = vadd.f32 %v407, %v615
      %617 = vmatmul.f32.gmra.mxu0 %v506
      %v618 = vpop.f32.mrf.mxu0
      %v619 = vadd.f32 %v410, %v618
      %620 = vmatmul.f32.gmra.mxu0 %v509
      %v621 = vpop.f32.mrf.mxu0
      %v622 = vadd.f32 %v413, %v621
      %623 = vmatmul.f32.gmra.mxu0 %v512
      %v624 = vpop.f32.mrf.mxu0
      %v625 = vadd.f32 %v416, %v624
      %626 = vmatmul.f32.gmra.mxu0 %v515
      %v627 = vpop.f32.mrf.mxu0
      %v628 = vadd.f32 %v419, %v627
      %629 = vmatmul.f32.gmra.mxu0 %v518
      %v630 = vpop.f32.mrf.mxu0
      %v631 = vadd.f32 %v422, %v630
      %632 = vmatmul.f32.gmra.mxu0 %v521
      %v633 = vpop.f32.mrf.mxu0
      %v634 = vadd.f32 %v425, %v633
      %635 = vmatmul.f32.gmra.mxu0 %v524
      %v636 = vpop.f32.mrf.mxu0
      %v637 = vadd.f32 %v428, %v636
      %638 = vmatmul.f32.gmra.mxu0 %v527
      %v639 = vpop.f32.mrf.mxu0
      %v640 = vadd.f32 %v431, %v639
      %641 = vmatmul.f32.gmra.mxu0 %v530
      %v642 = vpop.f32.mrf.mxu0
      %v643 = vadd.f32 %v434, %v642
      %644 = vmatmul.f32.gmra.mxu0 %v533
      %v645 = vpop.f32.mrf.mxu0
      %v646 = vadd.f32 %v437, %v645
      %647 = vmatmul.f32.gmra.mxu0 %v536
      %v648 = vpop.f32.mrf.mxu0
      %v649 = vadd.f32 %v440, %v648
      %650 = vmatmul.f32.gmra.mxu0 %v539
      %v651 = vpop.f32.mrf.mxu0
      %v652 = vadd.f32 %v443, %v651
      %653 = vmatmul.f32.gmra.mxu0 %v542
      %v654 = vpop.f32.mrf.mxu0
      %v655 = vadd.f32 %v446, %v654
      %656 = vmatmul.f32.gmra.mxu0 %v545
      %v657 = vpop.f32.mrf.mxu0
      %v658 = vadd.f32 %v449, %v657
      %659 = vmatmul.f32.gmra.mxu0 %v548
      %v660 = vpop.f32.mrf.mxu0
      %v661 = vadd.f32 %v452, %v660
      %662 = vmatmul.f32.gmra.mxu0 %v551
      %v663 = vpop.f32.mrf.mxu0
      %v664 = vadd.f32 %v455, %v663
      %665 = vmatmul.f32.gmra.mxu0 %v554
      %v666 = vpop.f32.mrf.mxu0
      %v667 = vadd.f32 %v458, %v666
      %668 = vmatmul.f32.gmra.mxu0 %v557
      %v669 = vpop.f32.mrf.mxu0
      %v670 = vadd.f32 %v461, %v669
      %671 = vdwg.mxu0
      %s672 = scalar_lea.vmem %s165, 24
      %v673 = vld [vmem:[%s672] sm:$0xff]
      %v674 = vld [vmem:[%s672 + $0x8] sm:$0xff]
      %v675 = vld [vmem:[%s672 + $0x18] sm:$0xff]
      %v676 = vld [vmem:[%s672 + $0x20] sm:$0xff]
      %v677 = vld [vmem:[%s672 + $0x30] sm:$0xff]
      %v678 = vld [vmem:[%s672 + $0x38] sm:$0xff]
      %v679 = vld [vmem:[%s672 + $0x48] sm:$0xff]
      %v680 = vld [vmem:[%s672 + $0x50] sm:$0xff]
      %v681 = vld [vmem:[%s672 + $0x60] sm:$0xff]
      %v682 = vld [vmem:[%s672 + $0x68] sm:$0xff]
      %v683 = vld [vmem:[%s672 + $0x78] sm:$0xff]
      %v684 = vld [vmem:[%s672 + $0x80] sm:$0xff]
      %v685 = vld [vmem:[%s672 + $0x90] sm:$0xff]
      %v686 = vld [vmem:[%s672 + $0x98] sm:$0xff]
      %v687 = vld [vmem:[%s672 + $0xa8] sm:$0xff]
      %v688 = vld [vmem:[%s672 + $0xb0] sm:$0xff]
      %v689 = vld [vmem:[%s672 + $0xc0] sm:$0xff]
      %v690 = vld [vmem:[%s672 + $0xc8] sm:$0xff]
      %v691 = vld [vmem:[%s672 + $0xd8] sm:$0xff]
      %v692 = vld [vmem:[%s672 + $0xe0] sm:$0xff]
      %v693 = vld [vmem:[%s672 + $0xf0] sm:$0xff]
      %v694 = vld [vmem:[%s672 + $0xf8] sm:$0xff]
      %v695 = vld [vmem:[%s672 + $0x108] sm:$0xff]
      %v696 = vld [vmem:[%s672 + $0x110] sm:$0xff]
      %v697 = vld [vmem:[%s672 + $0x120] sm:$0xff]
      %v698 = vld [vmem:[%s672 + $0x128] sm:$0xff]
      %v699 = vld [vmem:[%s672 + $0x138] sm:$0xff]
      %v700 = vld [vmem:[%s672 + $0x140] sm:$0xff]
      %v701 = vld [vmem:[%s672 + $0x150] sm:$0xff]
      %v702 = vld [vmem:[%s672 + $0x158] sm:$0xff]
      %v703 = vld [vmem:[%s672 + $0x168] sm:$0xff]
      %v704 = vld [vmem:[%s672 + $0x170] sm:$0xff]
      %s705 = scalar_lea.vmem %s1, 128
      %v706 = vld [vmem:[%s705] sm:$0xff]
      %v707 = vld [vmem:[%s705 + $0x8] sm:$0xff]
      %v708 = vld [vmem:[%s705 + $0x10] sm:$0xff]
      %v709 = vld [vmem:[%s705 + $0x18] sm:$0xff]
      %v710 = vld [vmem:[%s705 + $0x20] sm:$0xff]
      %v711 = vld [vmem:[%s705 + $0x28] sm:$0xff]
      %v712 = vld [vmem:[%s705 + $0x30] sm:$0xff]
      %v713 = vld [vmem:[%s705 + $0x38] sm:$0xff]
      %v715 = vsel %vm253, %v673, 0
      %v718 = vsel %vm253, %v674, 0
      %v721 = vsel %vm253, %v675, 0
      %v724 = vsel %vm253, %v676, 0
      %v727 = vsel %vm253, %v677, 0
      %v730 = vsel %vm253, %v678, 0
      %v733 = vsel %vm253, %v679, 0
      %v736 = vsel %vm253, %v680, 0
      %v739 = vsel %vm253, %v681, 0
      %v742 = vsel %vm253, %v682, 0
      %v745 = vsel %vm253, %v683, 0
      %v748 = vsel %vm253, %v684, 0
      %v751 = vsel %vm253, %v685, 0
      %v754 = vsel %vm253, %v686, 0
      %v757 = vsel %vm253, %v687, 0
      %v760 = vsel %vm253, %v688, 0
      %v763 = vsel %vm253, %v689, 0
      %v766 = vsel %vm253, %v690, 0
      %v769 = vsel %vm253, %v691, 0
      %v772 = vsel %vm253, %v692, 0
      %v775 = vsel %vm253, %v693, 0
      %v778 = vsel %vm253, %v694, 0
      %v781 = vsel %vm253, %v695, 0
      %v784 = vsel %vm253, %v696, 0
      %v787 = vsel %vm253, %v697, 0
      %v790 = vsel %vm253, %v698, 0
      %v793 = vsel %vm253, %v699, 0
      %v796 = vsel %vm253, %v700, 0
      %v799 = vsel %vm253, %v701, 0
      %v802 = vsel %vm253, %v702, 0
      %v805 = vsel %vm253, %v703, 0
      %v808 = vsel %vm253, %v704, 0
      %810 = vmatpush.msra.mxu0 0.0
      %811 = vmatpush.msra.mxu0 0.0
      %812 = vmatpush.msra.mxu0 0.0
      %813 = vmatpush.msra.mxu0 0.0
      %814 = vmatpush.msra.mxu0 0.0
      %815 = vmatpush.msra.mxu0 0.0
      %816 = vmatpush.msra.mxu0 0.0
      %817 = vmatpush.msra.mxu0 0.0
      %818 = vmatpush.msra.mxu0 %v713
      %819 = vmatpush.msra.mxu0 %v712
      %820 = vmatpush.msra.mxu0 %v711
      %821 = vmatpush.msra.mxu0 %v710
      %822 = vmatpush.msra.mxu0 %v709
      %823 = vmatpush.msra.mxu0 %v708
      %824 = vmatpush.msra.mxu0 %v707
      %825 = vmatpush.msra.mxu0 %v706
      %826 = vmatmul.f32.gmra.mxu0 %v715
      %v827 = vpop.f32.mrf.mxu0
      %v828 = vadd.f32 0.0, %v827
      %829 = vmatmul.f32.gmra.mxu0 %v718
      %v830 = vpop.f32.mrf.mxu0
      %v831 = vadd.f32 0.0, %v830
      %832 = vmatmul.f32.gmra.mxu0 %v721
      %v833 = vpop.f32.mrf.mxu0
      %v834 = vadd.f32 0.0, %v833
      %835 = vmatmul.f32.gmra.mxu0 %v724
      %v836 = vpop.f32.mrf.mxu0
      %v837 = vadd.f32 0.0, %v836
      %838 = vmatmul.f32.gmra.mxu0 %v727
      %v839 = vpop.f32.mrf.mxu0
      %v840 = vadd.f32 0.0, %v839
      %841 = vmatmul.f32.gmra.mxu0 %v730
      %v842 = vpop.f32.mrf.mxu0
      %v843 = vadd.f32 0.0, %v842
      %844 = vmatmul.f32.gmra.mxu0 %v733
      %v845 = vpop.f32.mrf.mxu0
      %v846 = vadd.f32 0.0, %v845
      %847 = vmatmul.f32.gmra.mxu0 %v736
      %v848 = vpop.f32.mrf.mxu0
      %v849 = vadd.f32 0.0, %v848
      %850 = vmatmul.f32.gmra.mxu0 %v739
      %v851 = vpop.f32.mrf.mxu0
      %v852 = vadd.f32 0.0, %v851
      %853 = vmatmul.f32.gmra.mxu0 %v742
      %v854 = vpop.f32.mrf.mxu0
      %v855 = vadd.f32 0.0, %v854
      %856 = vmatmul.f32.gmra.mxu0 %v745
      %v857 = vpop.f32.mrf.mxu0
      %v858 = vadd.f32 0.0, %v857
      %859 = vmatmul.f32.gmra.mxu0 %v748
      %v860 = vpop.f32.mrf.mxu0
      %v861 = vadd.f32 0.0, %v860
      %862 = vmatmul.f32.gmra.mxu0 %v751
      %v863 = vpop.f32.mrf.mxu0
      %v864 = vadd.f32 0.0, %v863
      %865 = vmatmul.f32.gmra.mxu0 %v754
      %v866 = vpop.f32.mrf.mxu0
      %v867 = vadd.f32 0.0, %v866
      %868 = vmatmul.f32.gmra.mxu0 %v757
      %v869 = vpop.f32.mrf.mxu0
      %v870 = vadd.f32 0.0, %v869
      %871 = vmatmul.f32.gmra.mxu0 %v760
      %v872 = vpop.f32.mrf.mxu0
      %v873 = vadd.f32 0.0, %v872
      %874 = vmatmul.f32.gmra.mxu0 %v763
      %v875 = vpop.f32.mrf.mxu0
      %v876 = vadd.f32 0.0, %v875
      %877 = vmatmul.f32.gmra.mxu0 %v766
      %v878 = vpop.f32.mrf.mxu0
      %v879 = vadd.f32 0.0, %v878
      %880 = vmatmul.f32.gmra.mxu0 %v769
      %v881 = vpop.f32.mrf.mxu0
      %v882 = vadd.f32 0.0, %v881
      %883 = vmatmul.f32.gmra.mxu0 %v772
      %v884 = vpop.f32.mrf.mxu0
      %v885 = vadd.f32 0.0, %v884
      %886 = vmatmul.f32.gmra.mxu0 %v775
      %v887 = vpop.f32.mrf.mxu0
      %v888 = vadd.f32 0.0, %v887
      %889 = vmatmul.f32.gmra.mxu0 %v778
      %v890 = vpop.f32.mrf.mxu0
      %v891 = vadd.f32 0.0, %v890
      %892 = vmatmul.f32.gmra.mxu0 %v781
      %v893 = vpop.f32.mrf.mxu0
      %v894 = vadd.f32 0.0, %v893
      %895 = vmatmul.f32.gmra.mxu0 %v784
      %v896 = vpop.f32.mrf.mxu0
      %v897 = vadd.f32 0.0, %v896
      %898 = vmatmul.f32.gmra.mxu0 %v787
      %v899 = vpop.f32.mrf.mxu0
      %v900 = vadd.f32 0.0, %v899
      %901 = vmatmul.f32.gmra.mxu0 %v790
      %v902 = vpop.f32.mrf.mxu0
      %v903 = vadd.f32 0.0, %v902
      %904 = vmatmul.f32.gmra.mxu0 %v793
      %v905 = vpop.f32.mrf.mxu0
      %v906 = vadd.f32 0.0, %v905
      %907 = vmatmul.f32.gmra.mxu0 %v796
      %v908 = vpop.f32.mrf.mxu0
      %v909 = vadd.f32 0.0, %v908
      %910 = vmatmul.f32.gmra.mxu0 %v799
      %v911 = vpop.f32.mrf.mxu0
      %v912 = vadd.f32 0.0, %v911
      %913 = vmatmul.f32.gmra.mxu0 %v802
      %v914 = vpop.f32.mrf.mxu0
      %v915 = vadd.f32 0.0, %v914
      %916 = vmatmul.f32.gmra.mxu0 %v805
      %v917 = vpop.f32.mrf.mxu0
      %v918 = vadd.f32 0.0, %v917
      %919 = vmatmul.f32.gmra.mxu0 %v808
      %v920 = vpop.f32.mrf.mxu0
      %v921 = vadd.f32 0.0, %v920
      %922 = vdwg.mxu0
      %v923 = vadd.f32 %v577, %v828
      %v924 = vadd.f32 %v580, %v831
      %v925 = vadd.f32 %v583, %v834
      %v926 = vadd.f32 %v586, %v837
      %v927 = vadd.f32 %v589, %v840
      %v928 = vadd.f32 %v592, %v843
      %v929 = vadd.f32 %v595, %v846
      %v930 = vadd.f32 %v598, %v849
      %v931 = vadd.f32 %v601, %v852
      %v932 = vadd.f32 %v604, %v855
      %v933 = vadd.f32 %v607, %v858
      %v934 = vadd.f32 %v610, %v861
      %v935 = vadd.f32 %v613, %v864
      %v936 = vadd.f32 %v616, %v867
      %v937 = vadd.f32 %v619, %v870
      %v938 = vadd.f32 %v622, %v873
      %v939 = vadd.f32 %v625, %v876
      %v940 = vadd.f32 %v628, %v879
      %v941 = vadd.f32 %v631, %v882
      %v942 = vadd.f32 %v634, %v885
      %v943 = vadd.f32 %v637, %v888
      %v944 = vadd.f32 %v640, %v891
      %v945 = vadd.f32 %v643, %v894
      %v946 = vadd.f32 %v646, %v897
      %v947 = vadd.f32 %v649, %v900
      %v948 = vadd.f32 %v652, %v903
      %v949 = vadd.f32 %v655, %v906
      %v950 = vadd.f32 %v658, %v909
      %v951 = vadd.f32 %v661, %v912
      %v952 = vadd.f32 %v664, %v915
      %v953 = vadd.f32 %v667, %v918
      %v954 = vadd.f32 %v670, %v921
      %v955 = vld [vmem:[%s672 + $0x1] sm:$0xff]
      %v956 = vld [vmem:[%s672 + $0x9] sm:$0xff]
      %v957 = vld [vmem:[%s672 + $0x19] sm:$0xff]
      %v958 = vld [vmem:[%s672 + $0x21] sm:$0xff]
      %v959 = vld [vmem:[%s672 + $0x31] sm:$0xff]
      %v960 = vld [vmem:[%s672 + $0x39] sm:$0xff]
      %v961 = vld [vmem:[%s672 + $0x49] sm:$0xff]
      %v962 = vld [vmem:[%s672 + $0x51] sm:$0xff]
      %v963 = vld [vmem:[%s672 + $0x61] sm:$0xff]
      %v964 = vld [vmem:[%s672 + $0x69] sm:$0xff]
      %v965 = vld [vmem:[%s672 + $0x79] sm:$0xff]
      %v966 = vld [vmem:[%s672 + $0x81] sm:$0xff]
      %v967 = vld [vmem:[%s672 + $0x91] sm:$0xff]
      %v968 = vld [vmem:[%s672 + $0x99] sm:$0xff]
      %v969 = vld [vmem:[%s672 + $0xa9] sm:$0xff]
      %v970 = vld [vmem:[%s672 + $0xb1] sm:$0xff]
      %v971 = vld [vmem:[%s672 + $0xc1] sm:$0xff]
      %v972 = vld [vmem:[%s672 + $0xc9] sm:$0xff]
      %v973 = vld [vmem:[%s672 + $0xd9] sm:$0xff]
      %v974 = vld [vmem:[%s672 + $0xe1] sm:$0xff]
      %v975 = vld [vmem:[%s672 + $0xf1] sm:$0xff]
      %v976 = vld [vmem:[%s672 + $0xf9] sm:$0xff]
      %v977 = vld [vmem:[%s672 + $0x109] sm:$0xff]
      %v978 = vld [vmem:[%s672 + $0x111] sm:$0xff]
      %v979 = vld [vmem:[%s672 + $0x121] sm:$0xff]
      %v980 = vld [vmem:[%s672 + $0x129] sm:$0xff]
      %v981 = vld [vmem:[%s672 + $0x139] sm:$0xff]
      %v982 = vld [vmem:[%s672 + $0x141] sm:$0xff]
      %v983 = vld [vmem:[%s672 + $0x151] sm:$0xff]
      %v984 = vld [vmem:[%s672 + $0x159] sm:$0xff]
      %v985 = vld [vmem:[%s672 + $0x169] sm:$0xff]
      %v986 = vld [vmem:[%s672 + $0x171] sm:$0xff]
      %s987 = scalar_lea.vmem %s1, 192
      %v988 = vld [vmem:[%s987] sm:$0xff]
      %v989 = vld [vmem:[%s987 + $0x8] sm:$0xff]
      %v990 = vld [vmem:[%s987 + $0x10] sm:$0xff]
      %v991 = vld [vmem:[%s987 + $0x18] sm:$0xff]
      %v992 = vld [vmem:[%s987 + $0x20] sm:$0xff]
      %v993 = vld [vmem:[%s987 + $0x28] sm:$0xff]
      %v994 = vld [vmem:[%s987 + $0x30] sm:$0xff]
      %v995 = vld [vmem:[%s987 + $0x38] sm:$0xff]
      %v997 = vsel %vm253, %v955, 0
      %v1000 = vsel %vm253, %v956, 0
      %v1003 = vsel %vm253, %v957, 0
      %v1006 = vsel %vm253, %v958, 0
      %v1009 = vsel %vm253, %v959, 0
      %v1012 = vsel %vm253, %v960, 0
      %v1015 = vsel %vm253, %v961, 0
      %v1018 = vsel %vm253, %v962, 0
      %v1021 = vsel %vm253, %v963, 0
      %v1024 = vsel %vm253, %v964, 0
      %v1027 = vsel %vm253, %v965, 0
      %v1030 = vsel %vm253, %v966, 0
      %v1033 = vsel %vm253, %v967, 0
      %v1036 = vsel %vm253, %v968, 0
      %v1039 = vsel %vm253, %v969, 0
      %v1042 = vsel %vm253, %v970, 0
      %v1045 = vsel %vm253, %v971, 0
      %v1048 = vsel %vm253, %v972, 0
      %v1051 = vsel %vm253, %v973, 0
      %v1054 = vsel %vm253, %v974, 0
      %v1057 = vsel %vm253, %v975, 0
      %v1060 = vsel %vm253, %v976, 0
      %v1063 = vsel %vm253, %v977, 0
      %v1066 = vsel %vm253, %v978, 0
      %v1069 = vsel %vm253, %v979, 0
      %v1072 = vsel %vm253, %v980, 0
      %v1075 = vsel %vm253, %v981, 0
      %v1078 = vsel %vm253, %v982, 0
      %v1081 = vsel %vm253, %v983, 0
      %v1084 = vsel %vm253, %v984, 0
      %v1087 = vsel %vm253, %v985, 0
      %v1090 = vsel %vm253, %v986, 0
      %1092 = vmatpush.msra.mxu0 0.0
      %1093 = vmatpush.msra.mxu0 0.0
      %1094 = vmatpush.msra.mxu0 0.0
      %1095 = vmatpush.msra.mxu0 0.0
      %1096 = vmatpush.msra.mxu0 0.0
      %1097 = vmatpush.msra.mxu0 0.0
      %1098 = vmatpush.msra.mxu0 0.0
      %1099 = vmatpush.msra.mxu0 0.0
      %1100 = vmatpush.msra.mxu0 %v995
      %1101 = vmatpush.msra.mxu0 %v994
      %1102 = vmatpush.msra.mxu0 %v993
      %1103 = vmatpush.msra.mxu0 %v992
      %1104 = vmatpush.msra.mxu0 %v991
      %1105 = vmatpush.msra.mxu0 %v990
      %1106 = vmatpush.msra.mxu0 %v989
      %1107 = vmatpush.msra.mxu0 %v988
      %1108 = vmatmul.f32.gmra.mxu0 %v997
      %v1109 = vpop.f32.mrf.mxu0
      %v1110 = vadd.f32 0.0, %v1109
      %1111 = vmatmul.f32.gmra.mxu0 %v1000
      %v1112 = vpop.f32.mrf.mxu0
      %v1113 = vadd.f32 0.0, %v1112
      %1114 = vmatmul.f32.gmra.mxu0 %v1003
      %v1115 = vpop.f32.mrf.mxu0
      %v1116 = vadd.f32 0.0, %v1115
      %1117 = vmatmul.f32.gmra.mxu0 %v1006
      %v1118 = vpop.f32.mrf.mxu0
      %v1119 = vadd.f32 0.0, %v1118
      %1120 = vmatmul.f32.gmra.mxu0 %v1009
      %v1121 = vpop.f32.mrf.mxu0
      %v1122 = vadd.f32 0.0, %v1121
      %1123 = vmatmul.f32.gmra.mxu0 %v1012
      %v1124 = vpop.f32.mrf.mxu0
      %v1125 = vadd.f32 0.0, %v1124
      %1126 = vmatmul.f32.gmra.mxu0 %v1015
      %v1127 = vpop.f32.mrf.mxu0
      %v1128 = vadd.f32 0.0, %v1127
      %1129 = vmatmul.f32.gmra.mxu0 %v1018
      %v1130 = vpop.f32.mrf.mxu0
      %v1131 = vadd.f32 0.0, %v1130
      %1132 = vmatmul.f32.gmra.mxu0 %v1021
      %v1133 = vpop.f32.mrf.mxu0
      %v1134 = vadd.f32 0.0, %v1133
      %1135 = vmatmul.f32.gmra.mxu0 %v1024
      %v1136 = vpop.f32.mrf.mxu0
      %v1137 = vadd.f32 0.0, %v1136
      %1138 = vmatmul.f32.gmra.mxu0 %v1027
      %v1139 = vpop.f32.mrf.mxu0
      %v1140 = vadd.f32 0.0, %v1139
      %1141 = vmatmul.f32.gmra.mxu0 %v1030
      %v1142 = vpop.f32.mrf.mxu0
      %v1143 = vadd.f32 0.0, %v1142
      %1144 = vmatmul.f32.gmra.mxu0 %v1033
      %v1145 = vpop.f32.mrf.mxu0
      %v1146 = vadd.f32 0.0, %v1145
      %1147 = vmatmul.f32.gmra.mxu0 %v1036
      %v1148 = vpop.f32.mrf.mxu0
      %v1149 = vadd.f32 0.0, %v1148
      %1150 = vmatmul.f32.gmra.mxu0 %v1039
      %v1151 = vpop.f32.mrf.mxu0
      %v1152 = vadd.f32 0.0, %v1151
      %1153 = vmatmul.f32.gmra.mxu0 %v1042
      %v1154 = vpop.f32.mrf.mxu0
      %v1155 = vadd.f32 0.0, %v1154
      %1156 = vmatmul.f32.gmra.mxu0 %v1045
      %v1157 = vpop.f32.mrf.mxu0
      %v1158 = vadd.f32 0.0, %v1157
      %1159 = vmatmul.f32.gmra.mxu0 %v1048
      %v1160 = vpop.f32.mrf.mxu0
      %v1161 = vadd.f32 0.0, %v1160
      %1162 = vmatmul.f32.gmra.mxu0 %v1051
      %v1163 = vpop.f32.mrf.mxu0
      %v1164 = vadd.f32 0.0, %v1163
      %1165 = vmatmul.f32.gmra.mxu0 %v1054
      %v1166 = vpop.f32.mrf.mxu0
      %v1167 = vadd.f32 0.0, %v1166
      %1168 = vmatmul.f32.gmra.mxu0 %v1057
      %v1169 = vpop.f32.mrf.mxu0
      %v1170 = vadd.f32 0.0, %v1169
      %1171 = vmatmul.f32.gmra.mxu0 %v1060
      %v1172 = vpop.f32.mrf.mxu0
      %v1173 = vadd.f32 0.0, %v1172
      %1174 = vmatmul.f32.gmra.mxu0 %v1063
      %v1175 = vpop.f32.mrf.mxu0
      %v1176 = vadd.f32 0.0, %v1175
      %1177 = vmatmul.f32.gmra.mxu0 %v1066
      %v1178 = vpop.f32.mrf.mxu0
      %v1179 = vadd.f32 0.0, %v1178
      %1180 = vmatmul.f32.gmra.mxu0 %v1069
      %v1181 = vpop.f32.mrf.mxu0
      %v1182 = vadd.f32 0.0, %v1181
      %1183 = vmatmul.f32.gmra.mxu0 %v1072
      %v1184 = vpop.f32.mrf.mxu0
      %v1185 = vadd.f32 0.0, %v1184
      %1186 = vmatmul.f32.gmra.mxu0 %v1075
      %v1187 = vpop.f32.mrf.mxu0
      %v1188 = vadd.f32 0.0, %v1187
      %1189 = vmatmul.f32.gmra.mxu0 %v1078
      %v1190 = vpop.f32.mrf.mxu0
      %v1191 = vadd.f32 0.0, %v1190
      %1192 = vmatmul.f32.gmra.mxu0 %v1081
      %v1193 = vpop.f32.mrf.mxu0
      %v1194 = vadd.f32 0.0, %v1193
      %1195 = vmatmul.f32.gmra.mxu0 %v1084
      %v1196 = vpop.f32.mrf.mxu0
      %v1197 = vadd.f32 0.0, %v1196
      %1198 = vmatmul.f32.gmra.mxu0 %v1087
      %v1199 = vpop.f32.mrf.mxu0
      %v1200 = vadd.f32 0.0, %v1199
      %1201 = vmatmul.f32.gmra.mxu0 %v1090
      %v1202 = vpop.f32.mrf.mxu0
      %v1203 = vadd.f32 0.0, %v1202
      %1204 = vdwg.mxu0
      %v1205 = vadd.f32 %v923, %v1110
      %v1206 = vadd.f32 %v924, %v1113
      %v1207 = vadd.f32 %v925, %v1116
      %v1208 = vadd.f32 %v926, %v1119
      %v1209 = vadd.f32 %v927, %v1122
      %v1210 = vadd.f32 %v928, %v1125
      %v1211 = vadd.f32 %v929, %v1128
      %v1212 = vadd.f32 %v930, %v1131
      %v1213 = vadd.f32 %v931, %v1134
      %v1214 = vadd.f32 %v932, %v1137
      %v1215 = vadd.f32 %v933, %v1140
      %v1216 = vadd.f32 %v934, %v1143
      %v1217 = vadd.f32 %v935, %v1146
      %v1218 = vadd.f32 %v936, %v1149
      %v1219 = vadd.f32 %v937, %v1152
      %v1220 = vadd.f32 %v938, %v1155
      %v1221 = vadd.f32 %v939, %v1158
      %v1222 = vadd.f32 %v940, %v1161
      %v1223 = vadd.f32 %v941, %v1164
      %v1224 = vadd.f32 %v942, %v1167
      %v1225 = vadd.f32 %v943, %v1170
      %v1226 = vadd.f32 %v944, %v1173
      %v1227 = vadd.f32 %v945, %v1176
      %v1228 = vadd.f32 %v946, %v1179
      %v1229 = vadd.f32 %v947, %v1182
      %v1230 = vadd.f32 %v948, %v1185
      %v1231 = vadd.f32 %v949, %v1188
      %v1232 = vadd.f32 %v950, %v1191
      %v1233 = vadd.f32 %v951, %v1194
      %v1234 = vadd.f32 %v952, %v1197
      %v1235 = vadd.f32 %v953, %v1200
      %v1236 = vadd.f32 %v954, %v1203
      %v1238 = vperm.slane %v171, 0
      %v1240 = vadd.f32 %v1205, %v1238
      %v1241 = vadd.f32 %v1206, %v1238
      %v1242 = vadd.f32 %v1207, %v1238
      %v1243 = vadd.f32 %v1208, %v1238
      %v1244 = vadd.f32 %v1209, %v1238
      %v1245 = vadd.f32 %v1210, %v1238
      %v1246 = vadd.f32 %v1211, %v1238
      %v1247 = vadd.f32 %v1212, %v1238
      %v1248 = vadd.f32 %v1213, %v1238
      %v1249 = vadd.f32 %v1214, %v1238
      %v1250 = vadd.f32 %v1215, %v1238
      %v1251 = vadd.f32 %v1216, %v1238
      %v1252 = vadd.f32 %v1217, %v1238
      %v1253 = vadd.f32 %v1218, %v1238
      %v1254 = vadd.f32 %v1219, %v1238
      %v1255 = vadd.f32 %v1220, %v1238
      %v1256 = vadd.f32 %v1221, %v1238
      %v1257 = vadd.f32 %v1222, %v1238
      %v1258 = vadd.f32 %v1223, %v1238
      %v1259 = vadd.f32 %v1224, %v1238
      %v1260 = vadd.f32 %v1225, %v1238
      %v1261 = vadd.f32 %v1226, %v1238
      %v1262 = vadd.f32 %v1227, %v1238
      %v1263 = vadd.f32 %v1228, %v1238
      %v1264 = vadd.f32 %v1229, %v1238
      %v1265 = vadd.f32 %v1230, %v1238
      %v1266 = vadd.f32 %v1231, %v1238
      %v1267 = vadd.f32 %v1232, %v1238
      %v1268 = vadd.f32 %v1233, %v1238
      %v1269 = vadd.f32 %v1234, %v1238
      %v1270 = vadd.f32 %v1235, %v1238
      %v1271 = vadd.f32 %v1236, %v1238
      %1272 = vst.msk [vmem:[%s170] sm:$0xff] %vm253, %v1240
      %1273 = vst.msk [vmem:[%s170 + $0x8] sm:$0xff] %vm253, %v1241
      %1274 = vst.msk [vmem:[%s170 + $0x10] sm:$0xff] %vm253, %v1242
      %1275 = vst.msk [vmem:[%s170 + $0x18] sm:$0xff] %vm253, %v1243
      %1276 = vst.msk [vmem:[%s170 + $0x20] sm:$0xff] %vm253, %v1244
      %1277 = vst.msk [vmem:[%s170 + $0x28] sm:$0xff] %vm253, %v1245
      %1278 = vst.msk [vmem:[%s170 + $0x30] sm:$0xff] %vm253, %v1246
      %1279 = vst.msk [vmem:[%s170 + $0x38] sm:$0xff] %vm253, %v1247
      %1280 = vst.msk [vmem:[%s170 + $0x40] sm:$0xff] %vm253, %v1248
      %1281 = vst.msk [vmem:[%s170 + $0x48] sm:$0xff] %vm253, %v1249
      %1282 = vst.msk [vmem:[%s170 + $0x50] sm:$0xff] %vm253, %v1250
      %1283 = vst.msk [vmem:[%s170 + $0x58] sm:$0xff] %vm253, %v1251
      %1284 = vst.msk [vmem:[%s170 + $0x60] sm:$0xff] %vm253, %v1252
      %1285 = vst.msk [vmem:[%s170 + $0x68] sm:$0xff] %vm253, %v1253
      %1286 = vst.msk [vmem:[%s170 + $0x70] sm:$0xff] %vm253, %v1254
      %1287 = vst.msk [vmem:[%s170 + $0x78] sm:$0xff] %vm253, %v1255
      %1288 = vst.msk [vmem:[%s170 + $0x80] sm:$0xff] %vm253, %v1256
      %1289 = vst.msk [vmem:[%s170 + $0x88] sm:$0xff] %vm253, %v1257
      %1290 = vst.msk [vmem:[%s170 + $0x90] sm:$0xff] %vm253, %v1258
      %1291 = vst.msk [vmem:[%s170 + $0x98] sm:$0xff] %vm253, %v1259
      %1292 = vst.msk [vmem:[%s170 + $0xa0] sm:$0xff] %vm253, %v1260
      %1293 = vst.msk [vmem:[%s170 + $0xa8] sm:$0xff] %vm253, %v1261
      %1294 = vst.msk [vmem:[%s170 + $0xb0] sm:$0xff] %vm253, %v1262
      %1295 = vst.msk [vmem:[%s170 + $0xb8] sm:$0xff] %vm253, %v1263
      %1296 = vst.msk [vmem:[%s170 + $0xc0] sm:$0xff] %vm253, %v1264
      %1297 = vst.msk [vmem:[%s170 + $0xc8] sm:$0xff] %vm253, %v1265
      %1298 = vst.msk [vmem:[%s170 + $0xd0] sm:$0xff] %vm253, %v1266
      %1299 = vst.msk [vmem:[%s170 + $0xd8] sm:$0xff] %vm253, %v1267
      %1300 = vst.msk [vmem:[%s170 + $0xe0] sm:$0xff] %vm253, %v1268
      %1301 = vst.msk [vmem:[%s170 + $0xe8] sm:$0xff] %vm253, %v1269
      %1302 = vst.msk [vmem:[%s170 + $0xf0] sm:$0xff] %vm253, %v1270
      %1303 = vst.msk [vmem:[%s170 + $0xf8] sm:$0xff] %vm253, %v1271
      %v1304 = vld [vmem:[%s165 + $0x1] sm:$0xff]
      %v1305 = vld [vmem:[%s165 + $0x9] sm:$0xff]
      %v1306 = vld [vmem:[%s165 + $0x19] sm:$0xff]
      %v1307 = vld [vmem:[%s165 + $0x21] sm:$0xff]
      %v1308 = vld [vmem:[%s165 + $0x31] sm:$0xff]
      %v1309 = vld [vmem:[%s165 + $0x39] sm:$0xff]
      %v1310 = vld [vmem:[%s165 + $0x49] sm:$0xff]
      %v1311 = vld [vmem:[%s165 + $0x51] sm:$0xff]
      %v1312 = vld [vmem:[%s165 + $0x61] sm:$0xff]
      %v1313 = vld [vmem:[%s165 + $0x69] sm:$0xff]
      %v1314 = vld [vmem:[%s165 + $0x79] sm:$0xff]
      %v1315 = vld [vmem:[%s165 + $0x81] sm:$0xff]
      %v1316 = vld [vmem:[%s165 + $0x91] sm:$0xff]
      %v1317 = vld [vmem:[%s165 + $0x99] sm:$0xff]
      %v1318 = vld [vmem:[%s165 + $0xa9] sm:$0xff]
      %v1319 = vld [vmem:[%s165 + $0xb1] sm:$0xff]
      %v1320 = vld [vmem:[%s165 + $0xc1] sm:$0xff]
      %v1321 = vld [vmem:[%s165 + $0xc9] sm:$0xff]
      %v1322 = vld [vmem:[%s165 + $0xd9] sm:$0xff]
      %v1323 = vld [vmem:[%s165 + $0xe1] sm:$0xff]
      %v1324 = vld [vmem:[%s165 + $0xf1] sm:$0xff]
      %v1325 = vld [vmem:[%s165 + $0xf9] sm:$0xff]
      %v1326 = vld [vmem:[%s165 + $0x109] sm:$0xff]
      %v1327 = vld [vmem:[%s165 + $0x111] sm:$0xff]
      %v1328 = vld [vmem:[%s165 + $0x121] sm:$0xff]
      %v1329 = vld [vmem:[%s165 + $0x129] sm:$0xff]
      %v1330 = vld [vmem:[%s165 + $0x139] sm:$0xff]
      %v1331 = vld [vmem:[%s165 + $0x141] sm:$0xff]
      %v1332 = vld [vmem:[%s165 + $0x151] sm:$0xff]
      %v1333 = vld [vmem:[%s165 + $0x159] sm:$0xff]
      %v1334 = vld [vmem:[%s165 + $0x169] sm:$0xff]
      %v1335 = vld [vmem:[%s165 + $0x171] sm:$0xff]
      %s1336 = scalar_lea.vmem %s1, 256
      %v1337 = vld [vmem:[%s1336] sm:$0xff]
      %v1338 = vld [vmem:[%s1336 + $0x8] sm:$0xff]
      %v1339 = vld [vmem:[%s1336 + $0x10] sm:$0xff]
      %v1340 = vld [vmem:[%s1336 + $0x18] sm:$0xff]
      %v1341 = vld [vmem:[%s1336 + $0x20] sm:$0xff]
      %v1342 = vld [vmem:[%s1336 + $0x28] sm:$0xff]
      %v1343 = vld [vmem:[%s1336 + $0x30] sm:$0xff]
      %v1344 = vld [vmem:[%s1336 + $0x38] sm:$0xff]
      %v1345 = vld [vmem:[%s165 + $0x2] sm:$0xff]
      %v1346 = vld [vmem:[%s165 + $0xa] sm:$0xff]
      %v1347 = vld [vmem:[%s165 + $0x1a] sm:$0xff]
      %v1348 = vld [vmem:[%s165 + $0x22] sm:$0xff]
      %v1349 = vld [vmem:[%s165 + $0x32] sm:$0xff]
      %v1350 = vld [vmem:[%s165 + $0x3a] sm:$0xff]
      %v1351 = vld [vmem:[%s165 + $0x4a] sm:$0xff]
      %v1352 = vld [vmem:[%s165 + $0x52] sm:$0xff]
      %v1353 = vld [vmem:[%s165 + $0x62] sm:$0xff]
      %v1354 = vld [vmem:[%s165 + $0x6a] sm:$0xff]
      %v1355 = vld [vmem:[%s165 + $0x7a] sm:$0xff]
      %v1356 = vld [vmem:[%s165 + $0x82] sm:$0xff]
      %v1357 = vld [vmem:[%s165 + $0x92] sm:$0xff]
      %v1358 = vld [vmem:[%s165 + $0x9a] sm:$0xff]
      %v1359 = vld [vmem:[%s165 + $0xaa] sm:$0xff]
      %v1360 = vld [vmem:[%s165 + $0xb2] sm:$0xff]
      %v1361 = vld [vmem:[%s165 + $0xc2] sm:$0xff]
      %v1362 = vld [vmem:[%s165 + $0xca] sm:$0xff]
      %v1363 = vld [vmem:[%s165 + $0xda] sm:$0xff]
      %v1364 = vld [vmem:[%s165 + $0xe2] sm:$0xff]
      %v1365 = vld [vmem:[%s165 + $0xf2] sm:$0xff]
      %v1366 = vld [vmem:[%s165 + $0xfa] sm:$0xff]
      %v1367 = vld [vmem:[%s165 + $0x10a] sm:$0xff]
      %v1368 = vld [vmem:[%s165 + $0x112] sm:$0xff]
      %v1369 = vld [vmem:[%s165 + $0x122] sm:$0xff]
      %v1370 = vld [vmem:[%s165 + $0x12a] sm:$0xff]
      %v1371 = vld [vmem:[%s165 + $0x13a] sm:$0xff]
      %v1372 = vld [vmem:[%s165 + $0x142] sm:$0xff]
      %v1373 = vld [vmem:[%s165 + $0x152] sm:$0xff]
      %v1374 = vld [vmem:[%s165 + $0x15a] sm:$0xff]
      %v1375 = vld [vmem:[%s165 + $0x16a] sm:$0xff]
      %v1376 = vld [vmem:[%s165 + $0x172] sm:$0xff]
      %s1377 = scalar_lea.vmem %s1, 320
      %v1378 = vld [vmem:[%s1377] sm:$0xff]
      %v1379 = vld [vmem:[%s1377 + $0x8] sm:$0xff]
      %v1380 = vld [vmem:[%s1377 + $0x10] sm:$0xff]
      %v1381 = vld [vmem:[%s1377 + $0x18] sm:$0xff]
      %v1382 = vld [vmem:[%s1377 + $0x20] sm:$0xff]
      %v1383 = vld [vmem:[%s1377 + $0x28] sm:$0xff]
      %v1384 = vld [vmem:[%s1377 + $0x30] sm:$0xff]
      %v1385 = vld [vmem:[%s1377 + $0x38] sm:$0xff]
      %v1387 = vsel %vm253, %v1345, 0
      %v1390 = vsel %vm253, %v1346, 0
      %v1393 = vsel %vm253, %v1347, 0
      %v1396 = vsel %vm253, %v1348, 0
      %v1399 = vsel %vm253, %v1349, 0
      %v1402 = vsel %vm253, %v1350, 0
      %v1405 = vsel %vm253, %v1351, 0
      %v1408 = vsel %vm253, %v1352, 0
      %v1411 = vsel %vm253, %v1353, 0
      %v1414 = vsel %vm253, %v1354, 0
      %v1417 = vsel %vm253, %v1355, 0
      %v1420 = vsel %vm253, %v1356, 0
      %v1423 = vsel %vm253, %v1357, 0
      %v1426 = vsel %vm253, %v1358, 0
      %v1429 = vsel %vm253, %v1359, 0
      %v1432 = vsel %vm253, %v1360, 0
      %v1435 = vsel %vm253, %v1361, 0
      %v1438 = vsel %vm253, %v1362, 0
      %v1441 = vsel %vm253, %v1363, 0
      %v1444 = vsel %vm253, %v1364, 0
      %v1447 = vsel %vm253, %v1365, 0
      %v1450 = vsel %vm253, %v1366, 0
      %v1453 = vsel %vm253, %v1367, 0
      %v1456 = vsel %vm253, %v1368, 0
      %v1459 = vsel %vm253, %v1369, 0
      %v1462 = vsel %vm253, %v1370, 0
      %v1465 = vsel %vm253, %v1371, 0
      %v1468 = vsel %vm253, %v1372, 0
      %v1471 = vsel %vm253, %v1373, 0
      %v1474 = vsel %vm253, %v1374, 0
      %v1477 = vsel %vm253, %v1375, 0
      %v1480 = vsel %vm253, %v1376, 0
      %1482 = vmatpush.msra.mxu0 0.0
      %1483 = vmatpush.msra.mxu0 0.0
      %1484 = vmatpush.msra.mxu0 0.0
      %1485 = vmatpush.msra.mxu0 0.0
      %1486 = vmatpush.msra.mxu0 0.0
      %1487 = vmatpush.msra.mxu0 0.0
      %1488 = vmatpush.msra.mxu0 0.0
      %1489 = vmatpush.msra.mxu0 0.0
      %1490 = vmatpush.msra.mxu0 %v1385
      %1491 = vmatpush.msra.mxu0 %v1384
      %1492 = vmatpush.msra.mxu0 %v1383
      %1493 = vmatpush.msra.mxu0 %v1382
      %1494 = vmatpush.msra.mxu0 %v1381
      %1495 = vmatpush.msra.mxu0 %v1380
      %1496 = vmatpush.msra.mxu0 %v1379
      %1497 = vmatpush.msra.mxu0 %v1378
      %1498 = vmatmul.f32.gmra.mxu0 %v1387
      %v1499 = vpop.f32.mrf.mxu0
      %v1500 = vadd.f32 0.0, %v1499
      %1501 = vmatmul.f32.gmra.mxu0 %v1390
      %v1502 = vpop.f32.mrf.mxu0
      %v1503 = vadd.f32 0.0, %v1502
      %1504 = vmatmul.f32.gmra.mxu0 %v1393
      %v1505 = vpop.f32.mrf.mxu0
      %v1506 = vadd.f32 0.0, %v1505
      %1507 = vmatmul.f32.gmra.mxu0 %v1396
      %v1508 = vpop.f32.mrf.mxu0
      %v1509 = vadd.f32 0.0, %v1508
      %1510 = vmatmul.f32.gmra.mxu0 %v1399
      %v1511 = vpop.f32.mrf.mxu0
      %v1512 = vadd.f32 0.0, %v1511
      %1513 = vmatmul.f32.gmra.mxu0 %v1402
      %v1514 = vpop.f32.mrf.mxu0
      %v1515 = vadd.f32 0.0, %v1514
      %1516 = vmatmul.f32.gmra.mxu0 %v1405
      %v1517 = vpop.f32.mrf.mxu0
      %v1518 = vadd.f32 0.0, %v1517
      %1519 = vmatmul.f32.gmra.mxu0 %v1408
      %v1520 = vpop.f32.mrf.mxu0
      %v1521 = vadd.f32 0.0, %v1520
      %1522 = vmatmul.f32.gmra.mxu0 %v1411
      %v1523 = vpop.f32.mrf.mxu0
      %v1524 = vadd.f32 0.0, %v1523
      %1525 = vmatmul.f32.gmra.mxu0 %v1414
      %v1526 = vpop.f32.mrf.mxu0
      %v1527 = vadd.f32 0.0, %v1526
      %1528 = vmatmul.f32.gmra.mxu0 %v1417
      %v1529 = vpop.f32.mrf.mxu0
      %v1530 = vadd.f32 0.0, %v1529
      %1531 = vmatmul.f32.gmra.mxu0 %v1420
      %v1532 = vpop.f32.mrf.mxu0
      %v1533 = vadd.f32 0.0, %v1532
      %1534 = vmatmul.f32.gmra.mxu0 %v1423
      %v1535 = vpop.f32.mrf.mxu0
      %v1536 = vadd.f32 0.0, %v1535
      %1537 = vmatmul.f32.gmra.mxu0 %v1426
      %v1538 = vpop.f32.mrf.mxu0
      %v1539 = vadd.f32 0.0, %v1538
      %1540 = vmatmul.f32.gmra.mxu0 %v1429
      %v1541 = vpop.f32.mrf.mxu0
      %v1542 = vadd.f32 0.0, %v1541
      %1543 = vmatmul.f32.gmra.mxu0 %v1432
      %v1544 = vpop.f32.mrf.mxu0
      %v1545 = vadd.f32 0.0, %v1544
      %1546 = vmatmul.f32.gmra.mxu0 %v1435
      %v1547 = vpop.f32.mrf.mxu0
      %v1548 = vadd.f32 0.0, %v1547
      %1549 = vmatmul.f32.gmra.mxu0 %v1438
      %v1550 = vpop.f32.mrf.mxu0
      %v1551 = vadd.f32 0.0, %v1550
      %1552 = vmatmul.f32.gmra.mxu0 %v1441
      %v1553 = vpop.f32.mrf.mxu0
      %v1554 = vadd.f32 0.0, %v1553
      %1555 = vmatmul.f32.gmra.mxu0 %v1444
      %v1556 = vpop.f32.mrf.mxu0
      %v1557 = vadd.f32 0.0, %v1556
      %1558 = vmatmul.f32.gmra.mxu0 %v1447
      %v1559 = vpop.f32.mrf.mxu0
      %v1560 = vadd.f32 0.0, %v1559
      %1561 = vmatmul.f32.gmra.mxu0 %v1450
      %v1562 = vpop.f32.mrf.mxu0
      %v1563 = vadd.f32 0.0, %v1562
      %1564 = vmatmul.f32.gmra.mxu0 %v1453
      %v1565 = vpop.f32.mrf.mxu0
      %v1566 = vadd.f32 0.0, %v1565
      %1567 = vmatmul.f32.gmra.mxu0 %v1456
      %v1568 = vpop.f32.mrf.mxu0
      %v1569 = vadd.f32 0.0, %v1568
      %1570 = vmatmul.f32.gmra.mxu0 %v1459
      %v1571 = vpop.f32.mrf.mxu0
      %v1572 = vadd.f32 0.0, %v1571
      %1573 = vmatmul.f32.gmra.mxu0 %v1462
      %v1574 = vpop.f32.mrf.mxu0
      %v1575 = vadd.f32 0.0, %v1574
      %1576 = vmatmul.f32.gmra.mxu0 %v1465
      %v1577 = vpop.f32.mrf.mxu0
      %v1578 = vadd.f32 0.0, %v1577
      %1579 = vmatmul.f32.gmra.mxu0 %v1468
      %v1580 = vpop.f32.mrf.mxu0
      %v1581 = vadd.f32 0.0, %v1580
      %1582 = vmatmul.f32.gmra.mxu0 %v1471
      %v1583 = vpop.f32.mrf.mxu0
      %v1584 = vadd.f32 0.0, %v1583
      %1585 = vmatmul.f32.gmra.mxu0 %v1474
      %v1586 = vpop.f32.mrf.mxu0
      %v1587 = vadd.f32 0.0, %v1586
      %1588 = vmatmul.f32.gmra.mxu0 %v1477
      %v1589 = vpop.f32.mrf.mxu0
      %v1590 = vadd.f32 0.0, %v1589
      %1591 = vmatmul.f32.gmra.mxu0 %v1480
      %v1592 = vpop.f32.mrf.mxu0
      %v1593 = vadd.f32 0.0, %v1592
      %1594 = vdwg.mxu0
      %v1596 = vsel %vm253, %v1304, 0
      %v1599 = vsel %vm253, %v1305, 0
      %v1602 = vsel %vm253, %v1306, 0
      %v1605 = vsel %vm253, %v1307, 0
      %v1608 = vsel %vm253, %v1308, 0
      %v1611 = vsel %vm253, %v1309, 0
      %v1614 = vsel %vm253, %v1310, 0
      %v1617 = vsel %vm253, %v1311, 0
      %v1620 = vsel %vm253, %v1312, 0
      %v1623 = vsel %vm253, %v1313, 0
      %v1626 = vsel %vm253, %v1314, 0
      %v1629 = vsel %vm253, %v1315, 0
      %v1632 = vsel %vm253, %v1316, 0
      %v1635 = vsel %vm253, %v1317, 0
      %v1638 = vsel %vm253, %v1318, 0
      %v1641 = vsel %vm253, %v1319, 0
      %v1644 = vsel %vm253, %v1320, 0
      %v1647 = vsel %vm253, %v1321, 0
      %v1650 = vsel %vm253, %v1322, 0
      %v1653 = vsel %vm253, %v1323, 0
      %v1656 = vsel %vm253, %v1324, 0
      %v1659 = vsel %vm253, %v1325, 0
      %v1662 = vsel %vm253, %v1326, 0
      %v1665 = vsel %vm253, %v1327, 0
      %v1668 = vsel %vm253, %v1328, 0
      %v1671 = vsel %vm253, %v1329, 0
      %v1674 = vsel %vm253, %v1330, 0
      %v1677 = vsel %vm253, %v1331, 0
      %v1680 = vsel %vm253, %v1332, 0
      %v1683 = vsel %vm253, %v1333, 0
      %v1686 = vsel %vm253, %v1334, 0
      %v1689 = vsel %vm253, %v1335, 0
      %1691 = vmatpush.msra.mxu0 0.0
      %1692 = vmatpush.msra.mxu0 0.0
      %1693 = vmatpush.msra.mxu0 0.0
      %1694 = vmatpush.msra.mxu0 0.0
      %1695 = vmatpush.msra.mxu0 0.0
      %1696 = vmatpush.msra.mxu0 0.0
      %1697 = vmatpush.msra.mxu0 0.0
      %1698 = vmatpush.msra.mxu0 0.0
      %1699 = vmatpush.msra.mxu0 %v1344
      %1700 = vmatpush.msra.mxu0 %v1343
      %1701 = vmatpush.msra.mxu0 %v1342
      %1702 = vmatpush.msra.mxu0 %v1341
      %1703 = vmatpush.msra.mxu0 %v1340
      %1704 = vmatpush.msra.mxu0 %v1339
      %1705 = vmatpush.msra.mxu0 %v1338
      %1706 = vmatpush.msra.mxu0 %v1337
      %1707 = vmatmul.f32.gmra.mxu0 %v1596
      %v1708 = vpop.f32.mrf.mxu0
      %v1709 = vadd.f32 %v1500, %v1708
      %1710 = vmatmul.f32.gmra.mxu0 %v1599
      %v1711 = vpop.f32.mrf.mxu0
      %v1712 = vadd.f32 %v1503, %v1711
      %1713 = vmatmul.f32.gmra.mxu0 %v1602
      %v1714 = vpop.f32.mrf.mxu0
      %v1715 = vadd.f32 %v1506, %v1714
      %1716 = vmatmul.f32.gmra.mxu0 %v1605
      %v1717 = vpop.f32.mrf.mxu0
      %v1718 = vadd.f32 %v1509, %v1717
      %1719 = vmatmul.f32.gmra.mxu0 %v1608
      %v1720 = vpop.f32.mrf.mxu0
      %v1721 = vadd.f32 %v1512, %v1720
      %1722 = vmatmul.f32.gmra.mxu0 %v1611
      %v1723 = vpop.f32.mrf.mxu0
      %v1724 = vadd.f32 %v1515, %v1723
      %1725 = vmatmul.f32.gmra.mxu0 %v1614
      %v1726 = vpop.f32.mrf.mxu0
      %v1727 = vadd.f32 %v1518, %v1726
      %1728 = vmatmul.f32.gmra.mxu0 %v1617
      %v1729 = vpop.f32.mrf.mxu0
      %v1730 = vadd.f32 %v1521, %v1729
      %1731 = vmatmul.f32.gmra.mxu0 %v1620
      %v1732 = vpop.f32.mrf.mxu0
      %v1733 = vadd.f32 %v1524, %v1732
      %1734 = vmatmul.f32.gmra.mxu0 %v1623
      %v1735 = vpop.f32.mrf.mxu0
      %v1736 = vadd.f32 %v1527, %v1735
      %1737 = vmatmul.f32.gmra.mxu0 %v1626
      %v1738 = vpop.f32.mrf.mxu0
      %v1739 = vadd.f32 %v1530, %v1738
      %1740 = vmatmul.f32.gmra.mxu0 %v1629
      %v1741 = vpop.f32.mrf.mxu0
      %v1742 = vadd.f32 %v1533, %v1741
      %1743 = vmatmul.f32.gmra.mxu0 %v1632
      %v1744 = vpop.f32.mrf.mxu0
      %v1745 = vadd.f32 %v1536, %v1744
      %1746 = vmatmul.f32.gmra.mxu0 %v1635
      %v1747 = vpop.f32.mrf.mxu0
      %v1748 = vadd.f32 %v1539, %v1747
      %1749 = vmatmul.f32.gmra.mxu0 %v1638
      %v1750 = vpop.f32.mrf.mxu0
      %v1751 = vadd.f32 %v1542, %v1750
      %1752 = vmatmul.f32.gmra.mxu0 %v1641
      %v1753 = vpop.f32.mrf.mxu0
      %v1754 = vadd.f32 %v1545, %v1753
      %1755 = vmatmul.f32.gmra.mxu0 %v1644
      %v1756 = vpop.f32.mrf.mxu0
      %v1757 = vadd.f32 %v1548, %v1756
      %1758 = vmatmul.f32.gmra.mxu0 %v1647
      %v1759 = vpop.f32.mrf.mxu0
      %v1760 = vadd.f32 %v1551, %v1759
      %1761 = vmatmul.f32.gmra.mxu0 %v1650
      %v1762 = vpop.f32.mrf.mxu0
      %v1763 = vadd.f32 %v1554, %v1762
      %1764 = vmatmul.f32.gmra.mxu0 %v1653
      %v1765 = vpop.f32.mrf.mxu0
      %v1766 = vadd.f32 %v1557, %v1765
      %1767 = vmatmul.f32.gmra.mxu0 %v1656
      %v1768 = vpop.f32.mrf.mxu0
      %v1769 = vadd.f32 %v1560, %v1768
      %1770 = vmatmul.f32.gmra.mxu0 %v1659
      %v1771 = vpop.f32.mrf.mxu0
      %v1772 = vadd.f32 %v1563, %v1771
      %1773 = vmatmul.f32.gmra.mxu0 %v1662
      %v1774 = vpop.f32.mrf.mxu0
      %v1775 = vadd.f32 %v1566, %v1774
      %1776 = vmatmul.f32.gmra.mxu0 %v1665
      %v1777 = vpop.f32.mrf.mxu0
      %v1778 = vadd.f32 %v1569, %v1777
      %1779 = vmatmul.f32.gmra.mxu0 %v1668
      %v1780 = vpop.f32.mrf.mxu0
      %v1781 = vadd.f32 %v1572, %v1780
      %1782 = vmatmul.f32.gmra.mxu0 %v1671
      %v1783 = vpop.f32.mrf.mxu0
      %v1784 = vadd.f32 %v1575, %v1783
      %1785 = vmatmul.f32.gmra.mxu0 %v1674
      %v1786 = vpop.f32.mrf.mxu0
      %v1787 = vadd.f32 %v1578, %v1786
      %1788 = vmatmul.f32.gmra.mxu0 %v1677
      %v1789 = vpop.f32.mrf.mxu0
      %v1790 = vadd.f32 %v1581, %v1789
      %1791 = vmatmul.f32.gmra.mxu0 %v1680
      %v1792 = vpop.f32.mrf.mxu0
      %v1793 = vadd.f32 %v1584, %v1792
      %1794 = vmatmul.f32.gmra.mxu0 %v1683
      %v1795 = vpop.f32.mrf.mxu0
      %v1796 = vadd.f32 %v1587, %v1795
      %1797 = vmatmul.f32.gmra.mxu0 %v1686
      %v1798 = vpop.f32.mrf.mxu0
      %v1799 = vadd.f32 %v1590, %v1798
      %1800 = vmatmul.f32.gmra.mxu0 %v1689
      %v1801 = vpop.f32.mrf.mxu0
      %v1802 = vadd.f32 %v1593, %v1801
      %1803 = vdwg.mxu0
      %v1804 = vld [vmem:[%s672 + $0x1] sm:$0xff]
      %v1805 = vld [vmem:[%s672 + $0x9] sm:$0xff]
      %v1806 = vld [vmem:[%s672 + $0x19] sm:$0xff]
      %v1807 = vld [vmem:[%s672 + $0x21] sm:$0xff]
      %v1808 = vld [vmem:[%s672 + $0x31] sm:$0xff]
      %v1809 = vld [vmem:[%s672 + $0x39] sm:$0xff]
      %v1810 = vld [vmem:[%s672 + $0x49] sm:$0xff]
      %v1811 = vld [vmem:[%s672 + $0x51] sm:$0xff]
      %v1812 = vld [vmem:[%s672 + $0x61] sm:$0xff]
      %v1813 = vld [vmem:[%s672 + $0x69] sm:$0xff]
      %v1814 = vld [vmem:[%s672 + $0x79] sm:$0xff]
      %v1815 = vld [vmem:[%s672 + $0x81] sm:$0xff]
      %v1816 = vld [vmem:[%s672 + $0x91] sm:$0xff]
      %v1817 = vld [vmem:[%s672 + $0x99] sm:$0xff]
      %v1818 = vld [vmem:[%s672 + $0xa9] sm:$0xff]
      %v1819 = vld [vmem:[%s672 + $0xb1] sm:$0xff]
      %v1820 = vld [vmem:[%s672 + $0xc1] sm:$0xff]
      %v1821 = vld [vmem:[%s672 + $0xc9] sm:$0xff]
      %v1822 = vld [vmem:[%s672 + $0xd9] sm:$0xff]
      %v1823 = vld [vmem:[%s672 + $0xe1] sm:$0xff]
      %v1824 = vld [vmem:[%s672 + $0xf1] sm:$0xff]
      %v1825 = vld [vmem:[%s672 + $0xf9] sm:$0xff]
      %v1826 = vld [vmem:[%s672 + $0x109] sm:$0xff]
      %v1827 = vld [vmem:[%s672 + $0x111] sm:$0xff]
      %v1828 = vld [vmem:[%s672 + $0x121] sm:$0xff]
      %v1829 = vld [vmem:[%s672 + $0x129] sm:$0xff]
      %v1830 = vld [vmem:[%s672 + $0x139] sm:$0xff]
      %v1831 = vld [vmem:[%s672 + $0x141] sm:$0xff]
      %v1832 = vld [vmem:[%s672 + $0x151] sm:$0xff]
      %v1833 = vld [vmem:[%s672 + $0x159] sm:$0xff]
      %v1834 = vld [vmem:[%s672 + $0x169] sm:$0xff]
      %v1835 = vld [vmem:[%s672 + $0x171] sm:$0xff]
      %s1836 = scalar_lea.vmem %s1, 384
      %v1837 = vld [vmem:[%s1836] sm:$0xff]
      %v1838 = vld [vmem:[%s1836 + $0x8] sm:$0xff]
      %v1839 = vld [vmem:[%s1836 + $0x10] sm:$0xff]
      %v1840 = vld [vmem:[%s1836 + $0x18] sm:$0xff]
      %v1841 = vld [vmem:[%s1836 + $0x20] sm:$0xff]
      %v1842 = vld [vmem:[%s1836 + $0x28] sm:$0xff]
      %v1843 = vld [vmem:[%s1836 + $0x30] sm:$0xff]
      %v1844 = vld [vmem:[%s1836 + $0x38] sm:$0xff]
      %v1846 = vsel %vm253, %v1804, 0
      %v1849 = vsel %vm253, %v1805, 0
      %v1852 = vsel %vm253, %v1806, 0
      %v1855 = vsel %vm253, %v1807, 0
      %v1858 = vsel %vm253, %v1808, 0
      %v1861 = vsel %vm253, %v1809, 0
      %v1864 = vsel %vm253, %v1810, 0
      %v1867 = vsel %vm253, %v1811, 0
      %v1870 = vsel %vm253, %v1812, 0
      %v1873 = vsel %vm253, %v1813, 0
      %v1876 = vsel %vm253, %v1814, 0
      %v1879 = vsel %vm253, %v1815, 0
      %v1882 = vsel %vm253, %v1816, 0
      %v1885 = vsel %vm253, %v1817, 0
      %v1888 = vsel %vm253, %v1818, 0
      %v1891 = vsel %vm253, %v1819, 0
      %v1894 = vsel %vm253, %v1820, 0
      %v1897 = vsel %vm253, %v1821, 0
      %v1900 = vsel %vm253, %v1822, 0
      %v1903 = vsel %vm253, %v1823, 0
      %v1906 = vsel %vm253, %v1824, 0
      %v1909 = vsel %vm253, %v1825, 0
      %v1912 = vsel %vm253, %v1826, 0
      %v1915 = vsel %vm253, %v1827, 0
      %v1918 = vsel %vm253, %v1828, 0
      %v1921 = vsel %vm253, %v1829, 0
      %v1924 = vsel %vm253, %v1830, 0
      %v1927 = vsel %vm253, %v1831, 0
      %v1930 = vsel %vm253, %v1832, 0
      %v1933 = vsel %vm253, %v1833, 0
      %v1936 = vsel %vm253, %v1834, 0
      %v1939 = vsel %vm253, %v1835, 0
      %1941 = vmatpush.msra.mxu0 0.0
      %1942 = vmatpush.msra.mxu0 0.0
      %1943 = vmatpush.msra.mxu0 0.0
      %1944 = vmatpush.msra.mxu0 0.0
      %1945 = vmatpush.msra.mxu0 0.0
      %1946 = vmatpush.msra.mxu0 0.0
      %1947 = vmatpush.msra.mxu0 0.0
      %1948 = vmatpush.msra.mxu0 0.0
      %1949 = vmatpush.msra.mxu0 %v1844
      %1950 = vmatpush.msra.mxu0 %v1843
      %1951 = vmatpush.msra.mxu0 %v1842
      %1952 = vmatpush.msra.mxu0 %v1841
      %1953 = vmatpush.msra.mxu0 %v1840
      %1954 = vmatpush.msra.mxu0 %v1839
      %1955 = vmatpush.msra.mxu0 %v1838
      %1956 = vmatpush.msra.mxu0 %v1837
      %1957 = vmatmul.f32.gmra.mxu0 %v1846
      %v1958 = vpop.f32.mrf.mxu0
      %v1959 = vadd.f32 0.0, %v1958
      %1960 = vmatmul.f32.gmra.mxu0 %v1849
      %v1961 = vpop.f32.mrf.mxu0
      %v1962 = vadd.f32 0.0, %v1961
      %1963 = vmatmul.f32.gmra.mxu0 %v1852
      %v1964 = vpop.f32.mrf.mxu0
      %v1965 = vadd.f32 0.0, %v1964
      %1966 = vmatmul.f32.gmra.mxu0 %v1855
      %v1967 = vpop.f32.mrf.mxu0
      %v1968 = vadd.f32 0.0, %v1967
      %1969 = vmatmul.f32.gmra.mxu0 %v1858
      %v1970 = vpop.f32.mrf.mxu0
      %v1971 = vadd.f32 0.0, %v1970
      %1972 = vmatmul.f32.gmra.mxu0 %v1861
      %v1973 = vpop.f32.mrf.mxu0
      %v1974 = vadd.f32 0.0, %v1973
      %1975 = vmatmul.f32.gmra.mxu0 %v1864
      %v1976 = vpop.f32.mrf.mxu0
      %v1977 = vadd.f32 0.0, %v1976
      %1978 = vmatmul.f32.gmra.mxu0 %v1867
      %v1979 = vpop.f32.mrf.mxu0
      %v1980 = vadd.f32 0.0, %v1979
      %1981 = vmatmul.f32.gmra.mxu0 %v1870
      %v1982 = vpop.f32.mrf.mxu0
      %v1983 = vadd.f32 0.0, %v1982
      %1984 = vmatmul.f32.gmra.mxu0 %v1873
      %v1985 = vpop.f32.mrf.mxu0
      %v1986 = vadd.f32 0.0, %v1985
      %1987 = vmatmul.f32.gmra.mxu0 %v1876
      %v1988 = vpop.f32.mrf.mxu0
      %v1989 = vadd.f32 0.0, %v1988
      %1990 = vmatmul.f32.gmra.mxu0 %v1879
      %v1991 = vpop.f32.mrf.mxu0
      %v1992 = vadd.f32 0.0, %v1991
      %1993 = vmatmul.f32.gmra.mxu0 %v1882
      %v1994 = vpop.f32.mrf.mxu0
      %v1995 = vadd.f32 0.0, %v1994
      %1996 = vmatmul.f32.gmra.mxu0 %v1885
      %v1997 = vpop.f32.mrf.mxu0
      %v1998 = vadd.f32 0.0, %v1997
      %1999 = vmatmul.f32.gmra.mxu0 %v1888
      %v2000 = vpop.f32.mrf.mxu0
      %v2001 = vadd.f32 0.0, %v2000
      %2002 = vmatmul.f32.gmra.mxu0 %v1891
      %v2003 = vpop.f32.mrf.mxu0
      %v2004 = vadd.f32 0.0, %v2003
      %2005 = vmatmul.f32.gmra.mxu0 %v1894
      %v2006 = vpop.f32.mrf.mxu0
      %v2007 = vadd.f32 0.0, %v2006
      %2008 = vmatmul.f32.gmra.mxu0 %v1897
      %v2009 = vpop.f32.mrf.mxu0
      %v2010 = vadd.f32 0.0, %v2009
      %2011 = vmatmul.f32.gmra.mxu0 %v1900
      %v2012 = vpop.f32.mrf.mxu0
      %v2013 = vadd.f32 0.0, %v2012
      %2014 = vmatmul.f32.gmra.mxu0 %v1903
      %v2015 = vpop.f32.mrf.mxu0
      %v2016 = vadd.f32 0.0, %v2015
      %2017 = vmatmul.f32.gmra.mxu0 %v1906
      %v2018 = vpop.f32.mrf.mxu0
      %v2019 = vadd.f32 0.0, %v2018
      %2020 = vmatmul.f32.gmra.mxu0 %v1909
      %v2021 = vpop.f32.mrf.mxu0
      %v2022 = vadd.f32 0.0, %v2021
      %2023 = vmatmul.f32.gmra.mxu0 %v1912
      %v2024 = vpop.f32.mrf.mxu0
      %v2025 = vadd.f32 0.0, %v2024
      %2026 = vmatmul.f32.gmra.mxu0 %v1915
      %v2027 = vpop.f32.mrf.mxu0
      %v2028 = vadd.f32 0.0, %v2027
      %2029 = vmatmul.f32.gmra.mxu0 %v1918
      %v2030 = vpop.f32.mrf.mxu0
      %v2031 = vadd.f32 0.0, %v2030
      %2032 = vmatmul.f32.gmra.mxu0 %v1921
      %v2033 = vpop.f32.mrf.mxu0
      %v2034 = vadd.f32 0.0, %v2033
      %2035 = vmatmul.f32.gmra.mxu0 %v1924
      %v2036 = vpop.f32.mrf.mxu0
      %v2037 = vadd.f32 0.0, %v2036
      %2038 = vmatmul.f32.gmra.mxu0 %v1927
      %v2039 = vpop.f32.mrf.mxu0
      %v2040 = vadd.f32 0.0, %v2039
      %2041 = vmatmul.f32.gmra.mxu0 %v1930
      %v2042 = vpop.f32.mrf.mxu0
      %v2043 = vadd.f32 0.0, %v2042
      %2044 = vmatmul.f32.gmra.mxu0 %v1933
      %v2045 = vpop.f32.mrf.mxu0
      %v2046 = vadd.f32 0.0, %v2045
      %2047 = vmatmul.f32.gmra.mxu0 %v1936
      %v2048 = vpop.f32.mrf.mxu0
      %v2049 = vadd.f32 0.0, %v2048
      %2050 = vmatmul.f32.gmra.mxu0 %v1939
      %v2051 = vpop.f32.mrf.mxu0
      %v2052 = vadd.f32 0.0, %v2051
      %2053 = vdwg.mxu0
      %v2054 = vadd.f32 %v1709, %v1959
      %v2055 = vadd.f32 %v1712, %v1962
      %v2056 = vadd.f32 %v1715, %v1965
      %v2057 = vadd.f32 %v1718, %v1968
      %v2058 = vadd.f32 %v1721, %v1971
      %v2059 = vadd.f32 %v1724, %v1974
      %v2060 = vadd.f32 %v1727, %v1977
      %v2061 = vadd.f32 %v1730, %v1980
      %v2062 = vadd.f32 %v1733, %v1983
      %v2063 = vadd.f32 %v1736, %v1986
      %v2064 = vadd.f32 %v1739, %v1989
      %v2065 = vadd.f32 %v1742, %v1992
      %v2066 = vadd.f32 %v1745, %v1995
      %v2067 = vadd.f32 %v1748, %v1998
      %v2068 = vadd.f32 %v1751, %v2001
      %v2069 = vadd.f32 %v1754, %v2004
      %v2070 = vadd.f32 %v1757, %v2007
      %v2071 = vadd.f32 %v1760, %v2010
      %v2072 = vadd.f32 %v1763, %v2013
      %v2073 = vadd.f32 %v1766, %v2016
      %v2074 = vadd.f32 %v1769, %v2019
      %v2075 = vadd.f32 %v1772, %v2022
      %v2076 = vadd.f32 %v1775, %v2025
      %v2077 = vadd.f32 %v1778, %v2028
      %v2078 = vadd.f32 %v1781, %v2031
      %v2079 = vadd.f32 %v1784, %v2034
      %v2080 = vadd.f32 %v1787, %v2037
      %v2081 = vadd.f32 %v1790, %v2040
      %v2082 = vadd.f32 %v1793, %v2043
      %v2083 = vadd.f32 %v1796, %v2046
      %v2084 = vadd.f32 %v1799, %v2049
      %v2085 = vadd.f32 %v1802, %v2052
      %v2086 = vld [vmem:[%s672 + $0x2] sm:$0xff]
      %v2087 = vld [vmem:[%s672 + $0xa] sm:$0xff]
      %v2088 = vld [vmem:[%s672 + $0x1a] sm:$0xff]
      %v2089 = vld [vmem:[%s672 + $0x22] sm:$0xff]
      %v2090 = vld [vmem:[%s672 + $0x32] sm:$0xff]
      %v2091 = vld [vmem:[%s672 + $0x3a] sm:$0xff]
      %v2092 = vld [vmem:[%s672 + $0x4a] sm:$0xff]
      %v2093 = vld [vmem:[%s672 + $0x52] sm:$0xff]
      %v2094 = vld [vmem:[%s672 + $0x62] sm:$0xff]
      %v2095 = vld [vmem:[%s672 + $0x6a] sm:$0xff]
      %v2096 = vld [vmem:[%s672 + $0x7a] sm:$0xff]
      %v2097 = vld [vmem:[%s672 + $0x82] sm:$0xff]
      %v2098 = vld [vmem:[%s672 + $0x92] sm:$0xff]
      %v2099 = vld [vmem:[%s672 + $0x9a] sm:$0xff]
      %v2100 = vld [vmem:[%s672 + $0xaa] sm:$0xff]
      %v2101 = vld [vmem:[%s672 + $0xb2] sm:$0xff]
      %v2102 = vld [vmem:[%s672 + $0xc2] sm:$0xff]
      %v2103 = vld [vmem:[%s672 + $0xca] sm:$0xff]
      %v2104 = vld [vmem:[%s672 + $0xda] sm:$0xff]
      %v2105 = vld [vmem:[%s672 + $0xe2] sm:$0xff]
      %v2106 = vld [vmem:[%s672 + $0xf2] sm:$0xff]
      %v2107 = vld [vmem:[%s672 + $0xfa] sm:$0xff]
      %v2108 = vld [vmem:[%s672 + $0x10a] sm:$0xff]
      %v2109 = vld [vmem:[%s672 + $0x112] sm:$0xff]
      %v2110 = vld [vmem:[%s672 + $0x122] sm:$0xff]
      %v2111 = vld [vmem:[%s672 + $0x12a] sm:$0xff]
      %v2112 = vld [vmem:[%s672 + $0x13a] sm:$0xff]
      %v2113 = vld [vmem:[%s672 + $0x142] sm:$0xff]
      %v2114 = vld [vmem:[%s672 + $0x152] sm:$0xff]
      %v2115 = vld [vmem:[%s672 + $0x15a] sm:$0xff]
      %v2116 = vld [vmem:[%s672 + $0x16a] sm:$0xff]
      %v2117 = vld [vmem:[%s672 + $0x172] sm:$0xff]
      %s2118 = scalar_lea.vmem %s1, 448
      %v2119 = vld [vmem:[%s2118] sm:$0xff]
      %v2120 = vld [vmem:[%s2118 + $0x8] sm:$0xff]
      %v2121 = vld [vmem:[%s2118 + $0x10] sm:$0xff]
      %v2122 = vld [vmem:[%s2118 + $0x18] sm:$0xff]
      %v2123 = vld [vmem:[%s2118 + $0x20] sm:$0xff]
      %v2124 = vld [vmem:[%s2118 + $0x28] sm:$0xff]
      %v2125 = vld [vmem:[%s2118 + $0x30] sm:$0xff]
      %v2126 = vld [vmem:[%s2118 + $0x38] sm:$0xff]
      %v2128 = vsel %vm253, %v2086, 0
      %v2131 = vsel %vm253, %v2087, 0
      %v2134 = vsel %vm253, %v2088, 0
      %v2137 = vsel %vm253, %v2089, 0
      %v2140 = vsel %vm253, %v2090, 0
      %v2143 = vsel %vm253, %v2091, 0
      %v2146 = vsel %vm253, %v2092, 0
      %v2149 = vsel %vm253, %v2093, 0
      %v2152 = vsel %vm253, %v2094, 0
      %v2155 = vsel %vm253, %v2095, 0
      %v2158 = vsel %vm253, %v2096, 0
      %v2161 = vsel %vm253, %v2097, 0
      %v2164 = vsel %vm253, %v2098, 0
      %v2167 = vsel %vm253, %v2099, 0
      %v2170 = vsel %vm253, %v2100, 0
      %v2173 = vsel %vm253, %v2101, 0
      %v2176 = vsel %vm253, %v2102, 0
      %v2179 = vsel %vm253, %v2103, 0
      %v2182 = vsel %vm253, %v2104, 0
      %v2185 = vsel %vm253, %v2105, 0
      %v2188 = vsel %vm253, %v2106, 0
      %v2191 = vsel %vm253, %v2107, 0
      %v2194 = vsel %vm253, %v2108, 0
      %v2197 = vsel %vm253, %v2109, 0
      %v2200 = vsel %vm253, %v2110, 0
      %v2203 = vsel %vm253, %v2111, 0
      %v2206 = vsel %vm253, %v2112, 0
      %v2209 = vsel %vm253, %v2113, 0
      %v2212 = vsel %vm253, %v2114, 0
      %v2215 = vsel %vm253, %v2115, 0
      %v2218 = vsel %vm253, %v2116, 0
      %v2221 = vsel %vm253, %v2117, 0
      %2223 = vmatpush.msra.mxu0 0.0
      %2224 = vmatpush.msra.mxu0 0.0
      %2225 = vmatpush.msra.mxu0 0.0
      %2226 = vmatpush.msra.mxu0 0.0
      %2227 = vmatpush.msra.mxu0 0.0
      %2228 = vmatpush.msra.mxu0 0.0
      %2229 = vmatpush.msra.mxu0 0.0
      %2230 = vmatpush.msra.mxu0 0.0
      %2231 = vmatpush.msra.mxu0 %v2126
      %2232 = vmatpush.msra.mxu0 %v2125
      %2233 = vmatpush.msra.mxu0 %v2124
      %2234 = vmatpush.msra.mxu0 %v2123
      %2235 = vmatpush.msra.mxu0 %v2122
      %2236 = vmatpush.msra.mxu0 %v2121
      %2237 = vmatpush.msra.mxu0 %v2120
      %2238 = vmatpush.msra.mxu0 %v2119
      %2239 = vmatmul.f32.gmra.mxu0 %v2128
      %v2240 = vpop.f32.mrf.mxu0
      %v2241 = vadd.f32 0.0, %v2240
      %2242 = vmatmul.f32.gmra.mxu0 %v2131
      %v2243 = vpop.f32.mrf.mxu0
      %v2244 = vadd.f32 0.0, %v2243
      %2245 = vmatmul.f32.gmra.mxu0 %v2134
      %v2246 = vpop.f32.mrf.mxu0
      %v2247 = vadd.f32 0.0, %v2246
      %2248 = vmatmul.f32.gmra.mxu0 %v2137
      %v2249 = vpop.f32.mrf.mxu0
      %v2250 = vadd.f32 0.0, %v2249
      %2251 = vmatmul.f32.gmra.mxu0 %v2140
      %v2252 = vpop.f32.mrf.mxu0
      %v2253 = vadd.f32 0.0, %v2252
      %2254 = vmatmul.f32.gmra.mxu0 %v2143
      %v2255 = vpop.f32.mrf.mxu0
      %v2256 = vadd.f32 0.0, %v2255
      %2257 = vmatmul.f32.gmra.mxu0 %v2146
      %v2258 = vpop.f32.mrf.mxu0
      %v2259 = vadd.f32 0.0, %v2258
      %2260 = vmatmul.f32.gmra.mxu0 %v2149
      %v2261 = vpop.f32.mrf.mxu0
      %v2262 = vadd.f32 0.0, %v2261
      %2263 = vmatmul.f32.gmra.mxu0 %v2152
      %v2264 = vpop.f32.mrf.mxu0
      %v2265 = vadd.f32 0.0, %v2264
      %2266 = vmatmul.f32.gmra.mxu0 %v2155
      %v2267 = vpop.f32.mrf.mxu0
      %v2268 = vadd.f32 0.0, %v2267
      %2269 = vmatmul.f32.gmra.mxu0 %v2158
      %v2270 = vpop.f32.mrf.mxu0
      %v2271 = vadd.f32 0.0, %v2270
      %2272 = vmatmul.f32.gmra.mxu0 %v2161
      %v2273 = vpop.f32.mrf.mxu0
      %v2274 = vadd.f32 0.0, %v2273
      %2275 = vmatmul.f32.gmra.mxu0 %v2164
      %v2276 = vpop.f32.mrf.mxu0
      %v2277 = vadd.f32 0.0, %v2276
      %2278 = vmatmul.f32.gmra.mxu0 %v2167
      %v2279 = vpop.f32.mrf.mxu0
      %v2280 = vadd.f32 0.0, %v2279
      %2281 = vmatmul.f32.gmra.mxu0 %v2170
      %v2282 = vpop.f32.mrf.mxu0
      %v2283 = vadd.f32 0.0, %v2282
      %2284 = vmatmul.f32.gmra.mxu0 %v2173
      %v2285 = vpop.f32.mrf.mxu0
      %v2286 = vadd.f32 0.0, %v2285
      %2287 = vmatmul.f32.gmra.mxu0 %v2176
      %v2288 = vpop.f32.mrf.mxu0
      %v2289 = vadd.f32 0.0, %v2288
      %2290 = vmatmul.f32.gmra.mxu0 %v2179
      %v2291 = vpop.f32.mrf.mxu0
      %v2292 = vadd.f32 0.0, %v2291
      %2293 = vmatmul.f32.gmra.mxu0 %v2182
      %v2294 = vpop.f32.mrf.mxu0
      %v2295 = vadd.f32 0.0, %v2294
      %2296 = vmatmul.f32.gmra.mxu0 %v2185
      %v2297 = vpop.f32.mrf.mxu0
      %v2298 = vadd.f32 0.0, %v2297
      %2299 = vmatmul.f32.gmra.mxu0 %v2188
      %v2300 = vpop.f32.mrf.mxu0
      %v2301 = vadd.f32 0.0, %v2300
      %2302 = vmatmul.f32.gmra.mxu0 %v2191
      %v2303 = vpop.f32.mrf.mxu0
      %v2304 = vadd.f32 0.0, %v2303
      %2305 = vmatmul.f32.gmra.mxu0 %v2194
      %v2306 = vpop.f32.mrf.mxu0
      %v2307 = vadd.f32 0.0, %v2306
      %2308 = vmatmul.f32.gmra.mxu0 %v2197
      %v2309 = vpop.f32.mrf.mxu0
      %v2310 = vadd.f32 0.0, %v2309
      %2311 = vmatmul.f32.gmra.mxu0 %v2200
      %v2312 = vpop.f32.mrf.mxu0
      %v2313 = vadd.f32 0.0, %v2312
      %2314 = vmatmul.f32.gmra.mxu0 %v2203
      %v2315 = vpop.f32.mrf.mxu0
      %v2316 = vadd.f32 0.0, %v2315
      %2317 = vmatmul.f32.gmra.mxu0 %v2206
      %v2318 = vpop.f32.mrf.mxu0
      %v2319 = vadd.f32 0.0, %v2318
      %2320 = vmatmul.f32.gmra.mxu0 %v2209
      %v2321 = vpop.f32.mrf.mxu0
      %v2322 = vadd.f32 0.0, %v2321
      %2323 = vmatmul.f32.gmra.mxu0 %v2212
      %v2324 = vpop.f32.mrf.mxu0
      %v2325 = vadd.f32 0.0, %v2324
      %2326 = vmatmul.f32.gmra.mxu0 %v2215
      %v2327 = vpop.f32.mrf.mxu0
      %v2328 = vadd.f32 0.0, %v2327
      %2329 = vmatmul.f32.gmra.mxu0 %v2218
      %v2330 = vpop.f32.mrf.mxu0
      %v2331 = vadd.f32 0.0, %v2330
      %2332 = vmatmul.f32.gmra.mxu0 %v2221
      %v2333 = vpop.f32.mrf.mxu0
      %v2334 = vadd.f32 0.0, %v2333
      %2335 = vdwg.mxu0
      %v2336 = vadd.f32 %v2054, %v2241
      %v2337 = vadd.f32 %v2055, %v2244
      %v2338 = vadd.f32 %v2056, %v2247
      %v2339 = vadd.f32 %v2057, %v2250
      %v2340 = vadd.f32 %v2058, %v2253
      %v2341 = vadd.f32 %v2059, %v2256
      %v2342 = vadd.f32 %v2060, %v2259
      %v2343 = vadd.f32 %v2061, %v2262
      %v2344 = vadd.f32 %v2062, %v2265
      %v2345 = vadd.f32 %v2063, %v2268
      %v2346 = vadd.f32 %v2064, %v2271
      %v2347 = vadd.f32 %v2065, %v2274
      %v2348 = vadd.f32 %v2066, %v2277
      %v2349 = vadd.f32 %v2067, %v2280
      %v2350 = vadd.f32 %v2068, %v2283
      %v2351 = vadd.f32 %v2069, %v2286
      %v2352 = vadd.f32 %v2070, %v2289
      %v2353 = vadd.f32 %v2071, %v2292
      %v2354 = vadd.f32 %v2072, %v2295
      %v2355 = vadd.f32 %v2073, %v2298
      %v2356 = vadd.f32 %v2074, %v2301
      %v2357 = vadd.f32 %v2075, %v2304
      %v2358 = vadd.f32 %v2076, %v2307
      %v2359 = vadd.f32 %v2077, %v2310
      %v2360 = vadd.f32 %v2078, %v2313
      %v2361 = vadd.f32 %v2079, %v2316
      %v2362 = vadd.f32 %v2080, %v2319
      %v2363 = vadd.f32 %v2081, %v2322
      %v2364 = vadd.f32 %v2082, %v2325
      %v2365 = vadd.f32 %v2083, %v2328
      %v2366 = vadd.f32 %v2084, %v2331
      %v2367 = vadd.f32 %v2085, %v2334
      %v2368 = vadd.f32 %v2336, %v1238
      %v2369 = vadd.f32 %v2337, %v1238
      %v2370 = vadd.f32 %v2338, %v1238
      %v2371 = vadd.f32 %v2339, %v1238
      %v2372 = vadd.f32 %v2340, %v1238
      %v2373 = vadd.f32 %v2341, %v1238
      %v2374 = vadd.f32 %v2342, %v1238
      %v2375 = vadd.f32 %v2343, %v1238
      %v2376 = vadd.f32 %v2344, %v1238
      %v2377 = vadd.f32 %v2345, %v1238
      %v2378 = vadd.f32 %v2346, %v1238
      %v2379 = vadd.f32 %v2347, %v1238
      %v2380 = vadd.f32 %v2348, %v1238
      %v2381 = vadd.f32 %v2349, %v1238
      %v2382 = vadd.f32 %v2350, %v1238
      %v2383 = vadd.f32 %v2351, %v1238
      %v2384 = vadd.f32 %v2352, %v1238
      %v2385 = vadd.f32 %v2353, %v1238
      %v2386 = vadd.f32 %v2354, %v1238
      %v2387 = vadd.f32 %v2355, %v1238
      %v2388 = vadd.f32 %v2356, %v1238
      %v2389 = vadd.f32 %v2357, %v1238
      %v2390 = vadd.f32 %v2358, %v1238
      %v2391 = vadd.f32 %v2359, %v1238
      %v2392 = vadd.f32 %v2360, %v1238
      %v2393 = vadd.f32 %v2361, %v1238
      %v2394 = vadd.f32 %v2362, %v1238
      %v2395 = vadd.f32 %v2363, %v1238
      %v2396 = vadd.f32 %v2364, %v1238
      %v2397 = vadd.f32 %v2365, %v1238
      %v2398 = vadd.f32 %v2366, %v1238
      %v2399 = vadd.f32 %v2367, %v1238
      %s2400 = scalar_lea.vmem %s170, 256
      %2401 = vst.msk [vmem:[%s2400] sm:$0xff] %vm253, %v2368
      %2402 = vst.msk [vmem:[%s2400 + $0x8] sm:$0xff] %vm253, %v2369
      %2403 = vst.msk [vmem:[%s2400 + $0x10] sm:$0xff] %vm253, %v2370
      %2404 = vst.msk [vmem:[%s2400 + $0x18] sm:$0xff] %vm253, %v2371
      %2405 = vst.msk [vmem:[%s2400 + $0x20] sm:$0xff] %vm253, %v2372
      %2406 = vst.msk [vmem:[%s2400 + $0x28] sm:$0xff] %vm253, %v2373
      %2407 = vst.msk [vmem:[%s2400 + $0x30] sm:$0xff] %vm253, %v2374
      %2408 = vst.msk [vmem:[%s2400 + $0x38] sm:$0xff] %vm253, %v2375
      %2409 = vst.msk [vmem:[%s2400 + $0x40] sm:$0xff] %vm253, %v2376
      %2410 = vst.msk [vmem:[%s2400 + $0x48] sm:$0xff] %vm253, %v2377
      %2411 = vst.msk [vmem:[%s2400 + $0x50] sm:$0xff] %vm253, %v2378
      %2412 = vst.msk [vmem:[%s2400 + $0x58] sm:$0xff] %vm253, %v2379
      %2413 = vst.msk [vmem:[%s2400 + $0x60] sm:$0xff] %vm253, %v2380
      %2414 = vst.msk [vmem:[%s2400 + $0x68] sm:$0xff] %vm253, %v2381
      %2415 = vst.msk [vmem:[%s2400 + $0x70] sm:$0xff] %vm253, %v2382
      %2416 = vst.msk [vmem:[%s2400 + $0x78] sm:$0xff] %vm253, %v2383
      %2417 = vst.msk [vmem:[%s2400 + $0x80] sm:$0xff] %vm253, %v2384
      %2418 = vst.msk [vmem:[%s2400 + $0x88] sm:$0xff] %vm253, %v2385
      %2419 = vst.msk [vmem:[%s2400 + $0x90] sm:$0xff] %vm253, %v2386
      %2420 = vst.msk [vmem:[%s2400 + $0x98] sm:$0xff] %vm253, %v2387
      %2421 = vst.msk [vmem:[%s2400 + $0xa0] sm:$0xff] %vm253, %v2388
      %2422 = vst.msk [vmem:[%s2400 + $0xa8] sm:$0xff] %vm253, %v2389
      %2423 = vst.msk [vmem:[%s2400 + $0xb0] sm:$0xff] %vm253, %v2390
      %2424 = vst.msk [vmem:[%s2400 + $0xb8] sm:$0xff] %vm253, %v2391
      %2425 = vst.msk [vmem:[%s2400 + $0xc0] sm:$0xff] %vm253, %v2392
      %2426 = vst.msk [vmem:[%s2400 + $0xc8] sm:$0xff] %vm253, %v2393
      %2427 = vst.msk [vmem:[%s2400 + $0xd0] sm:$0xff] %vm253, %v2394
      %2428 = vst.msk [vmem:[%s2400 + $0xd8] sm:$0xff] %vm253, %v2395
      %2429 = vst.msk [vmem:[%s2400 + $0xe0] sm:$0xff] %vm253, %v2396
      %2430 = vst.msk [vmem:[%s2400 + $0xe8] sm:$0xff] %vm253, %v2397
      %2431 = vst.msk [vmem:[%s2400 + $0xf0] sm:$0xff] %vm253, %v2398
      %2432 = vst.msk [vmem:[%s2400 + $0xf8] sm:$0xff] %vm253, %v2399
      %v2433 = vld [vmem:[%s672] sm:$0xff]
      %v2434 = vld [vmem:[%s672 + $0x8] sm:$0xff]
      %v2435 = vld [vmem:[%s672 + $0x18] sm:$0xff]
      %v2436 = vld [vmem:[%s672 + $0x20] sm:$0xff]
      %v2437 = vld [vmem:[%s672 + $0x30] sm:$0xff]
      %v2438 = vld [vmem:[%s672 + $0x38] sm:$0xff]
      %v2439 = vld [vmem:[%s672 + $0x48] sm:$0xff]
      %v2440 = vld [vmem:[%s672 + $0x50] sm:$0xff]
      %v2441 = vld [vmem:[%s672 + $0x60] sm:$0xff]
      %v2442 = vld [vmem:[%s672 + $0x68] sm:$0xff]
      %v2443 = vld [vmem:[%s672 + $0x78] sm:$0xff]
      %v2444 = vld [vmem:[%s672 + $0x80] sm:$0xff]
      %v2445 = vld [vmem:[%s672 + $0x90] sm:$0xff]
      %v2446 = vld [vmem:[%s672 + $0x98] sm:$0xff]
      %v2447 = vld [vmem:[%s672 + $0xa8] sm:$0xff]
      %v2448 = vld [vmem:[%s672 + $0xb0] sm:$0xff]
      %v2449 = vld [vmem:[%s672 + $0xc0] sm:$0xff]
      %v2450 = vld [vmem:[%s672 + $0xc8] sm:$0xff]
      %v2451 = vld [vmem:[%s672 + $0xd8] sm:$0xff]
      %v2452 = vld [vmem:[%s672 + $0xe0] sm:$0xff]
      %v2453 = vld [vmem:[%s672 + $0xf0] sm:$0xff]
      %v2454 = vld [vmem:[%s672 + $0xf8] sm:$0xff]
      %v2455 = vld [vmem:[%s672 + $0x108] sm:$0xff]
      %v2456 = vld [vmem:[%s672 + $0x110] sm:$0xff]
      %v2457 = vld [vmem:[%s672 + $0x120] sm:$0xff]
      %v2458 = vld [vmem:[%s672 + $0x128] sm:$0xff]
      %v2459 = vld [vmem:[%s672 + $0x138] sm:$0xff]
      %v2460 = vld [vmem:[%s672 + $0x140] sm:$0xff]
      %v2461 = vld [vmem:[%s672 + $0x150] sm:$0xff]
      %v2462 = vld [vmem:[%s672 + $0x158] sm:$0xff]
      %v2463 = vld [vmem:[%s672 + $0x168] sm:$0xff]
      %v2464 = vld [vmem:[%s672 + $0x170] sm:$0xff]
      %s2465 = scalar_lea.vmem %s1, 512
      %v2466 = vld [vmem:[%s2465] sm:$0xff]
      %v2467 = vld [vmem:[%s2465 + $0x8] sm:$0xff]
      %v2468 = vld [vmem:[%s2465 + $0x10] sm:$0xff]
      %v2469 = vld [vmem:[%s2465 + $0x18] sm:$0xff]
      %v2470 = vld [vmem:[%s2465 + $0x20] sm:$0xff]
      %v2471 = vld [vmem:[%s2465 + $0x28] sm:$0xff]
      %v2472 = vld [vmem:[%s2465 + $0x30] sm:$0xff]
      %v2473 = vld [vmem:[%s2465 + $0x38] sm:$0xff]
      %v2474 = vld [vmem:[%s672 + $0x1] sm:$0xff]
      %v2475 = vld [vmem:[%s672 + $0x9] sm:$0xff]
      %v2476 = vld [vmem:[%s672 + $0x19] sm:$0xff]
      %v2477 = vld [vmem:[%s672 + $0x21] sm:$0xff]
      %v2478 = vld [vmem:[%s672 + $0x31] sm:$0xff]
      %v2479 = vld [vmem:[%s672 + $0x39] sm:$0xff]
      %v2480 = vld [vmem:[%s672 + $0x49] sm:$0xff]
      %v2481 = vld [vmem:[%s672 + $0x51] sm:$0xff]
      %v2482 = vld [vmem:[%s672 + $0x61] sm:$0xff]
      %v2483 = vld [vmem:[%s672 + $0x69] sm:$0xff]
      %v2484 = vld [vmem:[%s672 + $0x79] sm:$0xff]
      %v2485 = vld [vmem:[%s672 + $0x81] sm:$0xff]
      %v2486 = vld [vmem:[%s672 + $0x91] sm:$0xff]
      %v2487 = vld [vmem:[%s672 + $0x99] sm:$0xff]
      %v2488 = vld [vmem:[%s672 + $0xa9] sm:$0xff]
      %v2489 = vld [vmem:[%s672 + $0xb1] sm:$0xff]
      %v2490 = vld [vmem:[%s672 + $0xc1] sm:$0xff]
      %v2491 = vld [vmem:[%s672 + $0xc9] sm:$0xff]
      %v2492 = vld [vmem:[%s672 + $0xd9] sm:$0xff]
      %v2493 = vld [vmem:[%s672 + $0xe1] sm:$0xff]
      %v2494 = vld [vmem:[%s672 + $0xf1] sm:$0xff]
      %v2495 = vld [vmem:[%s672 + $0xf9] sm:$0xff]
      %v2496 = vld [vmem:[%s672 + $0x109] sm:$0xff]
      %v2497 = vld [vmem:[%s672 + $0x111] sm:$0xff]
      %v2498 = vld [vmem:[%s672 + $0x121] sm:$0xff]
      %v2499 = vld [vmem:[%s672 + $0x129] sm:$0xff]
      %v2500 = vld [vmem:[%s672 + $0x139] sm:$0xff]
      %v2501 = vld [vmem:[%s672 + $0x141] sm:$0xff]
      %v2502 = vld [vmem:[%s672 + $0x151] sm:$0xff]
      %v2503 = vld [vmem:[%s672 + $0x159] sm:$0xff]
      %v2504 = vld [vmem:[%s672 + $0x169] sm:$0xff]
      %v2505 = vld [vmem:[%s672 + $0x171] sm:$0xff]
      %s2506 = scalar_lea.vmem %s1, 576
      %v2507 = vld [vmem:[%s2506] sm:$0xff]
      %v2508 = vld [vmem:[%s2506 + $0x8] sm:$0xff]
      %v2509 = vld [vmem:[%s2506 + $0x10] sm:$0xff]
      %v2510 = vld [vmem:[%s2506 + $0x18] sm:$0xff]
      %v2511 = vld [vmem:[%s2506 + $0x20] sm:$0xff]
      %v2512 = vld [vmem:[%s2506 + $0x28] sm:$0xff]
      %v2513 = vld [vmem:[%s2506 + $0x30] sm:$0xff]
      %v2514 = vld [vmem:[%s2506 + $0x38] sm:$0xff]
      %v2516 = vsel %vm253, %v2474, 0
      %v2519 = vsel %vm253, %v2475, 0
      %v2522 = vsel %vm253, %v2476, 0
      %v2525 = vsel %vm253, %v2477, 0
      %v2528 = vsel %vm253, %v2478, 0
      %v2531 = vsel %vm253, %v2479, 0
      %v2534 = vsel %vm253, %v2480, 0
      %v2537 = vsel %vm253, %v2481, 0
      %v2540 = vsel %vm253, %v2482, 0
      %v2543 = vsel %vm253, %v2483, 0
      %v2546 = vsel %vm253, %v2484, 0
      %v2549 = vsel %vm253, %v2485, 0
      %v2552 = vsel %vm253, %v2486, 0
      %v2555 = vsel %vm253, %v2487, 0
      %v2558 = vsel %vm253, %v2488, 0
      %v2561 = vsel %vm253, %v2489, 0
      %v2564 = vsel %vm253, %v2490, 0
      %v2567 = vsel %vm253, %v2491, 0
      %v2570 = vsel %vm253, %v2492, 0
      %v2573 = vsel %vm253, %v2493, 0
      %v2576 = vsel %vm253, %v2494, 0
      %v2579 = vsel %vm253, %v2495, 0
      %v2582 = vsel %vm253, %v2496, 0
      %v2585 = vsel %vm253, %v2497, 0
      %v2588 = vsel %vm253, %v2498, 0
      %v2591 = vsel %vm253, %v2499, 0
      %v2594 = vsel %vm253, %v2500, 0
      %v2597 = vsel %vm253, %v2501, 0
      %v2600 = vsel %vm253, %v2502, 0
      %v2603 = vsel %vm253, %v2503, 0
      %v2606 = vsel %vm253, %v2504, 0
      %v2609 = vsel %vm253, %v2505, 0
      %2611 = vmatpush.msra.mxu0 0.0
      %2612 = vmatpush.msra.mxu0 0.0
      %2613 = vmatpush.msra.mxu0 0.0
      %2614 = vmatpush.msra.mxu0 0.0
      %2615 = vmatpush.msra.mxu0 0.0
      %2616 = vmatpush.msra.mxu0 0.0
      %2617 = vmatpush.msra.mxu0 0.0
      %2618 = vmatpush.msra.mxu0 0.0
      %2619 = vmatpush.msra.mxu0 %v2514
      %2620 = vmatpush.msra.mxu0 %v2513
      %2621 = vmatpush.msra.mxu0 %v2512
      %2622 = vmatpush.msra.mxu0 %v2511
      %2623 = vmatpush.msra.mxu0 %v2510
      %2624 = vmatpush.msra.mxu0 %v2509
      %2625 = vmatpush.msra.mxu0 %v2508
      %2626 = vmatpush.msra.mxu0 %v2507
      %2627 = vmatmul.f32.gmra.mxu0 %v2516
      %v2628 = vpop.f32.mrf.mxu0
      %v2629 = vadd.f32 0.0, %v2628
      %2630 = vmatmul.f32.gmra.mxu0 %v2519
      %v2631 = vpop.f32.mrf.mxu0
      %v2632 = vadd.f32 0.0, %v2631
      %2633 = vmatmul.f32.gmra.mxu0 %v2522
      %v2634 = vpop.f32.mrf.mxu0
      %v2635 = vadd.f32 0.0, %v2634
      %2636 = vmatmul.f32.gmra.mxu0 %v2525
      %v2637 = vpop.f32.mrf.mxu0
      %v2638 = vadd.f32 0.0, %v2637
      %2639 = vmatmul.f32.gmra.mxu0 %v2528
      %v2640 = vpop.f32.mrf.mxu0
      %v2641 = vadd.f32 0.0, %v2640
      %2642 = vmatmul.f32.gmra.mxu0 %v2531
      %v2643 = vpop.f32.mrf.mxu0
      %v2644 = vadd.f32 0.0, %v2643
      %2645 = vmatmul.f32.gmra.mxu0 %v2534
      %v2646 = vpop.f32.mrf.mxu0
      %v2647 = vadd.f32 0.0, %v2646
      %2648 = vmatmul.f32.gmra.mxu0 %v2537
      %v2649 = vpop.f32.mrf.mxu0
      %v2650 = vadd.f32 0.0, %v2649
      %2651 = vmatmul.f32.gmra.mxu0 %v2540
      %v2652 = vpop.f32.mrf.mxu0
      %v2653 = vadd.f32 0.0, %v2652
      %2654 = vmatmul.f32.gmra.mxu0 %v2543
      %v2655 = vpop.f32.mrf.mxu0
      %v2656 = vadd.f32 0.0, %v2655
      %2657 = vmatmul.f32.gmra.mxu0 %v2546
      %v2658 = vpop.f32.mrf.mxu0
      %v2659 = vadd.f32 0.0, %v2658
      %2660 = vmatmul.f32.gmra.mxu0 %v2549
      %v2661 = vpop.f32.mrf.mxu0
      %v2662 = vadd.f32 0.0, %v2661
      %2663 = vmatmul.f32.gmra.mxu0 %v2552
      %v2664 = vpop.f32.mrf.mxu0
      %v2665 = vadd.f32 0.0, %v2664
      %2666 = vmatmul.f32.gmra.mxu0 %v2555
      %v2667 = vpop.f32.mrf.mxu0
      %v2668 = vadd.f32 0.0, %v2667
      %2669 = vmatmul.f32.gmra.mxu0 %v2558
      %v2670 = vpop.f32.mrf.mxu0
      %v2671 = vadd.f32 0.0, %v2670
      %2672 = vmatmul.f32.gmra.mxu0 %v2561
      %v2673 = vpop.f32.mrf.mxu0
      %v2674 = vadd.f32 0.0, %v2673
      %2675 = vmatmul.f32.gmra.mxu0 %v2564
      %v2676 = vpop.f32.mrf.mxu0
      %v2677 = vadd.f32 0.0, %v2676
      %2678 = vmatmul.f32.gmra.mxu0 %v2567
      %v2679 = vpop.f32.mrf.mxu0
      %v2680 = vadd.f32 0.0, %v2679
      %2681 = vmatmul.f32.gmra.mxu0 %v2570
      %v2682 = vpop.f32.mrf.mxu0
      %v2683 = vadd.f32 0.0, %v2682
      %2684 = vmatmul.f32.gmra.mxu0 %v2573
      %v2685 = vpop.f32.mrf.mxu0
      %v2686 = vadd.f32 0.0, %v2685
      %2687 = vmatmul.f32.gmra.mxu0 %v2576
      %v2688 = vpop.f32.mrf.mxu0
      %v2689 = vadd.f32 0.0, %v2688
      %2690 = vmatmul.f32.gmra.mxu0 %v2579
      %v2691 = vpop.f32.mrf.mxu0
      %v2692 = vadd.f32 0.0, %v2691
      %2693 = vmatmul.f32.gmra.mxu0 %v2582
      %v2694 = vpop.f32.mrf.mxu0
      %v2695 = vadd.f32 0.0, %v2694
      %2696 = vmatmul.f32.gmra.mxu0 %v2585
      %v2697 = vpop.f32.mrf.mxu0
      %v2698 = vadd.f32 0.0, %v2697
      %2699 = vmatmul.f32.gmra.mxu0 %v2588
      %v2700 = vpop.f32.mrf.mxu0
      %v2701 = vadd.f32 0.0, %v2700
      %2702 = vmatmul.f32.gmra.mxu0 %v2591
      %v2703 = vpop.f32.mrf.mxu0
      %v2704 = vadd.f32 0.0, %v2703
      %2705 = vmatmul.f32.gmra.mxu0 %v2594
      %v2706 = vpop.f32.mrf.mxu0
      %v2707 = vadd.f32 0.0, %v2706
      %2708 = vmatmul.f32.gmra.mxu0 %v2597
      %v2709 = vpop.f32.mrf.mxu0
      %v2710 = vadd.f32 0.0, %v2709
      %2711 = vmatmul.f32.gmra.mxu0 %v2600
      %v2712 = vpop.f32.mrf.mxu0
      %v2713 = vadd.f32 0.0, %v2712
      %2714 = vmatmul.f32.gmra.mxu0 %v2603
      %v2715 = vpop.f32.mrf.mxu0
      %v2716 = vadd.f32 0.0, %v2715
      %2717 = vmatmul.f32.gmra.mxu0 %v2606
      %v2718 = vpop.f32.mrf.mxu0
      %v2719 = vadd.f32 0.0, %v2718
      %2720 = vmatmul.f32.gmra.mxu0 %v2609
      %v2721 = vpop.f32.mrf.mxu0
      %v2722 = vadd.f32 0.0, %v2721
      %2723 = vdwg.mxu0
      %v2725 = vsel %vm253, %v2433, 0
      %v2728 = vsel %vm253, %v2434, 0
      %v2731 = vsel %vm253, %v2435, 0
      %v2734 = vsel %vm253, %v2436, 0
      %v2737 = vsel %vm253, %v2437, 0
      %v2740 = vsel %vm253, %v2438, 0
      %v2743 = vsel %vm253, %v2439, 0
      %v2746 = vsel %vm253, %v2440, 0
      %v2749 = vsel %vm253, %v2441, 0
      %v2752 = vsel %vm253, %v2442, 0
      %v2755 = vsel %vm253, %v2443, 0
      %v2758 = vsel %vm253, %v2444, 0
      %v2761 = vsel %vm253, %v2445, 0
      %v2764 = vsel %vm253, %v2446, 0
      %v2767 = vsel %vm253, %v2447, 0
      %v2770 = vsel %vm253, %v2448, 0
      %v2773 = vsel %vm253, %v2449, 0
      %v2776 = vsel %vm253, %v2450, 0
      %v2779 = vsel %vm253, %v2451, 0
      %v2782 = vsel %vm253, %v2452, 0
      %v2785 = vsel %vm253, %v2453, 0
      %v2788 = vsel %vm253, %v2454, 0
      %v2791 = vsel %vm253, %v2455, 0
      %v2794 = vsel %vm253, %v2456, 0
      %v2797 = vsel %vm253, %v2457, 0
      %v2800 = vsel %vm253, %v2458, 0
      %v2803 = vsel %vm253, %v2459, 0
      %v2806 = vsel %vm253, %v2460, 0
      %v2809 = vsel %vm253, %v2461, 0
      %v2812 = vsel %vm253, %v2462, 0
      %v2815 = vsel %vm253, %v2463, 0
      %v2818 = vsel %vm253, %v2464, 0
      %2820 = vmatpush.msra.mxu0 0.0
      %2821 = vmatpush.msra.mxu0 0.0
      %2822 = vmatpush.msra.mxu0 0.0
      %2823 = vmatpush.msra.mxu0 0.0
      %2824 = vmatpush.msra.mxu0 0.0
      %2825 = vmatpush.msra.mxu0 0.0
      %2826 = vmatpush.msra.mxu0 0.0
      %2827 = vmatpush.msra.mxu0 0.0
      %2828 = vmatpush.msra.mxu0 %v2473
      %2829 = vmatpush.msra.mxu0 %v2472
      %2830 = vmatpush.msra.mxu0 %v2471
      %2831 = vmatpush.msra.mxu0 %v2470
      %2832 = vmatpush.msra.mxu0 %v2469
      %2833 = vmatpush.msra.mxu0 %v2468
      %2834 = vmatpush.msra.mxu0 %v2467
      %2835 = vmatpush.msra.mxu0 %v2466
      %2836 = vmatmul.f32.gmra.mxu0 %v2725
      %v2837 = vpop.f32.mrf.mxu0
      %v2838 = vadd.f32 %v2629, %v2837
      %2839 = vmatmul.f32.gmra.mxu0 %v2728
      %v2840 = vpop.f32.mrf.mxu0
      %v2841 = vadd.f32 %v2632, %v2840
      %2842 = vmatmul.f32.gmra.mxu0 %v2731
      %v2843 = vpop.f32.mrf.mxu0
      %v2844 = vadd.f32 %v2635, %v2843
      %2845 = vmatmul.f32.gmra.mxu0 %v2734
      %v2846 = vpop.f32.mrf.mxu0
      %v2847 = vadd.f32 %v2638, %v2846
      %2848 = vmatmul.f32.gmra.mxu0 %v2737
      %v2849 = vpop.f32.mrf.mxu0
      %v2850 = vadd.f32 %v2641, %v2849
      %2851 = vmatmul.f32.gmra.mxu0 %v2740
      %v2852 = vpop.f32.mrf.mxu0
      %v2853 = vadd.f32 %v2644, %v2852
      %2854 = vmatmul.f32.gmra.mxu0 %v2743
      %v2855 = vpop.f32.mrf.mxu0
      %v2856 = vadd.f32 %v2647, %v2855
      %2857 = vmatmul.f32.gmra.mxu0 %v2746
      %v2858 = vpop.f32.mrf.mxu0
      %v2859 = vadd.f32 %v2650, %v2858
      %2860 = vmatmul.f32.gmra.mxu0 %v2749
      %v2861 = vpop.f32.mrf.mxu0
      %v2862 = vadd.f32 %v2653, %v2861
      %2863 = vmatmul.f32.gmra.mxu0 %v2752
      %v2864 = vpop.f32.mrf.mxu0
      %v2865 = vadd.f32 %v2656, %v2864
      %2866 = vmatmul.f32.gmra.mxu0 %v2755
      %v2867 = vpop.f32.mrf.mxu0
      %v2868 = vadd.f32 %v2659, %v2867
      %2869 = vmatmul.f32.gmra.mxu0 %v2758
      %v2870 = vpop.f32.mrf.mxu0
      %v2871 = vadd.f32 %v2662, %v2870
      %2872 = vmatmul.f32.gmra.mxu0 %v2761
      %v2873 = vpop.f32.mrf.mxu0
      %v2874 = vadd.f32 %v2665, %v2873
      %2875 = vmatmul.f32.gmra.mxu0 %v2764
      %v2876 = vpop.f32.mrf.mxu0
      %v2877 = vadd.f32 %v2668, %v2876
      %2878 = vmatmul.f32.gmra.mxu0 %v2767
      %v2879 = vpop.f32.mrf.mxu0
      %v2880 = vadd.f32 %v2671, %v2879
      %2881 = vmatmul.f32.gmra.mxu0 %v2770
      %v2882 = vpop.f32.mrf.mxu0
      %v2883 = vadd.f32 %v2674, %v2882
      %2884 = vmatmul.f32.gmra.mxu0 %v2773
      %v2885 = vpop.f32.mrf.mxu0
      %v2886 = vadd.f32 %v2677, %v2885
      %2887 = vmatmul.f32.gmra.mxu0 %v2776
      %v2888 = vpop.f32.mrf.mxu0
      %v2889 = vadd.f32 %v2680, %v2888
      %2890 = vmatmul.f32.gmra.mxu0 %v2779
      %v2891 = vpop.f32.mrf.mxu0
      %v2892 = vadd.f32 %v2683, %v2891
      %2893 = vmatmul.f32.gmra.mxu0 %v2782
      %v2894 = vpop.f32.mrf.mxu0
      %v2895 = vadd.f32 %v2686, %v2894
      %2896 = vmatmul.f32.gmra.mxu0 %v2785
      %v2897 = vpop.f32.mrf.mxu0
      %v2898 = vadd.f32 %v2689, %v2897
      %2899 = vmatmul.f32.gmra.mxu0 %v2788
      %v2900 = vpop.f32.mrf.mxu0
      %v2901 = vadd.f32 %v2692, %v2900
      %2902 = vmatmul.f32.gmra.mxu0 %v2791
      %v2903 = vpop.f32.mrf.mxu0
      %v2904 = vadd.f32 %v2695, %v2903
      %2905 = vmatmul.f32.gmra.mxu0 %v2794
      %v2906 = vpop.f32.mrf.mxu0
      %v2907 = vadd.f32 %v2698, %v2906
      %2908 = vmatmul.f32.gmra.mxu0 %v2797
      %v2909 = vpop.f32.mrf.mxu0
      %v2910 = vadd.f32 %v2701, %v2909
      %2911 = vmatmul.f32.gmra.mxu0 %v2800
      %v2912 = vpop.f32.mrf.mxu0
      %v2913 = vadd.f32 %v2704, %v2912
      %2914 = vmatmul.f32.gmra.mxu0 %v2803
      %v2915 = vpop.f32.mrf.mxu0
      %v2916 = vadd.f32 %v2707, %v2915
      %2917 = vmatmul.f32.gmra.mxu0 %v2806
      %v2918 = vpop.f32.mrf.mxu0
      %v2919 = vadd.f32 %v2710, %v2918
      %2920 = vmatmul.f32.gmra.mxu0 %v2809
      %v2921 = vpop.f32.mrf.mxu0
      %v2922 = vadd.f32 %v2713, %v2921
      %2923 = vmatmul.f32.gmra.mxu0 %v2812
      %v2924 = vpop.f32.mrf.mxu0
      %v2925 = vadd.f32 %v2716, %v2924
      %2926 = vmatmul.f32.gmra.mxu0 %v2815
      %v2927 = vpop.f32.mrf.mxu0
      %v2928 = vadd.f32 %v2719, %v2927
      %2929 = vmatmul.f32.gmra.mxu0 %v2818
      %v2930 = vpop.f32.mrf.mxu0
      %v2931 = vadd.f32 %v2722, %v2930
      %2932 = vdwg.mxu0
      %s2933 = scalar_lea.vmem %s165, 48
      %v2934 = vld [vmem:[%s2933] sm:$0xff]
      %v2935 = vld [vmem:[%s2933 + $0x8] sm:$0xff]
      %v2936 = vld [vmem:[%s2933 + $0x18] sm:$0xff]
      %v2937 = vld [vmem:[%s2933 + $0x20] sm:$0xff]
      %v2938 = vld [vmem:[%s2933 + $0x30] sm:$0xff]
      %v2939 = vld [vmem:[%s2933 + $0x38] sm:$0xff]
      %v2940 = vld [vmem:[%s2933 + $0x48] sm:$0xff]
      %v2941 = vld [vmem:[%s2933 + $0x50] sm:$0xff]
      %v2942 = vld [vmem:[%s2933 + $0x60] sm:$0xff]
      %v2943 = vld [vmem:[%s2933 + $0x68] sm:$0xff]
      %v2944 = vld [vmem:[%s2933 + $0x78] sm:$0xff]
      %v2945 = vld [vmem:[%s2933 + $0x80] sm:$0xff]
      %v2946 = vld [vmem:[%s2933 + $0x90] sm:$0xff]
      %v2947 = vld [vmem:[%s2933 + $0x98] sm:$0xff]
      %v2948 = vld [vmem:[%s2933 + $0xa8] sm:$0xff]
      %v2949 = vld [vmem:[%s2933 + $0xb0] sm:$0xff]
      %v2950 = vld [vmem:[%s2933 + $0xc0] sm:$0xff]
      %v2951 = vld [vmem:[%s2933 + $0xc8] sm:$0xff]
      %v2952 = vld [vmem:[%s2933 + $0xd8] sm:$0xff]
      %v2953 = vld [vmem:[%s2933 + $0xe0] sm:$0xff]
      %v2954 = vld [vmem:[%s2933 + $0xf0] sm:$0xff]
      %v2955 = vld [vmem:[%s2933 + $0xf8] sm:$0xff]
      %v2956 = vld [vmem:[%s2933 + $0x108] sm:$0xff]
      %v2957 = vld [vmem:[%s2933 + $0x110] sm:$0xff]
      %v2958 = vld [vmem:[%s2933 + $0x120] sm:$0xff]
      %v2959 = vld [vmem:[%s2933 + $0x128] sm:$0xff]
      %v2960 = vld [vmem:[%s2933 + $0x138] sm:$0xff]
      %v2961 = vld [vmem:[%s2933 + $0x140] sm:$0xff]
      %v2962 = vld [vmem:[%s2933 + $0x150] sm:$0xff]
      %v2963 = vld [vmem:[%s2933 + $0x158] sm:$0xff]
      %v2964 = vld [vmem:[%s2933 + $0x168] sm:$0xff]
      %v2965 = vld [vmem:[%s2933 + $0x170] sm:$0xff]
      %s2966 = scalar_lea.vmem %s1, 640
      %v2967 = vld [vmem:[%s2966] sm:$0xff]
      %v2968 = vld [vmem:[%s2966 + $0x8] sm:$0xff]
      %v2969 = vld [vmem:[%s2966 + $0x10] sm:$0xff]
      %v2970 = vld [vmem:[%s2966 + $0x18] sm:$0xff]
      %v2971 = vld [vmem:[%s2966 + $0x20] sm:$0xff]
      %v2972 = vld [vmem:[%s2966 + $0x28] sm:$0xff]
      %v2973 = vld [vmem:[%s2966 + $0x30] sm:$0xff]
      %v2974 = vld [vmem:[%s2966 + $0x38] sm:$0xff]
      %v2976 = vsel %vm253, %v2934, 0
      %v2979 = vsel %vm253, %v2935, 0
      %v2982 = vsel %vm253, %v2936, 0
      %v2985 = vsel %vm253, %v2937, 0
      %v2988 = vsel %vm253, %v2938, 0
      %v2991 = vsel %vm253, %v2939, 0
      %v2994 = vsel %vm253, %v2940, 0
      %v2997 = vsel %vm253, %v2941, 0
      %v3000 = vsel %vm253, %v2942, 0
      %v3003 = vsel %vm253, %v2943, 0
      %v3006 = vsel %vm253, %v2944, 0
      %v3009 = vsel %vm253, %v2945, 0
      %v3012 = vsel %vm253, %v2946, 0
      %v3015 = vsel %vm253, %v2947, 0
      %v3018 = vsel %vm253, %v2948, 0
      %v3021 = vsel %vm253, %v2949, 0
      %v3024 = vsel %vm253, %v2950, 0
      %v3027 = vsel %vm253, %v2951, 0
      %v3030 = vsel %vm253, %v2952, 0
      %v3033 = vsel %vm253, %v2953, 0
      %v3036 = vsel %vm253, %v2954, 0
      %v3039 = vsel %vm253, %v2955, 0
      %v3042 = vsel %vm253, %v2956, 0
      %v3045 = vsel %vm253, %v2957, 0
      %v3048 = vsel %vm253, %v2958, 0
      %v3051 = vsel %vm253, %v2959, 0
      %v3054 = vsel %vm253, %v2960, 0
      %v3057 = vsel %vm253, %v2961, 0
      %v3060 = vsel %vm253, %v2962, 0
      %v3063 = vsel %vm253, %v2963, 0
      %v3066 = vsel %vm253, %v2964, 0
      %v3069 = vsel %vm253, %v2965, 0
      %3071 = vmatpush.msra.mxu0 0.0
      %3072 = vmatpush.msra.mxu0 0.0
      %3073 = vmatpush.msra.mxu0 0.0
      %3074 = vmatpush.msra.mxu0 0.0
      %3075 = vmatpush.msra.mxu0 0.0
      %3076 = vmatpush.msra.mxu0 0.0
      %3077 = vmatpush.msra.mxu0 0.0
      %3078 = vmatpush.msra.mxu0 0.0
      %3079 = vmatpush.msra.mxu0 %v2974
      %3080 = vmatpush.msra.mxu0 %v2973
      %3081 = vmatpush.msra.mxu0 %v2972
      %3082 = vmatpush.msra.mxu0 %v2971
      %3083 = vmatpush.msra.mxu0 %v2970
      %3084 = vmatpush.msra.mxu0 %v2969
      %3085 = vmatpush.msra.mxu0 %v2968
      %3086 = vmatpush.msra.mxu0 %v2967
      %3087 = vmatmul.f32.gmra.mxu0 %v2976
      %v3088 = vpop.f32.mrf.mxu0
      %v3089 = vadd.f32 0.0, %v3088
      %3090 = vmatmul.f32.gmra.mxu0 %v2979
      %v3091 = vpop.f32.mrf.mxu0
      %v3092 = vadd.f32 0.0, %v3091
      %3093 = vmatmul.f32.gmra.mxu0 %v2982
      %v3094 = vpop.f32.mrf.mxu0
      %v3095 = vadd.f32 0.0, %v3094
      %3096 = vmatmul.f32.gmra.mxu0 %v2985
      %v3097 = vpop.f32.mrf.mxu0
      %v3098 = vadd.f32 0.0, %v3097
      %3099 = vmatmul.f32.gmra.mxu0 %v2988
      %v3100 = vpop.f32.mrf.mxu0
      %v3101 = vadd.f32 0.0, %v3100
      %3102 = vmatmul.f32.gmra.mxu0 %v2991
      %v3103 = vpop.f32.mrf.mxu0
      %v3104 = vadd.f32 0.0, %v3103
      %3105 = vmatmul.f32.gmra.mxu0 %v2994
      %v3106 = vpop.f32.mrf.mxu0
      %v3107 = vadd.f32 0.0, %v3106
      %3108 = vmatmul.f32.gmra.mxu0 %v2997
      %v3109 = vpop.f32.mrf.mxu0
      %v3110 = vadd.f32 0.0, %v3109
      %3111 = vmatmul.f32.gmra.mxu0 %v3000
      %v3112 = vpop.f32.mrf.mxu0
      %v3113 = vadd.f32 0.0, %v3112
      %3114 = vmatmul.f32.gmra.mxu0 %v3003
      %v3115 = vpop.f32.mrf.mxu0
      %v3116 = vadd.f32 0.0, %v3115
      %3117 = vmatmul.f32.gmra.mxu0 %v3006
      %v3118 = vpop.f32.mrf.mxu0
      %v3119 = vadd.f32 0.0, %v3118
      %3120 = vmatmul.f32.gmra.mxu0 %v3009
      %v3121 = vpop.f32.mrf.mxu0
      %v3122 = vadd.f32 0.0, %v3121
      %3123 = vmatmul.f32.gmra.mxu0 %v3012
      %v3124 = vpop.f32.mrf.mxu0
      %v3125 = vadd.f32 0.0, %v3124
      %3126 = vmatmul.f32.gmra.mxu0 %v3015
      %v3127 = vpop.f32.mrf.mxu0
      %v3128 = vadd.f32 0.0, %v3127
      %3129 = vmatmul.f32.gmra.mxu0 %v3018
      %v3130 = vpop.f32.mrf.mxu0
      %v3131 = vadd.f32 0.0, %v3130
      %3132 = vmatmul.f32.gmra.mxu0 %v3021
      %v3133 = vpop.f32.mrf.mxu0
      %v3134 = vadd.f32 0.0, %v3133
      %3135 = vmatmul.f32.gmra.mxu0 %v3024
      %v3136 = vpop.f32.mrf.mxu0
      %v3137 = vadd.f32 0.0, %v3136
      %3138 = vmatmul.f32.gmra.mxu0 %v3027
      %v3139 = vpop.f32.mrf.mxu0
      %v3140 = vadd.f32 0.0, %v3139
      %3141 = vmatmul.f32.gmra.mxu0 %v3030
      %v3142 = vpop.f32.mrf.mxu0
      %v3143 = vadd.f32 0.0, %v3142
      %3144 = vmatmul.f32.gmra.mxu0 %v3033
      %v3145 = vpop.f32.mrf.mxu0
      %v3146 = vadd.f32 0.0, %v3145
      %3147 = vmatmul.f32.gmra.mxu0 %v3036
      %v3148 = vpop.f32.mrf.mxu0
      %v3149 = vadd.f32 0.0, %v3148
      %3150 = vmatmul.f32.gmra.mxu0 %v3039
      %v3151 = vpop.f32.mrf.mxu0
      %v3152 = vadd.f32 0.0, %v3151
      %3153 = vmatmul.f32.gmra.mxu0 %v3042
      %v3154 = vpop.f32.mrf.mxu0
      %v3155 = vadd.f32 0.0, %v3154
      %3156 = vmatmul.f32.gmra.mxu0 %v3045
      %v3157 = vpop.f32.mrf.mxu0
      %v3158 = vadd.f32 0.0, %v3157
      %3159 = vmatmul.f32.gmra.mxu0 %v3048
      %v3160 = vpop.f32.mrf.mxu0
      %v3161 = vadd.f32 0.0, %v3160
      %3162 = vmatmul.f32.gmra.mxu0 %v3051
      %v3163 = vpop.f32.mrf.mxu0
      %v3164 = vadd.f32 0.0, %v3163
      %3165 = vmatmul.f32.gmra.mxu0 %v3054
      %v3166 = vpop.f32.mrf.mxu0
      %v3167 = vadd.f32 0.0, %v3166
      %3168 = vmatmul.f32.gmra.mxu0 %v3057
      %v3169 = vpop.f32.mrf.mxu0
      %v3170 = vadd.f32 0.0, %v3169
      %3171 = vmatmul.f32.gmra.mxu0 %v3060
      %v3172 = vpop.f32.mrf.mxu0
      %v3173 = vadd.f32 0.0, %v3172
      %3174 = vmatmul.f32.gmra.mxu0 %v3063
      %v3175 = vpop.f32.mrf.mxu0
      %v3176 = vadd.f32 0.0, %v3175
      %3177 = vmatmul.f32.gmra.mxu0 %v3066
      %v3178 = vpop.f32.mrf.mxu0
      %v3179 = vadd.f32 0.0, %v3178
      %3180 = vmatmul.f32.gmra.mxu0 %v3069
      %v3181 = vpop.f32.mrf.mxu0
      %v3182 = vadd.f32 0.0, %v3181
      %3183 = vdwg.mxu0
      %v3184 = vadd.f32 %v2838, %v3089
      %v3185 = vadd.f32 %v2841, %v3092
      %v3186 = vadd.f32 %v2844, %v3095
      %v3187 = vadd.f32 %v2847, %v3098
      %v3188 = vadd.f32 %v2850, %v3101
      %v3189 = vadd.f32 %v2853, %v3104
      %v3190 = vadd.f32 %v2856, %v3107
      %v3191 = vadd.f32 %v2859, %v3110
      %v3192 = vadd.f32 %v2862, %v3113
      %v3193 = vadd.f32 %v2865, %v3116
      %v3194 = vadd.f32 %v2868, %v3119
      %v3195 = vadd.f32 %v2871, %v3122
      %v3196 = vadd.f32 %v2874, %v3125
      %v3197 = vadd.f32 %v2877, %v3128
      %v3198 = vadd.f32 %v2880, %v3131
      %v3199 = vadd.f32 %v2883, %v3134
      %v3200 = vadd.f32 %v2886, %v3137
      %v3201 = vadd.f32 %v2889, %v3140
      %v3202 = vadd.f32 %v2892, %v3143
      %v3203 = vadd.f32 %v2895, %v3146
      %v3204 = vadd.f32 %v2898, %v3149
      %v3205 = vadd.f32 %v2901, %v3152
      %v3206 = vadd.f32 %v2904, %v3155
      %v3207 = vadd.f32 %v2907, %v3158
      %v3208 = vadd.f32 %v2910, %v3161
      %v3209 = vadd.f32 %v2913, %v3164
      %v3210 = vadd.f32 %v2916, %v3167
      %v3211 = vadd.f32 %v2919, %v3170
      %v3212 = vadd.f32 %v2922, %v3173
      %v3213 = vadd.f32 %v2925, %v3176
      %v3214 = vadd.f32 %v2928, %v3179
      %v3215 = vadd.f32 %v2931, %v3182
      %v3216 = vld [vmem:[%s2933 + $0x1] sm:$0xff]
      %v3217 = vld [vmem:[%s2933 + $0x9] sm:$0xff]
      %v3218 = vld [vmem:[%s2933 + $0x19] sm:$0xff]
      %v3219 = vld [vmem:[%s2933 + $0x21] sm:$0xff]
      %v3220 = vld [vmem:[%s2933 + $0x31] sm:$0xff]
      %v3221 = vld [vmem:[%s2933 + $0x39] sm:$0xff]
      %v3222 = vld [vmem:[%s2933 + $0x49] sm:$0xff]
      %v3223 = vld [vmem:[%s2933 + $0x51] sm:$0xff]
      %v3224 = vld [vmem:[%s2933 + $0x61] sm:$0xff]
      %v3225 = vld [vmem:[%s2933 + $0x69] sm:$0xff]
      %v3226 = vld [vmem:[%s2933 + $0x79] sm:$0xff]
      %v3227 = vld [vmem:[%s2933 + $0x81] sm:$0xff]
      %v3228 = vld [vmem:[%s2933 + $0x91] sm:$0xff]
      %v3229 = vld [vmem:[%s2933 + $0x99] sm:$0xff]
      %v3230 = vld [vmem:[%s2933 + $0xa9] sm:$0xff]
      %v3231 = vld [vmem:[%s2933 + $0xb1] sm:$0xff]
      %v3232 = vld [vmem:[%s2933 + $0xc1] sm:$0xff]
      %v3233 = vld [vmem:[%s2933 + $0xc9] sm:$0xff]
      %v3234 = vld [vmem:[%s2933 + $0xd9] sm:$0xff]
      %v3235 = vld [vmem:[%s2933 + $0xe1] sm:$0xff]
      %v3236 = vld [vmem:[%s2933 + $0xf1] sm:$0xff]
      %v3237 = vld [vmem:[%s2933 + $0xf9] sm:$0xff]
      %v3238 = vld [vmem:[%s2933 + $0x109] sm:$0xff]
      %v3239 = vld [vmem:[%s2933 + $0x111] sm:$0xff]
      %v3240 = vld [vmem:[%s2933 + $0x121] sm:$0xff]
      %v3241 = vld [vmem:[%s2933 + $0x129] sm:$0xff]
      %v3242 = vld [vmem:[%s2933 + $0x139] sm:$0xff]
      %v3243 = vld [vmem:[%s2933 + $0x141] sm:$0xff]
      %v3244 = vld [vmem:[%s2933 + $0x151] sm:$0xff]
      %v3245 = vld [vmem:[%s2933 + $0x159] sm:$0xff]
      %v3246 = vld [vmem:[%s2933 + $0x169] sm:$0xff]
      %v3247 = vld [vmem:[%s2933 + $0x171] sm:$0xff]
      %s3248 = scalar_lea.vmem %s1, 704
      %v3249 = vld [vmem:[%s3248] sm:$0xff]
      %v3250 = vld [vmem:[%s3248 + $0x8] sm:$0xff]
      %v3251 = vld [vmem:[%s3248 + $0x10] sm:$0xff]
      %v3252 = vld [vmem:[%s3248 + $0x18] sm:$0xff]
      %v3253 = vld [vmem:[%s3248 + $0x20] sm:$0xff]
      %v3254 = vld [vmem:[%s3248 + $0x28] sm:$0xff]
      %v3255 = vld [vmem:[%s3248 + $0x30] sm:$0xff]
      %v3256 = vld [vmem:[%s3248 + $0x38] sm:$0xff]
      %v3258 = vsel %vm253, %v3216, 0
      %v3261 = vsel %vm253, %v3217, 0
      %v3264 = vsel %vm253, %v3218, 0
      %v3267 = vsel %vm253, %v3219, 0
      %v3270 = vsel %vm253, %v3220, 0
      %v3273 = vsel %vm253, %v3221, 0
      %v3276 = vsel %vm253, %v3222, 0
      %v3279 = vsel %vm253, %v3223, 0
      %v3282 = vsel %vm253, %v3224, 0
      %v3285 = vsel %vm253, %v3225, 0
      %v3288 = vsel %vm253, %v3226, 0
      %v3291 = vsel %vm253, %v3227, 0
      %v3294 = vsel %vm253, %v3228, 0
      %v3297 = vsel %vm253, %v3229, 0
      %v3300 = vsel %vm253, %v3230, 0
      %v3303 = vsel %vm253, %v3231, 0
      %v3306 = vsel %vm253, %v3232, 0
      %v3309 = vsel %vm253, %v3233, 0
      %v3312 = vsel %vm253, %v3234, 0
      %v3315 = vsel %vm253, %v3235, 0
      %v3318 = vsel %vm253, %v3236, 0
      %v3321 = vsel %vm253, %v3237, 0
      %v3324 = vsel %vm253, %v3238, 0
      %v3327 = vsel %vm253, %v3239, 0
      %v3330 = vsel %vm253, %v3240, 0
      %v3333 = vsel %vm253, %v3241, 0
      %v3336 = vsel %vm253, %v3242, 0
      %v3339 = vsel %vm253, %v3243, 0
      %v3342 = vsel %vm253, %v3244, 0
      %v3345 = vsel %vm253, %v3245, 0
      %v3348 = vsel %vm253, %v3246, 0
      %v3351 = vsel %vm253, %v3247, 0
      %3353 = vmatpush.msra.mxu0 0.0
      %3354 = vmatpush.msra.mxu0 0.0
      %3355 = vmatpush.msra.mxu0 0.0
      %3356 = vmatpush.msra.mxu0 0.0
      %3357 = vmatpush.msra.mxu0 0.0
      %3358 = vmatpush.msra.mxu0 0.0
      %3359 = vmatpush.msra.mxu0 0.0
      %3360 = vmatpush.msra.mxu0 0.0
      %3361 = vmatpush.msra.mxu0 %v3256
      %3362 = vmatpush.msra.mxu0 %v3255
      %3363 = vmatpush.msra.mxu0 %v3254
      %3364 = vmatpush.msra.mxu0 %v3253
      %3365 = vmatpush.msra.mxu0 %v3252
      %3366 = vmatpush.msra.mxu0 %v3251
      %3367 = vmatpush.msra.mxu0 %v3250
      %3368 = vmatpush.msra.mxu0 %v3249
      %3369 = vmatmul.f32.gmra.mxu0 %v3258
      %v3370 = vpop.f32.mrf.mxu0
      %v3371 = vadd.f32 0.0, %v3370
      %3372 = vmatmul.f32.gmra.mxu0 %v3261
      %v3373 = vpop.f32.mrf.mxu0
      %v3374 = vadd.f32 0.0, %v3373
      %3375 = vmatmul.f32.gmra.mxu0 %v3264
      %v3376 = vpop.f32.mrf.mxu0
      %v3377 = vadd.f32 0.0, %v3376
      %3378 = vmatmul.f32.gmra.mxu0 %v3267
      %v3379 = vpop.f32.mrf.mxu0
      %v3380 = vadd.f32 0.0, %v3379
      %3381 = vmatmul.f32.gmra.mxu0 %v3270
      %v3382 = vpop.f32.mrf.mxu0
      %v3383 = vadd.f32 0.0, %v3382
      %3384 = vmatmul.f32.gmra.mxu0 %v3273
      %v3385 = vpop.f32.mrf.mxu0
      %v3386 = vadd.f32 0.0, %v3385
      %3387 = vmatmul.f32.gmra.mxu0 %v3276
      %v3388 = vpop.f32.mrf.mxu0
      %v3389 = vadd.f32 0.0, %v3388
      %3390 = vmatmul.f32.gmra.mxu0 %v3279
      %v3391 = vpop.f32.mrf.mxu0
      %v3392 = vadd.f32 0.0, %v3391
      %3393 = vmatmul.f32.gmra.mxu0 %v3282
      %v3394 = vpop.f32.mrf.mxu0
      %v3395 = vadd.f32 0.0, %v3394
      %3396 = vmatmul.f32.gmra.mxu0 %v3285
      %v3397 = vpop.f32.mrf.mxu0
      %v3398 = vadd.f32 0.0, %v3397
      %3399 = vmatmul.f32.gmra.mxu0 %v3288
      %v3400 = vpop.f32.mrf.mxu0
      %v3401 = vadd.f32 0.0, %v3400
      %3402 = vmatmul.f32.gmra.mxu0 %v3291
      %v3403 = vpop.f32.mrf.mxu0
      %v3404 = vadd.f32 0.0, %v3403
      %3405 = vmatmul.f32.gmra.mxu0 %v3294
      %v3406 = vpop.f32.mrf.mxu0
      %v3407 = vadd.f32 0.0, %v3406
      %3408 = vmatmul.f32.gmra.mxu0 %v3297
      %v3409 = vpop.f32.mrf.mxu0
      %v3410 = vadd.f32 0.0, %v3409
      %3411 = vmatmul.f32.gmra.mxu0 %v3300
      %v3412 = vpop.f32.mrf.mxu0
      %v3413 = vadd.f32 0.0, %v3412
      %3414 = vmatmul.f32.gmra.mxu0 %v3303
      %v3415 = vpop.f32.mrf.mxu0
      %v3416 = vadd.f32 0.0, %v3415
      %3417 = vmatmul.f32.gmra.mxu0 %v3306
      %v3418 = vpop.f32.mrf.mxu0
      %v3419 = vadd.f32 0.0, %v3418
      %3420 = vmatmul.f32.gmra.mxu0 %v3309
      %v3421 = vpop.f32.mrf.mxu0
      %v3422 = vadd.f32 0.0, %v3421
      %3423 = vmatmul.f32.gmra.mxu0 %v3312
      %v3424 = vpop.f32.mrf.mxu0
      %v3425 = vadd.f32 0.0, %v3424
      %3426 = vmatmul.f32.gmra.mxu0 %v3315
      %v3427 = vpop.f32.mrf.mxu0
      %v3428 = vadd.f32 0.0, %v3427
      %3429 = vmatmul.f32.gmra.mxu0 %v3318
      %v3430 = vpop.f32.mrf.mxu0
      %v3431 = vadd.f32 0.0, %v3430
      %3432 = vmatmul.f32.gmra.mxu0 %v3321
      %v3433 = vpop.f32.mrf.mxu0
      %v3434 = vadd.f32 0.0, %v3433
      %3435 = vmatmul.f32.gmra.mxu0 %v3324
      %v3436 = vpop.f32.mrf.mxu0
      %v3437 = vadd.f32 0.0, %v3436
      %3438 = vmatmul.f32.gmra.mxu0 %v3327
      %v3439 = vpop.f32.mrf.mxu0
      %v3440 = vadd.f32 0.0, %v3439
      %3441 = vmatmul.f32.gmra.mxu0 %v3330
      %v3442 = vpop.f32.mrf.mxu0
      %v3443 = vadd.f32 0.0, %v3442
      %3444 = vmatmul.f32.gmra.mxu0 %v3333
      %v3445 = vpop.f32.mrf.mxu0
      %v3446 = vadd.f32 0.0, %v3445
      %3447 = vmatmul.f32.gmra.mxu0 %v3336
      %v3448 = vpop.f32.mrf.mxu0
      %v3449 = vadd.f32 0.0, %v3448
      %3450 = vmatmul.f32.gmra.mxu0 %v3339
      %v3451 = vpop.f32.mrf.mxu0
      %v3452 = vadd.f32 0.0, %v3451
      %3453 = vmatmul.f32.gmra.mxu0 %v3342
      %v3454 = vpop.f32.mrf.mxu0
      %v3455 = vadd.f32 0.0, %v3454
      %3456 = vmatmul.f32.gmra.mxu0 %v3345
      %v3457 = vpop.f32.mrf.mxu0
      %v3458 = vadd.f32 0.0, %v3457
      %3459 = vmatmul.f32.gmra.mxu0 %v3348
      %v3460 = vpop.f32.mrf.mxu0
      %v3461 = vadd.f32 0.0, %v3460
      %3462 = vmatmul.f32.gmra.mxu0 %v3351
      %v3463 = vpop.f32.mrf.mxu0
      %v3464 = vadd.f32 0.0, %v3463
      %3465 = vdwg.mxu0
      %v3466 = vadd.f32 %v3184, %v3371
      %v3467 = vadd.f32 %v3185, %v3374
      %v3468 = vadd.f32 %v3186, %v3377
      %v3469 = vadd.f32 %v3187, %v3380
      %v3470 = vadd.f32 %v3188, %v3383
      %v3471 = vadd.f32 %v3189, %v3386
      %v3472 = vadd.f32 %v3190, %v3389
      %v3473 = vadd.f32 %v3191, %v3392
      %v3474 = vadd.f32 %v3192, %v3395
      %v3475 = vadd.f32 %v3193, %v3398
      %v3476 = vadd.f32 %v3194, %v3401
      %v3477 = vadd.f32 %v3195, %v3404
      %v3478 = vadd.f32 %v3196, %v3407
      %v3479 = vadd.f32 %v3197, %v3410
      %v3480 = vadd.f32 %v3198, %v3413
      %v3481 = vadd.f32 %v3199, %v3416
      %v3482 = vadd.f32 %v3200, %v3419
      %v3483 = vadd.f32 %v3201, %v3422
      %v3484 = vadd.f32 %v3202, %v3425
      %v3485 = vadd.f32 %v3203, %v3428
      %v3486 = vadd.f32 %v3204, %v3431
      %v3487 = vadd.f32 %v3205, %v3434
      %v3488 = vadd.f32 %v3206, %v3437
      %v3489 = vadd.f32 %v3207, %v3440
      %v3490 = vadd.f32 %v3208, %v3443
      %v3491 = vadd.f32 %v3209, %v3446
      %v3492 = vadd.f32 %v3210, %v3449
      %v3493 = vadd.f32 %v3211, %v3452
      %v3494 = vadd.f32 %v3212, %v3455
      %v3495 = vadd.f32 %v3213, %v3458
      %v3496 = vadd.f32 %v3214, %v3461
      %v3497 = vadd.f32 %v3215, %v3464
      %v3498 = vadd.f32 %v3466, %v1238
      %v3499 = vadd.f32 %v3467, %v1238
      %v3500 = vadd.f32 %v3468, %v1238
      %v3501 = vadd.f32 %v3469, %v1238
      %v3502 = vadd.f32 %v3470, %v1238
      %v3503 = vadd.f32 %v3471, %v1238
      %v3504 = vadd.f32 %v3472, %v1238
      %v3505 = vadd.f32 %v3473, %v1238
      %v3506 = vadd.f32 %v3474, %v1238
      %v3507 = vadd.f32 %v3475, %v1238
      %v3508 = vadd.f32 %v3476, %v1238
      %v3509 = vadd.f32 %v3477, %v1238
      %v3510 = vadd.f32 %v3478, %v1238
      %v3511 = vadd.f32 %v3479, %v1238
      %v3512 = vadd.f32 %v3480, %v1238
      %v3513 = vadd.f32 %v3481, %v1238
      %v3514 = vadd.f32 %v3482, %v1238
      %v3515 = vadd.f32 %v3483, %v1238
      %v3516 = vadd.f32 %v3484, %v1238
      %v3517 = vadd.f32 %v3485, %v1238
      %v3518 = vadd.f32 %v3486, %v1238
      %v3519 = vadd.f32 %v3487, %v1238
      %v3520 = vadd.f32 %v3488, %v1238
      %v3521 = vadd.f32 %v3489, %v1238
      %v3522 = vadd.f32 %v3490, %v1238
      %v3523 = vadd.f32 %v3491, %v1238
      %v3524 = vadd.f32 %v3492, %v1238
      %v3525 = vadd.f32 %v3493, %v1238
      %v3526 = vadd.f32 %v3494, %v1238
      %v3527 = vadd.f32 %v3495, %v1238
      %v3528 = vadd.f32 %v3496, %v1238
      %v3529 = vadd.f32 %v3497, %v1238
      %s3530 = scalar_lea.vmem %s170, 512
      %3531 = vst.msk [vmem:[%s3530] sm:$0xff] %vm253, %v3498
      %3532 = vst.msk [vmem:[%s3530 + $0x8] sm:$0xff] %vm253, %v3499
      %3533 = vst.msk [vmem:[%s3530 + $0x10] sm:$0xff] %vm253, %v3500
      %3534 = vst.msk [vmem:[%s3530 + $0x18] sm:$0xff] %vm253, %v3501
      %3535 = vst.msk [vmem:[%s3530 + $0x20] sm:$0xff] %vm253, %v3502
      %3536 = vst.msk [vmem:[%s3530 + $0x28] sm:$0xff] %vm253, %v3503
      %3537 = vst.msk [vmem:[%s3530 + $0x30] sm:$0xff] %vm253, %v3504
      %3538 = vst.msk [vmem:[%s3530 + $0x38] sm:$0xff] %vm253, %v3505
      %3539 = vst.msk [vmem:[%s3530 + $0x40] sm:$0xff] %vm253, %v3506
      %3540 = vst.msk [vmem:[%s3530 + $0x48] sm:$0xff] %vm253, %v3507
      %3541 = vst.msk [vmem:[%s3530 + $0x50] sm:$0xff] %vm253, %v3508
      %3542 = vst.msk [vmem:[%s3530 + $0x58] sm:$0xff] %vm253, %v3509
      %3543 = vst.msk [vmem:[%s3530 + $0x60] sm:$0xff] %vm253, %v3510
      %3544 = vst.msk [vmem:[%s3530 + $0x68] sm:$0xff] %vm253, %v3511
      %3545 = vst.msk [vmem:[%s3530 + $0x70] sm:$0xff] %vm253, %v3512
      %3546 = vst.msk [vmem:[%s3530 + $0x78] sm:$0xff] %vm253, %v3513
      %3547 = vst.msk [vmem:[%s3530 + $0x80] sm:$0xff] %vm253, %v3514
      %3548 = vst.msk [vmem:[%s3530 + $0x88] sm:$0xff] %vm253, %v3515
      %3549 = vst.msk [vmem:[%s3530 + $0x90] sm:$0xff] %vm253, %v3516
      %3550 = vst.msk [vmem:[%s3530 + $0x98] sm:$0xff] %vm253, %v3517
      %3551 = vst.msk [vmem:[%s3530 + $0xa0] sm:$0xff] %vm253, %v3518
      %3552 = vst.msk [vmem:[%s3530 + $0xa8] sm:$0xff] %vm253, %v3519
      %3553 = vst.msk [vmem:[%s3530 + $0xb0] sm:$0xff] %vm253, %v3520
      %3554 = vst.msk [vmem:[%s3530 + $0xb8] sm:$0xff] %vm253, %v3521
      %3555 = vst.msk [vmem:[%s3530 + $0xc0] sm:$0xff] %vm253, %v3522
      %3556 = vst.msk [vmem:[%s3530 + $0xc8] sm:$0xff] %vm253, %v3523
      %3557 = vst.msk [vmem:[%s3530 + $0xd0] sm:$0xff] %vm253, %v3524
      %3558 = vst.msk [vmem:[%s3530 + $0xd8] sm:$0xff] %vm253, %v3525
      %3559 = vst.msk [vmem:[%s3530 + $0xe0] sm:$0xff] %vm253, %v3526
      %3560 = vst.msk [vmem:[%s3530 + $0xe8] sm:$0xff] %vm253, %v3527
      %3561 = vst.msk [vmem:[%s3530 + $0xf0] sm:$0xff] %vm253, %v3528
      %3562 = vst.msk [vmem:[%s3530 + $0xf8] sm:$0xff] %vm253, %v3529
      %v3563 = vld [vmem:[%s672 + $0x1] sm:$0xff]
      %v3564 = vld [vmem:[%s672 + $0x9] sm:$0xff]
      %v3565 = vld [vmem:[%s672 + $0x19] sm:$0xff]
      %v3566 = vld [vmem:[%s672 + $0x21] sm:$0xff]
      %v3567 = vld [vmem:[%s672 + $0x31] sm:$0xff]
      %v3568 = vld [vmem:[%s672 + $0x39] sm:$0xff]
      %v3569 = vld [vmem:[%s672 + $0x49] sm:$0xff]
      %v3570 = vld [vmem:[%s672 + $0x51] sm:$0xff]
      %v3571 = vld [vmem:[%s672 + $0x61] sm:$0xff]
      %v3572 = vld [vmem:[%s672 + $0x69] sm:$0xff]
      %v3573 = vld [vmem:[%s672 + $0x79] sm:$0xff]
      %v3574 = vld [vmem:[%s672 + $0x81] sm:$0xff]
      %v3575 = vld [vmem:[%s672 + $0x91] sm:$0xff]
      %v3576 = vld [vmem:[%s672 + $0x99] sm:$0xff]
      %v3577 = vld [vmem:[%s672 + $0xa9] sm:$0xff]
      %v3578 = vld [vmem:[%s672 + $0xb1] sm:$0xff]
      %v3579 = vld [vmem:[%s672 + $0xc1] sm:$0xff]
      %v3580 = vld [vmem:[%s672 + $0xc9] sm:$0xff]
      %v3581 = vld [vmem:[%s672 + $0xd9] sm:$0xff]
      %v3582 = vld [vmem:[%s672 + $0xe1] sm:$0xff]
      %v3583 = vld [vmem:[%s672 + $0xf1] sm:$0xff]
      %v3584 = vld [vmem:[%s672 + $0xf9] sm:$0xff]
      %v3585 = vld [vmem:[%s672 + $0x109] sm:$0xff]
      %v3586 = vld [vmem:[%s672 + $0x111] sm:$0xff]
      %v3587 = vld [vmem:[%s672 + $0x121] sm:$0xff]
      %v3588 = vld [vmem:[%s672 + $0x129] sm:$0xff]
      %v3589 = vld [vmem:[%s672 + $0x139] sm:$0xff]
      %v3590 = vld [vmem:[%s672 + $0x141] sm:$0xff]
      %v3591 = vld [vmem:[%s672 + $0x151] sm:$0xff]
      %v3592 = vld [vmem:[%s672 + $0x159] sm:$0xff]
      %v3593 = vld [vmem:[%s672 + $0x169] sm:$0xff]
      %v3594 = vld [vmem:[%s672 + $0x171] sm:$0xff]
      %s3595 = scalar_lea.vmem %s1, 768
      %v3596 = vld [vmem:[%s3595] sm:$0xff]
      %v3597 = vld [vmem:[%s3595 + $0x8] sm:$0xff]
      %v3598 = vld [vmem:[%s3595 + $0x10] sm:$0xff]
      %v3599 = vld [vmem:[%s3595 + $0x18] sm:$0xff]
      %v3600 = vld [vmem:[%s3595 + $0x20] sm:$0xff]
      %v3601 = vld [vmem:[%s3595 + $0x28] sm:$0xff]
      %v3602 = vld [vmem:[%s3595 + $0x30] sm:$0xff]
      %v3603 = vld [vmem:[%s3595 + $0x38] sm:$0xff]
      %v3604 = vld [vmem:[%s672 + $0x2] sm:$0xff]
      %v3605 = vld [vmem:[%s672 + $0xa] sm:$0xff]
      %v3606 = vld [vmem:[%s672 + $0x1a] sm:$0xff]
      %v3607 = vld [vmem:[%s672 + $0x22] sm:$0xff]
      %v3608 = vld [vmem:[%s672 + $0x32] sm:$0xff]
      %v3609 = vld [vmem:[%s672 + $0x3a] sm:$0xff]
      %v3610 = vld [vmem:[%s672 + $0x4a] sm:$0xff]
      %v3611 = vld [vmem:[%s672 + $0x52] sm:$0xff]
      %v3612 = vld [vmem:[%s672 + $0x62] sm:$0xff]
      %v3613 = vld [vmem:[%s672 + $0x6a] sm:$0xff]
      %v3614 = vld [vmem:[%s672 + $0x7a] sm:$0xff]
      %v3615 = vld [vmem:[%s672 + $0x82] sm:$0xff]
      %v3616 = vld [vmem:[%s672 + $0x92] sm:$0xff]
      %v3617 = vld [vmem:[%s672 + $0x9a] sm:$0xff]
      %v3618 = vld [vmem:[%s672 + $0xaa] sm:$0xff]
      %v3619 = vld [vmem:[%s672 + $0xb2] sm:$0xff]
      %v3620 = vld [vmem:[%s672 + $0xc2] sm:$0xff]
      %v3621 = vld [vmem:[%s672 + $0xca] sm:$0xff]
      %v3622 = vld [vmem:[%s672 + $0xda] sm:$0xff]
      %v3623 = vld [vmem:[%s672 + $0xe2] sm:$0xff]
      %v3624 = vld [vmem:[%s672 + $0xf2] sm:$0xff]
      %v3625 = vld [vmem:[%s672 + $0xfa] sm:$0xff]
      %v3626 = vld [vmem:[%s672 + $0x10a] sm:$0xff]
      %v3627 = vld [vmem:[%s672 + $0x112] sm:$0xff]
      %v3628 = vld [vmem:[%s672 + $0x122] sm:$0xff]
      %v3629 = vld [vmem:[%s672 + $0x12a] sm:$0xff]
      %v3630 = vld [vmem:[%s672 + $0x13a] sm:$0xff]
      %v3631 = vld [vmem:[%s672 + $0x142] sm:$0xff]
      %v3632 = vld [vmem:[%s672 + $0x152] sm:$0xff]
      %v3633 = vld [vmem:[%s672 + $0x15a] sm:$0xff]
      %v3634 = vld [vmem:[%s672 + $0x16a] sm:$0xff]
      %v3635 = vld [vmem:[%s672 + $0x172] sm:$0xff]
      %s3636 = scalar_lea.vmem %s1, 832
      %v3637 = vld [vmem:[%s3636] sm:$0xff]
      %v3638 = vld [vmem:[%s3636 + $0x8] sm:$0xff]
      %v3639 = vld [vmem:[%s3636 + $0x10] sm:$0xff]
      %v3640 = vld [vmem:[%s3636 + $0x18] sm:$0xff]
      %v3641 = vld [vmem:[%s3636 + $0x20] sm:$0xff]
      %v3642 = vld [vmem:[%s3636 + $0x28] sm:$0xff]
      %v3643 = vld [vmem:[%s3636 + $0x30] sm:$0xff]
      %v3644 = vld [vmem:[%s3636 + $0x38] sm:$0xff]
      %v3646 = vsel %vm253, %v3604, 0
      %v3649 = vsel %vm253, %v3605, 0
      %v3652 = vsel %vm253, %v3606, 0
      %v3655 = vsel %vm253, %v3607, 0
      %v3658 = vsel %vm253, %v3608, 0
      %v3661 = vsel %vm253, %v3609, 0
      %v3664 = vsel %vm253, %v3610, 0
      %v3667 = vsel %vm253, %v3611, 0
      %v3670 = vsel %vm253, %v3612, 0
      %v3673 = vsel %vm253, %v3613, 0
      %v3676 = vsel %vm253, %v3614, 0
      %v3679 = vsel %vm253, %v3615, 0
      %v3682 = vsel %vm253, %v3616, 0
      %v3685 = vsel %vm253, %v3617, 0
      %v3688 = vsel %vm253, %v3618, 0
      %v3691 = vsel %vm253, %v3619, 0
      %v3694 = vsel %vm253, %v3620, 0
      %v3697 = vsel %vm253, %v3621, 0
      %v3700 = vsel %vm253, %v3622, 0
      %v3703 = vsel %vm253, %v3623, 0
      %v3706 = vsel %vm253, %v3624, 0
      %v3709 = vsel %vm253, %v3625, 0
      %v3712 = vsel %vm253, %v3626, 0
      %v3715 = vsel %vm253, %v3627, 0
      %v3718 = vsel %vm253, %v3628, 0
      %v3721 = vsel %vm253, %v3629, 0
      %v3724 = vsel %vm253, %v3630, 0
      %v3727 = vsel %vm253, %v3631, 0
      %v3730 = vsel %vm253, %v3632, 0
      %v3733 = vsel %vm253, %v3633, 0
      %v3736 = vsel %vm253, %v3634, 0
      %v3739 = vsel %vm253, %v3635, 0
      %3741 = vmatpush.msra.mxu0 0.0
      %3742 = vmatpush.msra.mxu0 0.0
      %3743 = vmatpush.msra.mxu0 0.0
      %3744 = vmatpush.msra.mxu0 0.0
      %3745 = vmatpush.msra.mxu0 0.0
      %3746 = vmatpush.msra.mxu0 0.0
      %3747 = vmatpush.msra.mxu0 0.0
      %3748 = vmatpush.msra.mxu0 0.0
      %3749 = vmatpush.msra.mxu0 %v3644
      %3750 = vmatpush.msra.mxu0 %v3643
      %3751 = vmatpush.msra.mxu0 %v3642
      %3752 = vmatpush.msra.mxu0 %v3641
      %3753 = vmatpush.msra.mxu0 %v3640
      %3754 = vmatpush.msra.mxu0 %v3639
      %3755 = vmatpush.msra.mxu0 %v3638
      %3756 = vmatpush.msra.mxu0 %v3637
      %3757 = vmatmul.f32.gmra.mxu0 %v3646
      %v3758 = vpop.f32.mrf.mxu0
      %v3759 = vadd.f32 0.0, %v3758
      %3760 = vmatmul.f32.gmra.mxu0 %v3649
      %v3761 = vpop.f32.mrf.mxu0
      %v3762 = vadd.f32 0.0, %v3761
      %3763 = vmatmul.f32.gmra.mxu0 %v3652
      %v3764 = vpop.f32.mrf.mxu0
      %v3765 = vadd.f32 0.0, %v3764
      %3766 = vmatmul.f32.gmra.mxu0 %v3655
      %v3767 = vpop.f32.mrf.mxu0
      %v3768 = vadd.f32 0.0, %v3767
      %3769 = vmatmul.f32.gmra.mxu0 %v3658
      %v3770 = vpop.f32.mrf.mxu0
      %v3771 = vadd.f32 0.0, %v3770
      %3772 = vmatmul.f32.gmra.mxu0 %v3661
      %v3773 = vpop.f32.mrf.mxu0
      %v3774 = vadd.f32 0.0, %v3773
      %3775 = vmatmul.f32.gmra.mxu0 %v3664
      %v3776 = vpop.f32.mrf.mxu0
      %v3777 = vadd.f32 0.0, %v3776
      %3778 = vmatmul.f32.gmra.mxu0 %v3667
      %v3779 = vpop.f32.mrf.mxu0
      %v3780 = vadd.f32 0.0, %v3779
      %3781 = vmatmul.f32.gmra.mxu0 %v3670
      %v3782 = vpop.f32.mrf.mxu0
      %v3783 = vadd.f32 0.0, %v3782
      %3784 = vmatmul.f32.gmra.mxu0 %v3673
      %v3785 = vpop.f32.mrf.mxu0
      %v3786 = vadd.f32 0.0, %v3785
      %3787 = vmatmul.f32.gmra.mxu0 %v3676
      %v3788 = vpop.f32.mrf.mxu0
      %v3789 = vadd.f32 0.0, %v3788
      %3790 = vmatmul.f32.gmra.mxu0 %v3679
      %v3791 = vpop.f32.mrf.mxu0
      %v3792 = vadd.f32 0.0, %v3791
      %3793 = vmatmul.f32.gmra.mxu0 %v3682
      %v3794 = vpop.f32.mrf.mxu0
      %v3795 = vadd.f32 0.0, %v3794
      %3796 = vmatmul.f32.gmra.mxu0 %v3685
      %v3797 = vpop.f32.mrf.mxu0
      %v3798 = vadd.f32 0.0, %v3797
      %3799 = vmatmul.f32.gmra.mxu0 %v3688
      %v3800 = vpop.f32.mrf.mxu0
      %v3801 = vadd.f32 0.0, %v3800
      %3802 = vmatmul.f32.gmra.mxu0 %v3691
      %v3803 = vpop.f32.mrf.mxu0
      %v3804 = vadd.f32 0.0, %v3803
      %3805 = vmatmul.f32.gmra.mxu0 %v3694
      %v3806 = vpop.f32.mrf.mxu0
      %v3807 = vadd.f32 0.0, %v3806
      %3808 = vmatmul.f32.gmra.mxu0 %v3697
      %v3809 = vpop.f32.mrf.mxu0
      %v3810 = vadd.f32 0.0, %v3809
      %3811 = vmatmul.f32.gmra.mxu0 %v3700
      %v3812 = vpop.f32.mrf.mxu0
      %v3813 = vadd.f32 0.0, %v3812
      %3814 = vmatmul.f32.gmra.mxu0 %v3703
      %v3815 = vpop.f32.mrf.mxu0
      %v3816 = vadd.f32 0.0, %v3815
      %3817 = vmatmul.f32.gmra.mxu0 %v3706
      %v3818 = vpop.f32.mrf.mxu0
      %v3819 = vadd.f32 0.0, %v3818
      %3820 = vmatmul.f32.gmra.mxu0 %v3709
      %v3821 = vpop.f32.mrf.mxu0
      %v3822 = vadd.f32 0.0, %v3821
      %3823 = vmatmul.f32.gmra.mxu0 %v3712
      %v3824 = vpop.f32.mrf.mxu0
      %v3825 = vadd.f32 0.0, %v3824
      %3826 = vmatmul.f32.gmra.mxu0 %v3715
      %v3827 = vpop.f32.mrf.mxu0
      %v3828 = vadd.f32 0.0, %v3827
      %3829 = vmatmul.f32.gmra.mxu0 %v3718
      %v3830 = vpop.f32.mrf.mxu0
      %v3831 = vadd.f32 0.0, %v3830
      %3832 = vmatmul.f32.gmra.mxu0 %v3721
      %v3833 = vpop.f32.mrf.mxu0
      %v3834 = vadd.f32 0.0, %v3833
      %3835 = vmatmul.f32.gmra.mxu0 %v3724
      %v3836 = vpop.f32.mrf.mxu0
      %v3837 = vadd.f32 0.0, %v3836
      %3838 = vmatmul.f32.gmra.mxu0 %v3727
      %v3839 = vpop.f32.mrf.mxu0
      %v3840 = vadd.f32 0.0, %v3839
      %3841 = vmatmul.f32.gmra.mxu0 %v3730
      %v3842 = vpop.f32.mrf.mxu0
      %v3843 = vadd.f32 0.0, %v3842
      %3844 = vmatmul.f32.gmra.mxu0 %v3733
      %v3845 = vpop.f32.mrf.mxu0
      %v3846 = vadd.f32 0.0, %v3845
      %3847 = vmatmul.f32.gmra.mxu0 %v3736
      %v3848 = vpop.f32.mrf.mxu0
      %v3849 = vadd.f32 0.0, %v3848
      %3850 = vmatmul.f32.gmra.mxu0 %v3739
      %v3851 = vpop.f32.mrf.mxu0
      %v3852 = vadd.f32 0.0, %v3851
      %3853 = vdwg.mxu0
      %v3855 = vsel %vm253, %v3563, 0
      %v3858 = vsel %vm253, %v3564, 0
      %v3861 = vsel %vm253, %v3565, 0
      %v3864 = vsel %vm253, %v3566, 0
      %v3867 = vsel %vm253, %v3567, 0
      %v3870 = vsel %vm253, %v3568, 0
      %v3873 = vsel %vm253, %v3569, 0
      %v3876 = vsel %vm253, %v3570, 0
      %v3879 = vsel %vm253, %v3571, 0
      %v3882 = vsel %vm253, %v3572, 0
      %v3885 = vsel %vm253, %v3573, 0
      %v3888 = vsel %vm253, %v3574, 0
      %v3891 = vsel %vm253, %v3575, 0
      %v3894 = vsel %vm253, %v3576, 0
      %v3897 = vsel %vm253, %v3577, 0
      %v3900 = vsel %vm253, %v3578, 0
      %v3903 = vsel %vm253, %v3579, 0
      %v3906 = vsel %vm253, %v3580, 0
      %v3909 = vsel %vm253, %v3581, 0
      %v3912 = vsel %vm253, %v3582, 0
      %v3915 = vsel %vm253, %v3583, 0
      %v3918 = vsel %vm253, %v3584, 0
      %v3921 = vsel %vm253, %v3585, 0
      %v3924 = vsel %vm253, %v3586, 0
      %v3927 = vsel %vm253, %v3587, 0
      %v3930 = vsel %vm253, %v3588, 0
      %v3933 = vsel %vm253, %v3589, 0
      %v3936 = vsel %vm253, %v3590, 0
      %v3939 = vsel %vm253, %v3591, 0
      %v3942 = vsel %vm253, %v3592, 0
      %v3945 = vsel %vm253, %v3593, 0
      %v3948 = vsel %vm253, %v3594, 0
      %3950 = vmatpush.msra.mxu0 0.0
      %3951 = vmatpush.msra.mxu0 0.0
      %3952 = vmatpush.msra.mxu0 0.0
      %3953 = vmatpush.msra.mxu0 0.0
      %3954 = vmatpush.msra.mxu0 0.0
      %3955 = vmatpush.msra.mxu0 0.0
      %3956 = vmatpush.msra.mxu0 0.0
      %3957 = vmatpush.msra.mxu0 0.0
      %3958 = vmatpush.msra.mxu0 %v3603
      %3959 = vmatpush.msra.mxu0 %v3602
      %3960 = vmatpush.msra.mxu0 %v3601
      %3961 = vmatpush.msra.mxu0 %v3600
      %3962 = vmatpush.msra.mxu0 %v3599
      %3963 = vmatpush.msra.mxu0 %v3598
      %3964 = vmatpush.msra.mxu0 %v3597
      %3965 = vmatpush.msra.mxu0 %v3596
      %3966 = vmatmul.f32.gmra.mxu0 %v3855
      %v3967 = vpop.f32.mrf.mxu0
      %v3968 = vadd.f32 %v3759, %v3967
      %3969 = vmatmul.f32.gmra.mxu0 %v3858
      %v3970 = vpop.f32.mrf.mxu0
      %v3971 = vadd.f32 %v3762, %v3970
      %3972 = vmatmul.f32.gmra.mxu0 %v3861
      %v3973 = vpop.f32.mrf.mxu0
      %v3974 = vadd.f32 %v3765, %v3973
      %3975 = vmatmul.f32.gmra.mxu0 %v3864
      %v3976 = vpop.f32.mrf.mxu0
      %v3977 = vadd.f32 %v3768, %v3976
      %3978 = vmatmul.f32.gmra.mxu0 %v3867
      %v3979 = vpop.f32.mrf.mxu0
      %v3980 = vadd.f32 %v3771, %v3979
      %3981 = vmatmul.f32.gmra.mxu0 %v3870
      %v3982 = vpop.f32.mrf.mxu0
      %v3983 = vadd.f32 %v3774, %v3982
      %3984 = vmatmul.f32.gmra.mxu0 %v3873
      %v3985 = vpop.f32.mrf.mxu0
      %v3986 = vadd.f32 %v3777, %v3985
      %3987 = vmatmul.f32.gmra.mxu0 %v3876
      %v3988 = vpop.f32.mrf.mxu0
      %v3989 = vadd.f32 %v3780, %v3988
      %3990 = vmatmul.f32.gmra.mxu0 %v3879
      %v3991 = vpop.f32.mrf.mxu0
      %v3992 = vadd.f32 %v3783, %v3991
      %3993 = vmatmul.f32.gmra.mxu0 %v3882
      %v3994 = vpop.f32.mrf.mxu0
      %v3995 = vadd.f32 %v3786, %v3994
      %3996 = vmatmul.f32.gmra.mxu0 %v3885
      %v3997 = vpop.f32.mrf.mxu0
      %v3998 = vadd.f32 %v3789, %v3997
      %3999 = vmatmul.f32.gmra.mxu0 %v3888
      %v4000 = vpop.f32.mrf.mxu0
      %v4001 = vadd.f32 %v3792, %v4000
      %4002 = vmatmul.f32.gmra.mxu0 %v3891
      %v4003 = vpop.f32.mrf.mxu0
      %v4004 = vadd.f32 %v3795, %v4003
      %4005 = vmatmul.f32.gmra.mxu0 %v3894
      %v4006 = vpop.f32.mrf.mxu0
      %v4007 = vadd.f32 %v3798, %v4006
      %4008 = vmatmul.f32.gmra.mxu0 %v3897
      %v4009 = vpop.f32.mrf.mxu0
      %v4010 = vadd.f32 %v3801, %v4009
      %4011 = vmatmul.f32.gmra.mxu0 %v3900
      %v4012 = vpop.f32.mrf.mxu0
      %v4013 = vadd.f32 %v3804, %v4012
      %4014 = vmatmul.f32.gmra.mxu0 %v3903
      %v4015 = vpop.f32.mrf.mxu0
      %v4016 = vadd.f32 %v3807, %v4015
      %4017 = vmatmul.f32.gmra.mxu0 %v3906
      %v4018 = vpop.f32.mrf.mxu0
      %v4019 = vadd.f32 %v3810, %v4018
      %4020 = vmatmul.f32.gmra.mxu0 %v3909
      %v4021 = vpop.f32.mrf.mxu0
      %v4022 = vadd.f32 %v3813, %v4021
      %4023 = vmatmul.f32.gmra.mxu0 %v3912
      %v4024 = vpop.f32.mrf.mxu0
      %v4025 = vadd.f32 %v3816, %v4024
      %4026 = vmatmul.f32.gmra.mxu0 %v3915
      %v4027 = vpop.f32.mrf.mxu0
      %v4028 = vadd.f32 %v3819, %v4027
      %4029 = vmatmul.f32.gmra.mxu0 %v3918
      %v4030 = vpop.f32.mrf.mxu0
      %v4031 = vadd.f32 %v3822, %v4030
      %4032 = vmatmul.f32.gmra.mxu0 %v3921
      %v4033 = vpop.f32.mrf.mxu0
      %v4034 = vadd.f32 %v3825, %v4033
      %4035 = vmatmul.f32.gmra.mxu0 %v3924
      %v4036 = vpop.f32.mrf.mxu0
      %v4037 = vadd.f32 %v3828, %v4036
      %4038 = vmatmul.f32.gmra.mxu0 %v3927
      %v4039 = vpop.f32.mrf.mxu0
      %v4040 = vadd.f32 %v3831, %v4039
      %4041 = vmatmul.f32.gmra.mxu0 %v3930
      %v4042 = vpop.f32.mrf.mxu0
      %v4043 = vadd.f32 %v3834, %v4042
      %4044 = vmatmul.f32.gmra.mxu0 %v3933
      %v4045 = vpop.f32.mrf.mxu0
      %v4046 = vadd.f32 %v3837, %v4045
      %4047 = vmatmul.f32.gmra.mxu0 %v3936
      %v4048 = vpop.f32.mrf.mxu0
      %v4049 = vadd.f32 %v3840, %v4048
      %4050 = vmatmul.f32.gmra.mxu0 %v3939
      %v4051 = vpop.f32.mrf.mxu0
      %v4052 = vadd.f32 %v3843, %v4051
      %4053 = vmatmul.f32.gmra.mxu0 %v3942
      %v4054 = vpop.f32.mrf.mxu0
      %v4055 = vadd.f32 %v3846, %v4054
      %4056 = vmatmul.f32.gmra.mxu0 %v3945
      %v4057 = vpop.f32.mrf.mxu0
      %v4058 = vadd.f32 %v3849, %v4057
      %4059 = vmatmul.f32.gmra.mxu0 %v3948
      %v4060 = vpop.f32.mrf.mxu0
      %v4061 = vadd.f32 %v3852, %v4060
      %4062 = vdwg.mxu0
      %v4063 = vld [vmem:[%s2933 + $0x1] sm:$0xff]
      %v4064 = vld [vmem:[%s2933 + $0x9] sm:$0xff]
      %v4065 = vld [vmem:[%s2933 + $0x19] sm:$0xff]
      %v4066 = vld [vmem:[%s2933 + $0x21] sm:$0xff]
      %v4067 = vld [vmem:[%s2933 + $0x31] sm:$0xff]
      %v4068 = vld [vmem:[%s2933 + $0x39] sm:$0xff]
      %v4069 = vld [vmem:[%s2933 + $0x49] sm:$0xff]
      %v4070 = vld [vmem:[%s2933 + $0x51] sm:$0xff]
      %v4071 = vld [vmem:[%s2933 + $0x61] sm:$0xff]
      %v4072 = vld [vmem:[%s2933 + $0x69] sm:$0xff]
      %v4073 = vld [vmem:[%s2933 + $0x79] sm:$0xff]
      %v4074 = vld [vmem:[%s2933 + $0x81] sm:$0xff]
      %v4075 = vld [vmem:[%s2933 + $0x91] sm:$0xff]
      %v4076 = vld [vmem:[%s2933 + $0x99] sm:$0xff]
      %v4077 = vld [vmem:[%s2933 + $0xa9] sm:$0xff]
      %v4078 = vld [vmem:[%s2933 + $0xb1] sm:$0xff]
      %v4079 = vld [vmem:[%s2933 + $0xc1] sm:$0xff]
      %v4080 = vld [vmem:[%s2933 + $0xc9] sm:$0xff]
      %v4081 = vld [vmem:[%s2933 + $0xd9] sm:$0xff]
      %v4082 = vld [vmem:[%s2933 + $0xe1] sm:$0xff]
      %v4083 = vld [vmem:[%s2933 + $0xf1] sm:$0xff]
      %v4084 = vld [vmem:[%s2933 + $0xf9] sm:$0xff]
      %v4085 = vld [vmem:[%s2933 + $0x109] sm:$0xff]
      %v4086 = vld [vmem:[%s2933 + $0x111] sm:$0xff]
      %v4087 = vld [vmem:[%s2933 + $0x121] sm:$0xff]
      %v4088 = vld [vmem:[%s2933 + $0x129] sm:$0xff]
      %v4089 = vld [vmem:[%s2933 + $0x139] sm:$0xff]
      %v4090 = vld [vmem:[%s2933 + $0x141] sm:$0xff]
      %v4091 = vld [vmem:[%s2933 + $0x151] sm:$0xff]
      %v4092 = vld [vmem:[%s2933 + $0x159] sm:$0xff]
      %v4093 = vld [vmem:[%s2933 + $0x169] sm:$0xff]
      %v4094 = vld [vmem:[%s2933 + $0x171] sm:$0xff]
      %s4095 = scalar_lea.vmem %s1, 896
      %v4096 = vld [vmem:[%s4095] sm:$0xff]
      %v4097 = vld [vmem:[%s4095 + $0x8] sm:$0xff]
      %v4098 = vld [vmem:[%s4095 + $0x10] sm:$0xff]
      %v4099 = vld [vmem:[%s4095 + $0x18] sm:$0xff]
      %v4100 = vld [vmem:[%s4095 + $0x20] sm:$0xff]
      %v4101 = vld [vmem:[%s4095 + $0x28] sm:$0xff]
      %v4102 = vld [vmem:[%s4095 + $0x30] sm:$0xff]
      %v4103 = vld [vmem:[%s4095 + $0x38] sm:$0xff]
      %v4105 = vsel %vm253, %v4063, 0
      %v4108 = vsel %vm253, %v4064, 0
      %v4111 = vsel %vm253, %v4065, 0
      %v4114 = vsel %vm253, %v4066, 0
      %v4117 = vsel %vm253, %v4067, 0
      %v4120 = vsel %vm253, %v4068, 0
      %v4123 = vsel %vm253, %v4069, 0
      %v4126 = vsel %vm253, %v4070, 0
      %v4129 = vsel %vm253, %v4071, 0
      %v4132 = vsel %vm253, %v4072, 0
      %v4135 = vsel %vm253, %v4073, 0
      %v4138 = vsel %vm253, %v4074, 0
      %v4141 = vsel %vm253, %v4075, 0
      %v4144 = vsel %vm253, %v4076, 0
      %v4147 = vsel %vm253, %v4077, 0
      %v4150 = vsel %vm253, %v4078, 0
      %v4153 = vsel %vm253, %v4079, 0
      %v4156 = vsel %vm253, %v4080, 0
      %v4159 = vsel %vm253, %v4081, 0
      %v4162 = vsel %vm253, %v4082, 0
      %v4165 = vsel %vm253, %v4083, 0
      %v4168 = vsel %vm253, %v4084, 0
      %v4171 = vsel %vm253, %v4085, 0
      %v4174 = vsel %vm253, %v4086, 0
      %v4177 = vsel %vm253, %v4087, 0
      %v4180 = vsel %vm253, %v4088, 0
      %v4183 = vsel %vm253, %v4089, 0
      %v4186 = vsel %vm253, %v4090, 0
      %v4189 = vsel %vm253, %v4091, 0
      %v4192 = vsel %vm253, %v4092, 0
      %v4195 = vsel %vm253, %v4093, 0
      %v4198 = vsel %vm253, %v4094, 0
      %4200 = vmatpush.msra.mxu0 0.0
      %4201 = vmatpush.msra.mxu0 0.0
      %4202 = vmatpush.msra.mxu0 0.0
      %4203 = vmatpush.msra.mxu0 0.0
      %4204 = vmatpush.msra.mxu0 0.0
      %4205 = vmatpush.msra.mxu0 0.0
      %4206 = vmatpush.msra.mxu0 0.0
      %4207 = vmatpush.msra.mxu0 0.0
      %4208 = vmatpush.msra.mxu0 %v4103
      %4209 = vmatpush.msra.mxu0 %v4102
      %4210 = vmatpush.msra.mxu0 %v4101
      %4211 = vmatpush.msra.mxu0 %v4100
      %4212 = vmatpush.msra.mxu0 %v4099
      %4213 = vmatpush.msra.mxu0 %v4098
      %4214 = vmatpush.msra.mxu0 %v4097
      %4215 = vmatpush.msra.mxu0 %v4096
      %4216 = vmatmul.f32.gmra.mxu0 %v4105
      %v4217 = vpop.f32.mrf.mxu0
      %v4218 = vadd.f32 0.0, %v4217
      %4219 = vmatmul.f32.gmra.mxu0 %v4108
      %v4220 = vpop.f32.mrf.mxu0
      %v4221 = vadd.f32 0.0, %v4220
      %4222 = vmatmul.f32.gmra.mxu0 %v4111
      %v4223 = vpop.f32.mrf.mxu0
      %v4224 = vadd.f32 0.0, %v4223
      %4225 = vmatmul.f32.gmra.mxu0 %v4114
      %v4226 = vpop.f32.mrf.mxu0
      %v4227 = vadd.f32 0.0, %v4226
      %4228 = vmatmul.f32.gmra.mxu0 %v4117
      %v4229 = vpop.f32.mrf.mxu0
      %v4230 = vadd.f32 0.0, %v4229
      %4231 = vmatmul.f32.gmra.mxu0 %v4120
      %v4232 = vpop.f32.mrf.mxu0
      %v4233 = vadd.f32 0.0, %v4232
      %4234 = vmatmul.f32.gmra.mxu0 %v4123
      %v4235 = vpop.f32.mrf.mxu0
      %v4236 = vadd.f32 0.0, %v4235
      %4237 = vmatmul.f32.gmra.mxu0 %v4126
      %v4238 = vpop.f32.mrf.mxu0
      %v4239 = vadd.f32 0.0, %v4238
      %4240 = vmatmul.f32.gmra.mxu0 %v4129
      %v4241 = vpop.f32.mrf.mxu0
      %v4242 = vadd.f32 0.0, %v4241
      %4243 = vmatmul.f32.gmra.mxu0 %v4132
      %v4244 = vpop.f32.mrf.mxu0
      %v4245 = vadd.f32 0.0, %v4244
      %4246 = vmatmul.f32.gmra.mxu0 %v4135
      %v4247 = vpop.f32.mrf.mxu0
      %v4248 = vadd.f32 0.0, %v4247
      %4249 = vmatmul.f32.gmra.mxu0 %v4138
      %v4250 = vpop.f32.mrf.mxu0
      %v4251 = vadd.f32 0.0, %v4250
      %4252 = vmatmul.f32.gmra.mxu0 %v4141
      %v4253 = vpop.f32.mrf.mxu0
      %v4254 = vadd.f32 0.0, %v4253
      %4255 = vmatmul.f32.gmra.mxu0 %v4144
      %v4256 = vpop.f32.mrf.mxu0
      %v4257 = vadd.f32 0.0, %v4256
      %4258 = vmatmul.f32.gmra.mxu0 %v4147
      %v4259 = vpop.f32.mrf.mxu0
      %v4260 = vadd.f32 0.0, %v4259
      %4261 = vmatmul.f32.gmra.mxu0 %v4150
      %v4262 = vpop.f32.mrf.mxu0
      %v4263 = vadd.f32 0.0, %v4262
      %4264 = vmatmul.f32.gmra.mxu0 %v4153
      %v4265 = vpop.f32.mrf.mxu0
      %v4266 = vadd.f32 0.0, %v4265
      %4267 = vmatmul.f32.gmra.mxu0 %v4156
      %v4268 = vpop.f32.mrf.mxu0
      %v4269 = vadd.f32 0.0, %v4268
      %4270 = vmatmul.f32.gmra.mxu0 %v4159
      %v4271 = vpop.f32.mrf.mxu0
      %v4272 = vadd.f32 0.0, %v4271
      %4273 = vmatmul.f32.gmra.mxu0 %v4162
      %v4274 = vpop.f32.mrf.mxu0
      %v4275 = vadd.f32 0.0, %v4274
      %4276 = vmatmul.f32.gmra.mxu0 %v4165
      %v4277 = vpop.f32.mrf.mxu0
      %v4278 = vadd.f32 0.0, %v4277
      %4279 = vmatmul.f32.gmra.mxu0 %v4168
      %v4280 = vpop.f32.mrf.mxu0
      %v4281 = vadd.f32 0.0, %v4280
      %4282 = vmatmul.f32.gmra.mxu0 %v4171
      %v4283 = vpop.f32.mrf.mxu0
      %v4284 = vadd.f32 0.0, %v4283
      %4285 = vmatmul.f32.gmra.mxu0 %v4174
      %v4286 = vpop.f32.mrf.mxu0
      %v4287 = vadd.f32 0.0, %v4286
      %4288 = vmatmul.f32.gmra.mxu0 %v4177
      %v4289 = vpop.f32.mrf.mxu0
      %v4290 = vadd.f32 0.0, %v4289
      %4291 = vmatmul.f32.gmra.mxu0 %v4180
      %v4292 = vpop.f32.mrf.mxu0
      %v4293 = vadd.f32 0.0, %v4292
      %4294 = vmatmul.f32.gmra.mxu0 %v4183
      %v4295 = vpop.f32.mrf.mxu0
      %v4296 = vadd.f32 0.0, %v4295
      %4297 = vmatmul.f32.gmra.mxu0 %v4186
      %v4298 = vpop.f32.mrf.mxu0
      %v4299 = vadd.f32 0.0, %v4298
      %4300 = vmatmul.f32.gmra.mxu0 %v4189
      %v4301 = vpop.f32.mrf.mxu0
      %v4302 = vadd.f32 0.0, %v4301
      %4303 = vmatmul.f32.gmra.mxu0 %v4192
      %v4304 = vpop.f32.mrf.mxu0
      %v4305 = vadd.f32 0.0, %v4304
      %4306 = vmatmul.f32.gmra.mxu0 %v4195
      %v4307 = vpop.f32.mrf.mxu0
      %v4308 = vadd.f32 0.0, %v4307
      %4309 = vmatmul.f32.gmra.mxu0 %v4198
      %v4310 = vpop.f32.mrf.mxu0
      %v4311 = vadd.f32 0.0, %v4310
      %4312 = vdwg.mxu0
      %v4313 = vadd.f32 %v3968, %v4218
      %v4314 = vadd.f32 %v3971, %v4221
      %v4315 = vadd.f32 %v3974, %v4224
      %v4316 = vadd.f32 %v3977, %v4227
      %v4317 = vadd.f32 %v3980, %v4230
      %v4318 = vadd.f32 %v3983, %v4233
      %v4319 = vadd.f32 %v3986, %v4236
      %v4320 = vadd.f32 %v3989, %v4239
      %v4321 = vadd.f32 %v3992, %v4242
      %v4322 = vadd.f32 %v3995, %v4245
      %v4323 = vadd.f32 %v3998, %v4248
      %v4324 = vadd.f32 %v4001, %v4251
      %v4325 = vadd.f32 %v4004, %v4254
      %v4326 = vadd.f32 %v4007, %v4257
      %v4327 = vadd.f32 %v4010, %v4260
      %v4328 = vadd.f32 %v4013, %v4263
      %v4329 = vadd.f32 %v4016, %v4266
      %v4330 = vadd.f32 %v4019, %v4269
      %v4331 = vadd.f32 %v4022, %v4272
      %v4332 = vadd.f32 %v4025, %v4275
      %v4333 = vadd.f32 %v4028, %v4278
      %v4334 = vadd.f32 %v4031, %v4281
      %v4335 = vadd.f32 %v4034, %v4284
      %v4336 = vadd.f32 %v4037, %v4287
      %v4337 = vadd.f32 %v4040, %v4290
      %v4338 = vadd.f32 %v4043, %v4293
      %v4339 = vadd.f32 %v4046, %v4296
      %v4340 = vadd.f32 %v4049, %v4299
      %v4341 = vadd.f32 %v4052, %v4302
      %v4342 = vadd.f32 %v4055, %v4305
      %v4343 = vadd.f32 %v4058, %v4308
      %v4344 = vadd.f32 %v4061, %v4311
      %v4345 = vld [vmem:[%s2933 + $0x2] sm:$0xff]
      %v4346 = vld [vmem:[%s2933 + $0xa] sm:$0xff]
      %v4347 = vld [vmem:[%s2933 + $0x1a] sm:$0xff]
      %v4348 = vld [vmem:[%s2933 + $0x22] sm:$0xff]
      %v4349 = vld [vmem:[%s2933 + $0x32] sm:$0xff]
      %v4350 = vld [vmem:[%s2933 + $0x3a] sm:$0xff]
      %v4351 = vld [vmem:[%s2933 + $0x4a] sm:$0xff]
      %v4352 = vld [vmem:[%s2933 + $0x52] sm:$0xff]
      %v4353 = vld [vmem:[%s2933 + $0x62] sm:$0xff]
      %v4354 = vld [vmem:[%s2933 + $0x6a] sm:$0xff]
      %v4355 = vld [vmem:[%s2933 + $0x7a] sm:$0xff]
      %v4356 = vld [vmem:[%s2933 + $0x82] sm:$0xff]
      %v4357 = vld [vmem:[%s2933 + $0x92] sm:$0xff]
      %v4358 = vld [vmem:[%s2933 + $0x9a] sm:$0xff]
      %v4359 = vld [vmem:[%s2933 + $0xaa] sm:$0xff]
      %v4360 = vld [vmem:[%s2933 + $0xb2] sm:$0xff]
      %v4361 = vld [vmem:[%s2933 + $0xc2] sm:$0xff]
      %v4362 = vld [vmem:[%s2933 + $0xca] sm:$0xff]
      %v4363 = vld [vmem:[%s2933 + $0xda] sm:$0xff]
      %v4364 = vld [vmem:[%s2933 + $0xe2] sm:$0xff]
      %v4365 = vld [vmem:[%s2933 + $0xf2] sm:$0xff]
      %v4366 = vld [vmem:[%s2933 + $0xfa] sm:$0xff]
      %v4367 = vld [vmem:[%s2933 + $0x10a] sm:$0xff]
      %v4368 = vld [vmem:[%s2933 + $0x112] sm:$0xff]
      %v4369 = vld [vmem:[%s2933 + $0x122] sm:$0xff]
      %v4370 = vld [vmem:[%s2933 + $0x12a] sm:$0xff]
      %v4371 = vld [vmem:[%s2933 + $0x13a] sm:$0xff]
      %v4372 = vld [vmem:[%s2933 + $0x142] sm:$0xff]
      %v4373 = vld [vmem:[%s2933 + $0x152] sm:$0xff]
      %v4374 = vld [vmem:[%s2933 + $0x15a] sm:$0xff]
      %v4375 = vld [vmem:[%s2933 + $0x16a] sm:$0xff]
      %v4376 = vld [vmem:[%s2933 + $0x172] sm:$0xff]
      %s4377 = scalar_lea.vmem %s1, 960
      %v4378 = vld [vmem:[%s4377] sm:$0xff]
      %v4379 = vld [vmem:[%s4377 + $0x8] sm:$0xff]
      %v4380 = vld [vmem:[%s4377 + $0x10] sm:$0xff]
      %v4381 = vld [vmem:[%s4377 + $0x18] sm:$0xff]
      %v4382 = vld [vmem:[%s4377 + $0x20] sm:$0xff]
      %v4383 = vld [vmem:[%s4377 + $0x28] sm:$0xff]
      %v4384 = vld [vmem:[%s4377 + $0x30] sm:$0xff]
      %v4385 = vld [vmem:[%s4377 + $0x38] sm:$0xff]
      %v4387 = vsel %vm253, %v4345, 0
      %v4390 = vsel %vm253, %v4346, 0
      %v4393 = vsel %vm253, %v4347, 0
      %v4396 = vsel %vm253, %v4348, 0
      %v4399 = vsel %vm253, %v4349, 0
      %v4402 = vsel %vm253, %v4350, 0
      %v4405 = vsel %vm253, %v4351, 0
      %v4408 = vsel %vm253, %v4352, 0
      %v4411 = vsel %vm253, %v4353, 0
      %v4414 = vsel %vm253, %v4354, 0
      %v4417 = vsel %vm253, %v4355, 0
      %v4420 = vsel %vm253, %v4356, 0
      %v4423 = vsel %vm253, %v4357, 0
      %v4426 = vsel %vm253, %v4358, 0
      %v4429 = vsel %vm253, %v4359, 0
      %v4432 = vsel %vm253, %v4360, 0
      %v4435 = vsel %vm253, %v4361, 0
      %v4438 = vsel %vm253, %v4362, 0
      %v4441 = vsel %vm253, %v4363, 0
      %v4444 = vsel %vm253, %v4364, 0
      %v4447 = vsel %vm253, %v4365, 0
      %v4450 = vsel %vm253, %v4366, 0
      %v4453 = vsel %vm253, %v4367, 0
      %v4456 = vsel %vm253, %v4368, 0
      %v4459 = vsel %vm253, %v4369, 0
      %v4462 = vsel %vm253, %v4370, 0
      %v4465 = vsel %vm253, %v4371, 0
      %v4468 = vsel %vm253, %v4372, 0
      %v4471 = vsel %vm253, %v4373, 0
      %v4474 = vsel %vm253, %v4374, 0
      %v4477 = vsel %vm253, %v4375, 0
      %v4480 = vsel %vm253, %v4376, 0
      %4482 = vmatpush.msra.mxu0 0.0
      %4483 = vmatpush.msra.mxu0 0.0
      %4484 = vmatpush.msra.mxu0 0.0
      %4485 = vmatpush.msra.mxu0 0.0
      %4486 = vmatpush.msra.mxu0 0.0
      %4487 = vmatpush.msra.mxu0 0.0
      %4488 = vmatpush.msra.mxu0 0.0
      %4489 = vmatpush.msra.mxu0 0.0
      %4490 = vmatpush.msra.mxu0 %v4385
      %4491 = vmatpush.msra.mxu0 %v4384
      %4492 = vmatpush.msra.mxu0 %v4383
      %4493 = vmatpush.msra.mxu0 %v4382
      %4494 = vmatpush.msra.mxu0 %v4381
      %4495 = vmatpush.msra.mxu0 %v4380
      %4496 = vmatpush.msra.mxu0 %v4379
      %4497 = vmatpush.msra.mxu0 %v4378
      %4498 = vmatmul.f32.gmra.mxu0 %v4387
      %v4499 = vpop.f32.mrf.mxu0
      %v4500 = vadd.f32 0.0, %v4499
      %4501 = vmatmul.f32.gmra.mxu0 %v4390
      %v4502 = vpop.f32.mrf.mxu0
      %v4503 = vadd.f32 0.0, %v4502
      %4504 = vmatmul.f32.gmra.mxu0 %v4393
      %v4505 = vpop.f32.mrf.mxu0
      %v4506 = vadd.f32 0.0, %v4505
      %4507 = vmatmul.f32.gmra.mxu0 %v4396
      %v4508 = vpop.f32.mrf.mxu0
      %v4509 = vadd.f32 0.0, %v4508
      %4510 = vmatmul.f32.gmra.mxu0 %v4399
      %v4511 = vpop.f32.mrf.mxu0
      %v4512 = vadd.f32 0.0, %v4511
      %4513 = vmatmul.f32.gmra.mxu0 %v4402
      %v4514 = vpop.f32.mrf.mxu0
      %v4515 = vadd.f32 0.0, %v4514
      %4516 = vmatmul.f32.gmra.mxu0 %v4405
      %v4517 = vpop.f32.mrf.mxu0
      %v4518 = vadd.f32 0.0, %v4517
      %4519 = vmatmul.f32.gmra.mxu0 %v4408
      %v4520 = vpop.f32.mrf.mxu0
      %v4521 = vadd.f32 0.0, %v4520
      %4522 = vmatmul.f32.gmra.mxu0 %v4411
      %v4523 = vpop.f32.mrf.mxu0
      %v4524 = vadd.f32 0.0, %v4523
      %4525 = vmatmul.f32.gmra.mxu0 %v4414
      %v4526 = vpop.f32.mrf.mxu0
      %v4527 = vadd.f32 0.0, %v4526
      %4528 = vmatmul.f32.gmra.mxu0 %v4417
      %v4529 = vpop.f32.mrf.mxu0
      %v4530 = vadd.f32 0.0, %v4529
      %4531 = vmatmul.f32.gmra.mxu0 %v4420
      %v4532 = vpop.f32.mrf.mxu0
      %v4533 = vadd.f32 0.0, %v4532
      %4534 = vmatmul.f32.gmra.mxu0 %v4423
      %v4535 = vpop.f32.mrf.mxu0
      %v4536 = vadd.f32 0.0, %v4535
      %4537 = vmatmul.f32.gmra.mxu0 %v4426
      %v4538 = vpop.f32.mrf.mxu0
      %v4539 = vadd.f32 0.0, %v4538
      %4540 = vmatmul.f32.gmra.mxu0 %v4429
      %v4541 = vpop.f32.mrf.mxu0
      %v4542 = vadd.f32 0.0, %v4541
      %4543 = vmatmul.f32.gmra.mxu0 %v4432
      %v4544 = vpop.f32.mrf.mxu0
      %v4545 = vadd.f32 0.0, %v4544
      %4546 = vmatmul.f32.gmra.mxu0 %v4435
      %v4547 = vpop.f32.mrf.mxu0
      %v4548 = vadd.f32 0.0, %v4547
      %4549 = vmatmul.f32.gmra.mxu0 %v4438
      %v4550 = vpop.f32.mrf.mxu0
      %v4551 = vadd.f32 0.0, %v4550
      %4552 = vmatmul.f32.gmra.mxu0 %v4441
      %v4553 = vpop.f32.mrf.mxu0
      %v4554 = vadd.f32 0.0, %v4553
      %4555 = vmatmul.f32.gmra.mxu0 %v4444
      %v4556 = vpop.f32.mrf.mxu0
      %v4557 = vadd.f32 0.0, %v4556
      %4558 = vmatmul.f32.gmra.mxu0 %v4447
      %v4559 = vpop.f32.mrf.mxu0
      %v4560 = vadd.f32 0.0, %v4559
      %4561 = vmatmul.f32.gmra.mxu0 %v4450
      %v4562 = vpop.f32.mrf.mxu0
      %v4563 = vadd.f32 0.0, %v4562
      %4564 = vmatmul.f32.gmra.mxu0 %v4453
      %v4565 = vpop.f32.mrf.mxu0
      %v4566 = vadd.f32 0.0, %v4565
      %4567 = vmatmul.f32.gmra.mxu0 %v4456
      %v4568 = vpop.f32.mrf.mxu0
      %v4569 = vadd.f32 0.0, %v4568
      %4570 = vmatmul.f32.gmra.mxu0 %v4459
      %v4571 = vpop.f32.mrf.mxu0
      %v4572 = vadd.f32 0.0, %v4571
      %4573 = vmatmul.f32.gmra.mxu0 %v4462
      %v4574 = vpop.f32.mrf.mxu0
      %v4575 = vadd.f32 0.0, %v4574
      %4576 = vmatmul.f32.gmra.mxu0 %v4465
      %v4577 = vpop.f32.mrf.mxu0
      %v4578 = vadd.f32 0.0, %v4577
      %4579 = vmatmul.f32.gmra.mxu0 %v4468
      %v4580 = vpop.f32.mrf.mxu0
      %v4581 = vadd.f32 0.0, %v4580
      %4582 = vmatmul.f32.gmra.mxu0 %v4471
      %v4583 = vpop.f32.mrf.mxu0
      %v4584 = vadd.f32 0.0, %v4583
      %4585 = vmatmul.f32.gmra.mxu0 %v4474
      %v4586 = vpop.f32.mrf.mxu0
      %v4587 = vadd.f32 0.0, %v4586
      %4588 = vmatmul.f32.gmra.mxu0 %v4477
      %v4589 = vpop.f32.mrf.mxu0
      %v4590 = vadd.f32 0.0, %v4589
      %4591 = vmatmul.f32.gmra.mxu0 %v4480
      %v4592 = vpop.f32.mrf.mxu0
      %v4593 = vadd.f32 0.0, %v4592
      %4594 = vdwg.mxu0
      %v4595 = vadd.f32 %v4313, %v4500
      %v4596 = vadd.f32 %v4314, %v4503
      %v4597 = vadd.f32 %v4315, %v4506
      %v4598 = vadd.f32 %v4316, %v4509
      %v4599 = vadd.f32 %v4317, %v4512
      %v4600 = vadd.f32 %v4318, %v4515
      %v4601 = vadd.f32 %v4319, %v4518
      %v4602 = vadd.f32 %v4320, %v4521
      %v4603 = vadd.f32 %v4321, %v4524
      %v4604 = vadd.f32 %v4322, %v4527
      %v4605 = vadd.f32 %v4323, %v4530
      %v4606 = vadd.f32 %v4324, %v4533
      %v4607 = vadd.f32 %v4325, %v4536
      %v4608 = vadd.f32 %v4326, %v4539
      %v4609 = vadd.f32 %v4327, %v4542
      %v4610 = vadd.f32 %v4328, %v4545
      %v4611 = vadd.f32 %v4329, %v4548
      %v4612 = vadd.f32 %v4330, %v4551
      %v4613 = vadd.f32 %v4331, %v4554
      %v4614 = vadd.f32 %v4332, %v4557
      %v4615 = vadd.f32 %v4333, %v4560
      %v4616 = vadd.f32 %v4334, %v4563
      %v4617 = vadd.f32 %v4335, %v4566
      %v4618 = vadd.f32 %v4336, %v4569
      %v4619 = vadd.f32 %v4337, %v4572
      %v4620 = vadd.f32 %v4338, %v4575
      %v4621 = vadd.f32 %v4339, %v4578
      %v4622 = vadd.f32 %v4340, %v4581
      %v4623 = vadd.f32 %v4341, %v4584
      %v4624 = vadd.f32 %v4342, %v4587
      %v4625 = vadd.f32 %v4343, %v4590
      %v4626 = vadd.f32 %v4344, %v4593
      %v4627 = vadd.f32 %v4595, %v1238
      %v4628 = vadd.f32 %v4596, %v1238
      %v4629 = vadd.f32 %v4597, %v1238
      %v4630 = vadd.f32 %v4598, %v1238
      %v4631 = vadd.f32 %v4599, %v1238
      %v4632 = vadd.f32 %v4600, %v1238
      %v4633 = vadd.f32 %v4601, %v1238
      %v4634 = vadd.f32 %v4602, %v1238
      %v4635 = vadd.f32 %v4603, %v1238
      %v4636 = vadd.f32 %v4604, %v1238
      %v4637 = vadd.f32 %v4605, %v1238
      %v4638 = vadd.f32 %v4606, %v1238
      %v4639 = vadd.f32 %v4607, %v1238
      %v4640 = vadd.f32 %v4608, %v1238
      %v4641 = vadd.f32 %v4609, %v1238
      %v4642 = vadd.f32 %v4610, %v1238
      %v4643 = vadd.f32 %v4611, %v1238
      %v4644 = vadd.f32 %v4612, %v1238
      %v4645 = vadd.f32 %v4613, %v1238
      %v4646 = vadd.f32 %v4614, %v1238
      %v4647 = vadd.f32 %v4615, %v1238
      %v4648 = vadd.f32 %v4616, %v1238
      %v4649 = vadd.f32 %v4617, %v1238
      %v4650 = vadd.f32 %v4618, %v1238
      %v4651 = vadd.f32 %v4619, %v1238
      %v4652 = vadd.f32 %v4620, %v1238
      %v4653 = vadd.f32 %v4621, %v1238
      %v4654 = vadd.f32 %v4622, %v1238
      %v4655 = vadd.f32 %v4623, %v1238
      %v4656 = vadd.f32 %v4624, %v1238
      %v4657 = vadd.f32 %v4625, %v1238
      %v4658 = vadd.f32 %v4626, %v1238
      %s4659 = scalar_lea.vmem %s170, 768
      %4660 = vst.msk [vmem:[%s4659] sm:$0xff] %vm253, %v4627
      %4661 = vst.msk [vmem:[%s4659 + $0x8] sm:$0xff] %vm253, %v4628
      %4662 = vst.msk [vmem:[%s4659 + $0x10] sm:$0xff] %vm253, %v4629
      %4663 = vst.msk [vmem:[%s4659 + $0x18] sm:$0xff] %vm253, %v4630
      %4664 = vst.msk [vmem:[%s4659 + $0x20] sm:$0xff] %vm253, %v4631
      %4665 = vst.msk [vmem:[%s4659 + $0x28] sm:$0xff] %vm253, %v4632
      %4666 = vst.msk [vmem:[%s4659 + $0x30] sm:$0xff] %vm253, %v4633
      %4667 = vst.msk [vmem:[%s4659 + $0x38] sm:$0xff] %vm253, %v4634
      %4668 = vst.msk [vmem:[%s4659 + $0x40] sm:$0xff] %vm253, %v4635
      %4669 = vst.msk [vmem:[%s4659 + $0x48] sm:$0xff] %vm253, %v4636
      %4670 = vst.msk [vmem:[%s4659 + $0x50] sm:$0xff] %vm253, %v4637
      %4671 = vst.msk [vmem:[%s4659 + $0x58] sm:$0xff] %vm253, %v4638
      %4672 = vst.msk [vmem:[%s4659 + $0x60] sm:$0xff] %vm253, %v4639
      %4673 = vst.msk [vmem:[%s4659 + $0x68] sm:$0xff] %vm253, %v4640
      %4674 = vst.msk [vmem:[%s4659 + $0x70] sm:$0xff] %vm253, %v4641
      %4675 = vst.msk [vmem:[%s4659 + $0x78] sm:$0xff] %vm253, %v4642
      %4676 = vst.msk [vmem:[%s4659 + $0x80] sm:$0xff] %vm253, %v4643
      %4677 = vst.msk [vmem:[%s4659 + $0x88] sm:$0xff] %vm253, %v4644
      %4678 = vst.msk [vmem:[%s4659 + $0x90] sm:$0xff] %vm253, %v4645
      %4679 = vst.msk [vmem:[%s4659 + $0x98] sm:$0xff] %vm253, %v4646
      %4680 = vst.msk [vmem:[%s4659 + $0xa0] sm:$0xff] %vm253, %v4647
      %4681 = vst.msk [vmem:[%s4659 + $0xa8] sm:$0xff] %vm253, %v4648
      %4682 = vst.msk [vmem:[%s4659 + $0xb0] sm:$0xff] %vm253, %v4649
      %4683 = vst.msk [vmem:[%s4659 + $0xb8] sm:$0xff] %vm253, %v4650
      %4684 = vst.msk [vmem:[%s4659 + $0xc0] sm:$0xff] %vm253, %v4651
      %4685 = vst.msk [vmem:[%s4659 + $0xc8] sm:$0xff] %vm253, %v4652
      %4686 = vst.msk [vmem:[%s4659 + $0xd0] sm:$0xff] %vm253, %v4653
      %4687 = vst.msk [vmem:[%s4659 + $0xd8] sm:$0xff] %vm253, %v4654
      %4688 = vst.msk [vmem:[%s4659 + $0xe0] sm:$0xff] %vm253, %v4655
      %4689 = vst.msk [vmem:[%s4659 + $0xe8] sm:$0xff] %vm253, %v4656
      %4690 = vst.msk [vmem:[%s4659 + $0xf0] sm:$0xff] %vm253, %v4657
      %4691 = vst.msk [vmem:[%s4659 + $0xf8] sm:$0xff] %vm253, %v4658
      %p4692 = scmp.lt.s32.totalorder %s14, 1
      %s4693 = scalar_select %p4692, %s14, 1
      %s4694 = smul.addr %s4693, 128
      %s4695 = smul.addr %s4694, 8
      %s4696 = scalar_lea.vmem %s3, %s4695
      // Predicated region
      $region33: #{tpu_custom_call.1} parent=31 // pred_check
        %p4697 = pneg %p100
      $region34: #{tpu_custom_call.1} parent=31 // pred_check_branch
        %4699 = sbr.rel (%p4697) target = $region36
      $region35: #{tpu_custom_call.1} parent=31 // pred_region
        _
      $region36: #{tpu_custom_call.1} parent=31 // pred_fallthru
        _
    $region32: #{tpu_custom_call.1} parent=5 // pred_fallthru
      _
    %p4700 = scmp.le.s32.totalorder 2, %s9
    // Predicated region
    $region37: #{tpu_custom_call.1} parent=5 // pred_check
      %p4701 = pneg %p4700
    $region38: #{tpu_custom_call.1} parent=5 // pred_check_branch
      %4703 = sbr.rel (%p4701) target = $region40
    $region39: #{tpu_custom_call.1} parent=5 // pred_region
      %s4704 = ssub.s32 %s9, 2
      // Predicated region
      $region41: #{tpu_custom_call.1} parent=39 // pred_check
        %p4705 = pneg %p106
      $region42: #{tpu_custom_call.1} parent=39 // pred_check_branch
        %4707 = sbr.rel (%p4705) target = $region44
      $region43: #{tpu_custom_call.1} parent=39 // pred_region
        %p4708 = scmp.lt.s32.totalorder %s15, 1
        %s4709 = scalar_select %p4708, %s15, 1
        %s4710 = smul.addr %s4709, 128
        %s4711 = smul.addr %s4710, 8
        %s4712 = scalar_lea.vmem %s3, %s4711
      $region44: #{tpu_custom_call.1} parent=39 // pred_fallthru
        _
    $region40: #{tpu_custom_call.1} parent=5 // pred_fallthru
      _
  $region6: #{tpu_custom_call.1} parent=0 // loop_footer
    %s13 = sadd.s32 1, %s9
  $region7: #{tpu_custom_call.1} parent=0 // loop_footer_branch
    %8 = sbr.rel target = $region3
  $region8: #{tpu_custom_call.1} parent=0 // loop_exit
    _

</llo_original>
